<compile_context>
chip_gen: v6e
topology: v6e:2x2x1
jax: 0.10.0
libtpu: 0.0.40
codegen_flags: <defaults>
</compile_context>

<pallas_src>
import functools

import jax
import jax.numpy as jnp
from jax import lax
from jax.experimental import pallas as pl
from jax.experimental.pallas import tpu as pltpu


def _round_up(x, m):
    return (x + m - 1) // m * m


def _vmem_spec():
    return pl.BlockSpec(memory_space=pltpu.MemorySpace.VMEM)


# ----------------------------- Pallas kernels ------------------------------------

def _cmm_kernel(x_ref, w_ref, b_ref, o_ref, *, relu):
    # single fused complex matmul: x=[xr|xi] (tm,2K), w=[[wr,wi],[-wi,wr]] (2K,2Npad)
    acc = jnp.dot(x_ref[...], w_ref[...], preferred_element_type=jnp.float32)
    acc = acc + b_ref[...]
    if relu:                         # polar_relu == ReLU on rect parts (exact)
        acc = jnp.maximum(acc, 0.0)
    o_ref[...] = acc


def _cmm_logits_kernel(x_ref, w_ref, b_ref, o_ref, *, n_pad, n_valid):
    # fc2 (complex matmul) + magnitude + masked log_softmax, all in one kernel.
    acc = jnp.dot(x_ref[...], w_ref[...], preferred_element_type=jnp.float32)
    acc = acc + b_ref[...]
    rr = acc[:, :n_pad]
    ii = acc[:, n_pad:]
    mag = jnp.sqrt(rr * rr + ii * ii)                       # logits = |fc2(x)|
    lane = lax.broadcasted_iota(jnp.int32, mag.shape, 1)
    valid = lane < n_valid
    m = jnp.max(jnp.where(valid, mag, -jnp.inf), axis=-1, keepdims=True)
    e = jnp.where(valid, jnp.exp(mag - m), 0.0)
    lse = jnp.log(jnp.sum(e, axis=-1, keepdims=True))
    o_ref[...] = mag - m - lse                              # only first n_valid lanes used


def _pool_kernel(r_ref, i_ref, ro_ref, io_ref):
    # 2x2/stride-2 max pool by magnitude, carrying rect parts.
    r = r_ref[...]            # [4, P] : 4 window candidates per output position
    i = i_ref[...]
    m = r * r + i * i         # squared magnitude: same argmax, no sqrt needed
    best_m = m[0:1, :]
    best_r = r[0:1, :]
    best_i = i[0:1, :]
    for k in range(1, 4):     # strictly-greater => first max wins on ties
        upd = m[k:k + 1, :] > best_m
        best_m = jnp.where(upd, m[k:k + 1, :], best_m)
        best_r = jnp.where(upd, r[k:k + 1, :], best_r)
        best_i = jnp.where(upd, i[k:k + 1, :], best_i)
    ro_ref[...] = best_r
    io_ref[...] = best_i


# ----------------------------- kernel wrappers ------------------------------------

def _fuse_complex_operands(xr, xi, wr, wi, br, bi, n_pad):
    """Build the single-dot operands: lhs [M,2K], rhs [2K,2Npad], bias [1,2Npad]."""
    N = wr.shape[1]
    wr_p = jnp.pad(wr, ((0, 0), (0, n_pad - N)))
    wi_p = jnp.pad(wi, ((0, 0), (0, n_pad - N)))
    w2 = jnp.concatenate(
        [jnp.concatenate([wr_p, wi_p], axis=1),
         jnp.concatenate([-wi_p, wr_p], axis=1)], axis=0)            # [2K, 2Npad]
    b2 = jnp.concatenate([jnp.pad(br - bi, (0, n_pad - N)),
                          jnp.pad(br + bi, (0, n_pad - N))]).reshape(1, 2 * n_pad)
    x2 = jnp.concatenate([xr, xi], axis=1)                           # [M, 2K]
    return x2, w2, b2


def complex_matmul(xr, xi, wr, wi, br, bi, *, relu=False):
    """(xr + i xi) @ (wr + i wi) + bias as one lane-dense fused MXU dot.
    wr/wi are (K, N); returns (out_r, out_i) of shape (M, N)."""
    M, K = xr.shape
    N = wr.shape[1]
    n_pad = _round_up(N, 128)
    x2, w2, b2 = _fuse_complex_operands(xr, xi, wr, wi, br, bi, n_pad)

    # Keep >=2 row tiles for large M so both v7x TensorCores get work; otherwise 1 step.
    if M >= 256 and (M // 2) % 8 == 0:
        tm = M // 2
    else:
        tm = M
    grid = (M // tm,)

    out = pl.pallas_call(
        functools.partial(_cmm_kernel, relu=relu),
        out_shape=jax.ShapeDtypeStruct((M, 2 * n_pad), jnp.float32),
        grid=grid,
        in_specs=[pl.BlockSpec((tm, 2 * K), lambda i: (i, 0)),
                  pl.BlockSpec((2 * K, 2 * n_pad), lambda i: (0, 0)),
                  pl.BlockSpec((1, 2 * n_pad), lambda i: (0, 0))],
        out_specs=pl.BlockSpec((tm, 2 * n_pad), lambda i: (i, 0)),
        compiler_params=pltpu.CompilerParams(dimension_semantics=("parallel",)),
    )(x2, w2, b2)
    return out[:, :N], out[:, n_pad:n_pad + N]


def complex_logits_logsoftmax(xr, xi, wr, wi, br, bi):
    """fc2 + magnitude + log_softmax fused; wr/wi are (K, N). Returns [M, N]."""
    M, K = xr.shape
    N = wr.shape[1]
    n_pad = _round_up(N, 128)
    x2, w2, b2 = _fuse_complex_operands(xr, xi, wr, wi, br, bi, n_pad)
    spec = _vmem_spec()
    out = pl.pallas_call(
        functools.partial(_cmm_logits_kernel, n_pad=n_pad, n_valid=N),
        out_shape=jax.ShapeDtypeStruct((M, n_pad), jnp.float32),
        in_specs=[spec, spec, spec],
        out_specs=spec,
    )(x2, w2, b2)
    return out[:, :N]


def polar_max_pool2d_rect(xr, xi):
    # kernel=2, stride=2, no padding; NHWC; winner selected by magnitude.
    N, H, W, C = xr.shape
    Ho, Wo = H // 2, W // 2

    def cands(x):
        return jnp.stack([x[:, 0::2, 0::2, :].reshape(-1),
                          x[:, 0::2, 1::2, :].reshape(-1),
                          x[:, 1::2, 0::2, :].reshape(-1),
                          x[:, 1::2, 1::2, :].reshape(-1)], axis=0)   # [4, P]

    r4, i4 = cands(xr), cands(xi)
    P = r4.shape[1]
    spec = _vmem_spec()
    ro, io = pl.pallas_call(
        _pool_kernel,
        out_shape=(jax.ShapeDtypeStruct((1, P), jnp.float32),
                   jax.ShapeDtypeStruct((1, P), jnp.float32)),
        in_specs=[spec, spec],
        out_specs=(spec, spec),
    )(r4, i4)
    return ro.reshape(N, Ho, Wo, C), io.reshape(N, Ho, Wo, C)


# ----------------------------- glue (XLA side) ------------------------------------

def _im2col(x, k):
    # x: [N,H,W,C] -> [N*Ho*Wo, C*k*k]; K ordered (c, kh, kw) to match
    # PyTorch weight.reshape(out_c, in_c*k*k)
    # TODO(synk): im2col stays XLA-side; fold it into the pallas grid (kh,kw accumulation)
    # if the patch materialization ever becomes HBM-bound at larger batch.
    N, H, W, C = x.shape
    Ho, Wo = H - k + 1, W - k + 1
    cols = [x[:, kh:kh + Ho, kw:kw + Wo, :] for kh in range(k) for kw in range(k)]
    patches = jnp.stack(cols, axis=-1)                     # [N,Ho,Wo,C,k*k]
    return patches.reshape(N * Ho * Wo, C * k * k), (N, Ho, Wo)


def conv_complex_relu(xr, xi, wr, wi, br, bi, k=5):
    """PolarConv2d followed by polar_relu, kept entirely in rect form (exact)."""
    cr, dims = _im2col(xr, k)
    ci, _ = _im2col(xi, k)
    oc = wr.shape[0]
    or_, oi_ = complex_matmul(cr, ci, wr.reshape(oc, -1).T, wi.reshape(oc, -1).T,
                              br, bi, relu=True)
    N, Ho, Wo = dims
    return or_.reshape(N, Ho, Wo, oc), oi_.reshape(N, Ho, Wo, oc)


def polar_batchnorm_eval_rect(xr, xi, p, eps=1e-5):
    # NaivePolarBatchNorm2d (eval): independent affine BN on magnitude and phase channels.
    # TODO(synk): atan2/cos/sin conversion kept in XLA glue (not guaranteed Mosaic
    # lowerings); this is a tiny elementwise epilogue on the pooled activation.
    mag = jnp.sqrt(xr * xr + xi * xi)
    ph = jnp.arctan2(xi, xr)
    inv_m = p['bn_gamma_m'] / jnp.sqrt(p['bn_var_m'] + eps)
    inv_p = p['bn_gamma_p'] / jnp.sqrt(p['bn_var_p'] + eps)
    mag = mag * inv_m + (p['bn_beta_m'] - p['bn_mean_m'] * inv_m)
    ph = ph * inv_p + (p['bn_beta_p'] - p['bn_mean_p'] * inv_p)
    return mag * jnp.cos(ph), mag * jnp.sin(ph)


# ----------------------------- full forward ------------------------------------

def polarnet_forward(params, mag_nchw, ph_nchw):
    # NCHW (PyTorch) -> NHWC (kernel layout); convert polar input to rect once.
    mag = jnp.transpose(mag_nchw, (0, 2, 3, 1)).astype(jnp.float32)
    ph = jnp.transpose(ph_nchw, (0, 2, 3, 1)).astype(jnp.float32)
    xr = mag * jnp.cos(ph)
    xi = mag * jnp.sin(ph)

    # conv1 + polar_relu (relu fused in the matmul epilogue; polar roundtrip elided)
    xr, xi = conv_complex_relu(xr, xi, params['conv1_wr'], params['conv1_wi'],
                               params['conv1_br'], params['conv1_bi'])
    # polar_max_pool2d(2,2): winner by magnitude, rect carried through
    xr, xi = polar_max_pool2d_rect(xr, xi)
    # NaivePolarBatchNorm2d (eval mode)
    xr, xi = polar_batchnorm_eval_rect(xr, xi, params)
    # conv2 + polar_relu
    xr, xi = conv_complex_relu(xr, xi, params['conv2_wr'], params['conv2_wi'],
                               params['conv2_br'], params['conv2_bi'])
    xr, xi = polar_max_pool2d_rect(xr, xi)

    # PyTorch .view(-1, 4*4*20) flattens NCHW in (C, H, W) order
    N = xr.shape[0]
    xr = jnp.transpose(xr, (0, 3, 1, 2)).reshape(N, -1)
    xi = jnp.transpose(xi, (0, 3, 1, 2)).reshape(N, -1)

    # fc1 + polar_relu (fused)
    xr, xi = complex_matmul(xr, xi, params['fc1_wr'].T, params['fc1_wi'].T,
                            params['fc1_br'], params['fc1_bi'], relu=True)
    # fc2 + magnitude + log_softmax (fused)
    return complex_logits_logsoftmax(xr, xi, params['fc2_wr'].T, params['fc2_wi'].T,
                                     params['fc2_br'], params['fc2_bi'])


def init_params(key):
    ks = jax.random.split(key, 24)
    n = lambda k, s, sc=0.1: sc * jax.random.normal(k, s, jnp.float32)
    return {
        'conv1_wr': n(ks[0], (10, 1, 5, 5)), 'conv1_wi': n(ks[1], (10, 1, 5, 5)),
        'conv1_br': n(ks[2], (10,)), 'conv1_bi': n(ks[3], (10,)),
        'conv2_wr': n(ks[4], (20, 10, 5, 5)), 'conv2_wi': n(ks[5], (20, 10, 5, 5)),
        'conv2_br': n(ks[6], (20,)), 'conv2_bi': n(ks[7], (20,)),
        'fc1_wr': n(ks[8], (500, 320), 0.05), 'fc1_wi': n(ks[9], (500, 320), 0.05),
        'fc1_br': n(ks[10], (500,)), 'fc1_bi': n(ks[11], (500,)),
        'fc2_wr': n(ks[12], (10, 500), 0.05), 'fc2_wi': n(ks[13], (10, 500), 0.05),
        'fc2_br': n(ks[14], (10,)), 'fc2_bi': n(ks[15], (10,)),
        # NaivePolarBatchNorm2d (eval mode): BN on magnitude channels and phase channels
        'bn_gamma_m': 1.0 + n(ks[16], (10,)), 'bn_beta_m': n(ks[17], (10,)),
        'bn_mean_m': n(ks[18], (10,)), 'bn_var_m': 1.0 + jnp.abs(n(ks[19], (10,))),
        'bn_gamma_p': 1.0 + n(ks[20], (10,)), 'bn_beta_p': n(ks[21], (10,)),
        'bn_mean_p': n(ks[22], (10,)), 'bn_var_p': 1.0 + jnp.abs(n(ks[23], (10,))),
    }


if __name__ == "__main__":
    key = jax.random.PRNGKey(0)
    pkey, mkey, phkey = jax.random.split(key, 3)
    params = init_params(pkey)
    # MNIST-like input forced by the fc1 shape (4*4*20): [N, 1, 28, 28], batch = 2
    mag_in = jnp.abs(jax.random.normal(mkey, (2, 1, 28, 28), jnp.float32))
    ph_in = jax.random.uniform(phkey, (2, 1, 28, 28), jnp.float32,
                               minval=-jnp.pi, maxval=jnp.pi)
    out = jax.jit(polarnet_forward)(params, mag_in, ph_in)
    out = jax.block_until_ready(out)
    assert out.shape == (2, 10) and bool(jnp.all(jnp.isfinite(out)))
    print("KERNEL_OK")
</pallas_src>

<mosaic_0001>
module attributes {stable_mosaic.version = 11 : i64} {
  func.func @_cmm_kernel(%arg0: i32, %arg1: memref<576x50xf32, #tpu.memory_space<vmem>>, %arg2: memref<50x256xf32, #tpu.memory_space<vmem>>, %arg3: memref<1x256xf32, #tpu.memory_space<vmem>>, %arg4: memref<576x256xf32, #tpu.memory_space<vmem>>) attributes {dimension_semantics = [#tpu.dimension_semantics<parallel>], iteration_bounds = array<i64: 2>, scalar_prefetch = 0 : i64, scratch_operands = 0 : i64, tpu.core_type = #tpu.core_type<tc>, window_params = [{transform_indices = @transform_0, window_bounds = array<i64: 576, 50>}, {pipeline_mode = #tpu.pipeline_mode<synchronous>, transform_indices = @transform_1, window_bounds = array<i64: 50, 256>}, {pipeline_mode = #tpu.pipeline_mode<synchronous>, transform_indices = @transform_2, window_bounds = array<i64: 1, 256>}, {transform_indices = @transform_3, window_bounds = array<i64: 576, 256>}]} {
    %c0 = arith.constant 0 : index
    %c0_0 = arith.constant 0 : index
    %0 = vector.load %arg1[%c0, %c0_0] : memref<576x50xf32, #tpu.memory_space<vmem>>, vector<576x50xf32>
    %c0_1 = arith.constant 0 : index
    %c0_2 = arith.constant 0 : index
    %1 = vector.load %arg2[%c0_1, %c0_2] : memref<50x256xf32, #tpu.memory_space<vmem>>, vector<50x256xf32>
    %cst = arith.constant dense<0.000000e+00> : vector<576x256xf32>
    %2 = tpu.matmul %0, %1, %cst {dimension_numbers = #tpu.dot_dimension_numbers<[1], [0], [0], [1], [0, 0, 1, 1], [], []>} : vector<576x50xf32>, vector<50x256xf32>, vector<576x256xf32> -> vector<576x256xf32>
    %c0_3 = arith.constant 0 : index
    %c0_4 = arith.constant 0 : index
    %3 = vector.load %arg3[%c0_3, %c0_4] : memref<1x256xf32, #tpu.memory_space<vmem>>, vector<1x256xf32>
    %4 = vector.broadcast %3 : vector<1x256xf32> to vector<576x256xf32>
    %5 = arith.addf %2, %4 : vector<576x256xf32>
    %cst_5 = arith.constant 0.000000e+00 : f32
    %6 = vector.broadcast %cst_5 : f32 to vector<576x256xf32>
    %7 = arith.maximumf %5, %6 : vector<576x256xf32>
    %c0_6 = arith.constant 0 : index
    %c0_7 = arith.constant 0 : index
    %8 = vector.load %arg4[%c0_6, %c0_7] : memref<576x256xf32, #tpu.memory_space<vmem>>, vector<576x256xf32>
    tpu.vector_store %arg4[%c0_6, %c0_7], %7 {strides = array<i32>} : memref<576x256xf32, #tpu.memory_space<vmem>>, vector<576x256xf32>,
    return
  }
  func.func @transform_0(%arg0: i32) -> (i32, i32) {
    %c0_i32 = arith.constant 0 : i32
    %c0_i32_0 = arith.constant 0 : i32
    return %arg0, %c0_i32 : i32, i32
  }
  func.func @transform_1(%arg0: i32) -> (i32, i32) {
    %c0_i32 = arith.constant 0 : i32
    %c0_i32_0 = arith.constant 0 : i32
    %c0_i32_1 = arith.constant 0 : i32
    return %c0_i32, %c0_i32_0 : i32, i32
  }
  func.func @transform_2(%arg0: i32) -> (i32, i32) {
    %c0_i32 = arith.constant 0 : i32
    %c0_i32_0 = arith.constant 0 : i32
    %c0_i32_1 = arith.constant 0 : i32
    return %c0_i32, %c0_i32_0 : i32, i32
  }
  func.func @transform_3(%arg0: i32) -> (i32, i32) {
    %c0_i32 = arith.constant 0 : i32
    %c0_i32_0 = arith.constant 0 : i32
    return %arg0, %c0_i32 : i32, i32
  }
}

module attributes {stable_mosaic.version = 11 : i64} {
  func.func @_pool_kernel(%arg0: memref<4x2880xf32, #tpu.memory_space<vmem>>, %arg1: memref<4x2880xf32, #tpu.memory_space<vmem>>, %arg2: memref<1x2880xf32, #tpu.memory_space<vmem>>, %arg3: memref<1x2880xf32, #tpu.memory_space<vmem>>) attributes {dimension_semantics = [], scalar_prefetch = 0 : i64, scratch_operands = 0 : i64, tpu.core_type = #tpu.core_type<tc>} {
    %c0 = arith.constant 0 : index
    %c0_0 = arith.constant 0 : index
    %0 = vector.load %arg0[%c0, %c0_0] : memref<4x2880xf32, #tpu.memory_space<vmem>>, vector<4x2880xf32>
    %c0_1 = arith.constant 0 : index
    %c0_2 = arith.constant 0 : index
    %1 = vector.load %arg1[%c0_1, %c0_2] : memref<4x2880xf32, #tpu.memory_space<vmem>>, vector<4x2880xf32>
    %2 = arith.mulf %0, %0 : vector<4x2880xf32>
    %3 = arith.mulf %1, %1 : vector<4x2880xf32>
    %4 = arith.addf %2, %3 : vector<4x2880xf32>
    %5 = vector.extract_strided_slice %4 {offsets = [0, 0], sizes = [1, 2880], strides = [1, 1]} : vector<4x2880xf32> to vector<1x2880xf32>
    %6 = vector.extract_strided_slice %0 {offsets = [0, 0], sizes = [1, 2880], strides = [1, 1]} : vector<4x2880xf32> to vector<1x2880xf32>
    %7 = vector.extract_strided_slice %1 {offsets = [0, 0], sizes = [1, 2880], strides = [1, 1]} : vector<4x2880xf32> to vector<1x2880xf32>
    %8 = vector.extract_strided_slice %4 {offsets = [1, 0], sizes = [1, 2880], strides = [1, 1]} : vector<4x2880xf32> to vector<1x2880xf32>
    %9 = arith.cmpf ogt, %8, %5 : vector<1x2880xf32>
    %10 = vector.extract_strided_slice %4 {offsets = [1, 0], sizes = [1, 2880], strides = [1, 1]} : vector<4x2880xf32> to vector<1x2880xf32>
    %11 = arith.select %9, %10, %5 : vector<1x2880xi1>, vector<1x2880xf32>
    %12 = vector.extract_strided_slice %0 {offsets = [1, 0], sizes = [1, 2880], strides = [1, 1]} : vector<4x2880xf32> to vector<1x2880xf32>
    %13 = arith.select %9, %12, %6 : vector<1x2880xi1>, vector<1x2880xf32>
    %14 = vector.extract_strided_slice %1 {offsets = [1, 0], sizes = [1, 2880], strides = [1, 1]} : vector<4x2880xf32> to vector<1x2880xf32>
    %15 = arith.select %9, %14, %7 : vector<1x2880xi1>, vector<1x2880xf32>
    %16 = vector.extract_strided_slice %4 {offsets = [2, 0], sizes = [1, 2880], strides = [1, 1]} : vector<4x2880xf32> to vector<1x2880xf32>
    %17 = arith.cmpf ogt, %16, %11 : vector<1x2880xf32>
    %18 = vector.extract_strided_slice %4 {offsets = [2, 0], sizes = [1, 2880], strides = [1, 1]} : vector<4x2880xf32> to vector<1x2880xf32>
    %19 = arith.select %17, %18, %11 : vector<1x2880xi1>, vector<1x2880xf32>
    %20 = vector.extract_strided_slice %0 {offsets = [2, 0], sizes = [1, 2880], strides = [1, 1]} : vector<4x2880xf32> to vector<1x2880xf32>
    %21 = arith.select %17, %20, %13 : vector<1x2880xi1>, vector<1x2880xf32>
    %22 = vector.extract_strided_slice %1 {offsets = [2, 0], sizes = [1, 2880], strides = [1, 1]} : vector<4x2880xf32> to vector<1x2880xf32>
    %23 = arith.select %17, %22, %15 : vector<1x2880xi1>, vector<1x2880xf32>
    %24 = vector.extract_strided_slice %4 {offsets = [3, 0], sizes = [1, 2880], strides = [1, 1]} : vector<4x2880xf32> to vector<1x2880xf32>
    %25 = arith.cmpf ogt, %24, %19 : vector<1x2880xf32>
    %26 = vector.extract_strided_slice %0 {offsets = [3, 0], sizes = [1, 2880], strides = [1, 1]} : vector<4x2880xf32> to vector<1x2880xf32>
    %27 = arith.select %25, %26, %21 : vector<1x2880xi1>, vector<1x2880xf32>
    %28 = vector.extract_strided_slice %1 {offsets = [3, 0], sizes = [1, 2880], strides = [1, 1]} : vector<4x2880xf32> to vector<1x2880xf32>
    %29 = arith.select %25, %28, %23 : vector<1x2880xi1>, vector<1x2880xf32>
    %c0_3 = arith.constant 0 : index
    %c0_4 = arith.constant 0 : index
    %30 = vector.load %arg2[%c0_3, %c0_4] : memref<1x2880xf32, #tpu.memory_space<vmem>>, vector<1x2880xf32>
    tpu.vector_store %arg2[%c0_3, %c0_4], %27 {strides = array<i32>} : memref<1x2880xf32, #tpu.memory_space<vmem>>, vector<1x2880xf32>,
    %c0_5 = arith.constant 0 : index
    %c0_6 = arith.constant 0 : index
    %31 = vector.load %arg3[%c0_5, %c0_6] : memref<1x2880xf32, #tpu.memory_space<vmem>>, vector<1x2880xf32>
    tpu.vector_store %arg3[%c0_5, %c0_6], %29 {strides = array<i32>} : memref<1x2880xf32, #tpu.memory_space<vmem>>, vector<1x2880xf32>,
    return
  }
}

module attributes {stable_mosaic.version = 11 : i64} {
  func.func @_cmm_kernel(%arg0: i32, %arg1: memref<128x500xf32, #tpu.memory_space<vmem>>, %arg2: memref<500x256xf32, #tpu.memory_space<vmem>>, %arg3: memref<1x256xf32, #tpu.memory_space<vmem>>, %arg4: memref<128x256xf32, #tpu.memory_space<vmem>>) attributes {dimension_semantics = [#tpu.dimension_semantics<parallel>], iteration_bounds = array<i64: 1>, scalar_prefetch = 0 : i64, scratch_operands = 0 : i64, tpu.core_type = #tpu.core_type<tc>, window_params = [{transform_indices = @transform_0, window_bounds = array<i64: 128, 500>}, {pipeline_mode = #tpu.pipeline_mode<synchronous>, transform_indices = @transform_1, window_bounds = array<i64: 500, 256>}, {pipeline_mode = #tpu.pipeline_mode<synchronous>, transform_indices = @transform_2, window_bounds = array<i64: 1, 256>}, {transform_indices = @transform_3, window_bounds = array<i64: 128, 256>}]} {
    %c0 = arith.constant 0 : index
    %c0_0 = arith.constant 0 : index
    %0 = vector.load %arg1[%c0, %c0_0] : memref<128x500xf32, #tpu.memory_space<vmem>>, vector<128x500xf32>
    %c0_1 = arith.constant 0 : index
    %c0_2 = arith.constant 0 : index
    %1 = vector.load %arg2[%c0_1, %c0_2] : memref<500x256xf32, #tpu.memory_space<vmem>>, vector<500x256xf32>
    %cst = arith.constant dense<0.000000e+00> : vector<128x256xf32>
    %2 = tpu.matmul %0, %1, %cst {dimension_numbers = #tpu.dot_dimension_numbers<[1], [0], [0], [1], [0, 0, 1, 1], [], []>} : vector<128x500xf32>, vector<500x256xf32>, vector<128x256xf32> -> vector<128x256xf32>
    %c0_3 = arith.constant 0 : index
    %c0_4 = arith.constant 0 : index
    %3 = vector.load %arg3[%c0_3, %c0_4] : memref<1x256xf32, #tpu.memory_space<vmem>>, vector<1x256xf32>
    %4 = vector.broadcast %3 : vector<1x256xf32> to vector<128x256xf32>
    %5 = arith.addf %2, %4 : vector<128x256xf32>
    %cst_5 = arith.constant 0.000000e+00 : f32
    %6 = vector.broadcast %cst_5 : f32 to vector<128x256xf32>
    %7 = arith.maximumf %5, %6 : vector<128x256xf32>
    %c0_6 = arith.constant 0 : index
    %c0_7 = arith.constant 0 : index
    %8 = vector.load %arg4[%c0_6, %c0_7] : memref<128x256xf32, #tpu.memory_space<vmem>>, vector<128x256xf32>
    tpu.vector_store %arg4[%c0_6, %c0_7], %7 {strides = array<i32>} : memref<128x256xf32, #tpu.memory_space<vmem>>, vector<128x256xf32>,
    return
  }
  func.func @transform_0(%arg0: i32) -> (i32, i32) {
    %c0_i32 = arith.constant 0 : i32
    %c0_i32_0 = arith.constant 0 : i32
    return %arg0, %c0_i32 : i32, i32
  }
  func.func @transform_1(%arg0: i32) -> (i32, i32) {
    %c0_i32 = arith.constant 0 : i32
    %c0_i32_0 = arith.constant 0 : i32
    %c0_i32_1 = arith.constant 0 : i32
    return %c0_i32, %c0_i32_0 : i32, i32
  }
  func.func @transform_2(%arg0: i32) -> (i32, i32) {
    %c0_i32 = arith.constant 0 : i32
    %c0_i32_0 = arith.constant 0 : i32
    %c0_i32_1 = arith.constant 0 : i32
    return %c0_i32, %c0_i32_0 : i32, i32
  }
  func.func @transform_3(%arg0: i32) -> (i32, i32) {
    %c0_i32 = arith.constant 0 : i32
    %c0_i32_0 = arith.constant 0 : i32
    return %arg0, %c0_i32 : i32, i32
  }
}

module attributes {stable_mosaic.version = 11 : i64} {
  func.func @_pool_kernel(%arg0: memref<4x640xf32, #tpu.memory_space<vmem>>, %arg1: memref<4x640xf32, #tpu.memory_space<vmem>>, %arg2: memref<1x640xf32, #tpu.memory_space<vmem>>, %arg3: memref<1x640xf32, #tpu.memory_space<vmem>>) attributes {dimension_semantics = [], scalar_prefetch = 0 : i64, scratch_operands = 0 : i64, tpu.core_type = #tpu.core_type<tc>} {
    %c0 = arith.constant 0 : index
    %c0_0 = arith.constant 0 : index
    %0 = vector.load %arg0[%c0, %c0_0] : memref<4x640xf32, #tpu.memory_space<vmem>>, vector<4x640xf32>
    %c0_1 = arith.constant 0 : index
    %c0_2 = arith.constant 0 : index
    %1 = vector.load %arg1[%c0_1, %c0_2] : memref<4x640xf32, #tpu.memory_space<vmem>>, vector<4x640xf32>
    %2 = arith.mulf %0, %0 : vector<4x640xf32>
    %3 = arith.mulf %1, %1 : vector<4x640xf32>
    %4 = arith.addf %2, %3 : vector<4x640xf32>
    %5 = vector.extract_strided_slice %4 {offsets = [0, 0], sizes = [1, 640], strides = [1, 1]} : vector<4x640xf32> to vector<1x640xf32>
    %6 = vector.extract_strided_slice %0 {offsets = [0, 0], sizes = [1, 640], strides = [1, 1]} : vector<4x640xf32> to vector<1x640xf32>
    %7 = vector.extract_strided_slice %1 {offsets = [0, 0], sizes = [1, 640], strides = [1, 1]} : vector<4x640xf32> to vector<1x640xf32>
    %8 = vector.extract_strided_slice %4 {offsets = [1, 0], sizes = [1, 640], strides = [1, 1]} : vector<4x640xf32> to vector<1x640xf32>
    %9 = arith.cmpf ogt, %8, %5 : vector<1x640xf32>
    %10 = vector.extract_strided_slice %4 {offsets = [1, 0], sizes = [1, 640], strides = [1, 1]} : vector<4x640xf32> to vector<1x640xf32>
    %11 = arith.select %9, %10, %5 : vector<1x640xi1>, vector<1x640xf32>
    %12 = vector.extract_strided_slice %0 {offsets = [1, 0], sizes = [1, 640], strides = [1, 1]} : vector<4x640xf32> to vector<1x640xf32>
    %13 = arith.select %9, %12, %6 : vector<1x640xi1>, vector<1x640xf32>
    %14 = vector.extract_strided_slice %1 {offsets = [1, 0], sizes = [1, 640], strides = [1, 1]} : vector<4x640xf32> to vector<1x640xf32>
    %15 = arith.select %9, %14, %7 : vector<1x640xi1>, vector<1x640xf32>
    %16 = vector.extract_strided_slice %4 {offsets = [2, 0], sizes = [1, 640], strides = [1, 1]} : vector<4x640xf32> to vector<1x640xf32>
    %17 = arith.cmpf ogt, %16, %11 : vector<1x640xf32>
    %18 = vector.extract_strided_slice %4 {offsets = [2, 0], sizes = [1, 640], strides = [1, 1]} : vector<4x640xf32> to vector<1x640xf32>
    %19 = arith.select %17, %18, %11 : vector<1x640xi1>, vector<1x640xf32>
    %20 = vector.extract_strided_slice %0 {offsets = [2, 0], sizes = [1, 640], strides = [1, 1]} : vector<4x640xf32> to vector<1x640xf32>
    %21 = arith.select %17, %20, %13 : vector<1x640xi1>, vector<1x640xf32>
    %22 = vector.extract_strided_slice %1 {offsets = [2, 0], sizes = [1, 640], strides = [1, 1]} : vector<4x640xf32> to vector<1x640xf32>
    %23 = arith.select %17, %22, %15 : vector<1x640xi1>, vector<1x640xf32>
    %24 = vector.extract_strided_slice %4 {offsets = [3, 0], sizes = [1, 640], strides = [1, 1]} : vector<4x640xf32> to vector<1x640xf32>
    %25 = arith.cmpf ogt, %24, %19 : vector<1x640xf32>
    %26 = vector.extract_strided_slice %0 {offsets = [3, 0], sizes = [1, 640], strides = [1, 1]} : vector<4x640xf32> to vector<1x640xf32>
    %27 = arith.select %25, %26, %21 : vector<1x640xi1>, vector<1x640xf32>
    %28 = vector.extract_strided_slice %1 {offsets = [3, 0], sizes = [1, 640], strides = [1, 1]} : vector<4x640xf32> to vector<1x640xf32>
    %29 = arith.select %25, %28, %23 : vector<1x640xi1>, vector<1x640xf32>
    %c0_3 = arith.constant 0 : index
    %c0_4 = arith.constant 0 : index
    %30 = vector.load %arg2[%c0_3, %c0_4] : memref<1x640xf32, #tpu.memory_space<vmem>>, vector<1x640xf32>
    tpu.vector_store %arg2[%c0_3, %c0_4], %27 {strides = array<i32>} : memref<1x640xf32, #tpu.memory_space<vmem>>, vector<1x640xf32>,
    %c0_5 = arith.constant 0 : index
    %c0_6 = arith.constant 0 : index
    %31 = vector.load %arg3[%c0_5, %c0_6] : memref<1x640xf32, #tpu.memory_space<vmem>>, vector<1x640xf32>
    tpu.vector_store %arg3[%c0_5, %c0_6], %29 {strides = array<i32>} : memref<1x640xf32, #tpu.memory_space<vmem>>, vector<1x640xf32>,
    return
  }
}

module attributes {stable_mosaic.version = 11 : i64} {
  func.func @_cmm_kernel(%arg0: i32, %arg1: memref<2x640xf32, #tpu.memory_space<vmem>>, %arg2: memref<640x1024xf32, #tpu.memory_space<vmem>>, %arg3: memref<1x1024xf32, #tpu.memory_space<vmem>>, %arg4: memref<2x1024xf32, #tpu.memory_space<vmem>>) attributes {dimension_semantics = [#tpu.dimension_semantics<parallel>], iteration_bounds = array<i64: 1>, scalar_prefetch = 0 : i64, scratch_operands = 0 : i64, tpu.core_type = #tpu.core_type<tc>, window_params = [{transform_indices = @transform_0, window_bounds = array<i64: 2, 640>}, {pipeline_mode = #tpu.pipeline_mode<synchronous>, transform_indices = @transform_1, window_bounds = array<i64: 640, 1024>}, {pipeline_mode = #tpu.pipeline_mode<synchronous>, transform_indices = @transform_2, window_bounds = array<i64: 1, 1024>}, {transform_indices = @transform_3, window_bounds = array<i64: 2, 1024>}]} {
    %c0 = arith.constant 0 : index
    %c0_0 = arith.constant 0 : index
    %0 = vector.load %arg1[%c0, %c0_0] : memref<2x640xf32, #tpu.memory_space<vmem>>, vector<2x640xf32>
    %c0_1 = arith.constant 0 : index
    %c0_2 = arith.constant 0 : index
    %1 = vector.load %arg2[%c0_1, %c0_2] : memref<640x1024xf32, #tpu.memory_space<vmem>>, vector<640x1024xf32>
    %cst = arith.constant dense<0.000000e+00> : vector<2x1024xf32>
    %2 = tpu.matmul %0, %1, %cst {dimension_numbers = #tpu.dot_dimension_numbers<[1], [0], [0], [1], [0, 0, 1, 1], [], []>} : vector<2x640xf32>, vector<640x1024xf32>, vector<2x1024xf32> -> vector<2x1024xf32>
    %c0_3 = arith.constant 0 : index
    %c0_4 = arith.constant 0 : index
    %3 = vector.load %arg3[%c0_3, %c0_4] : memref<1x1024xf32, #tpu.memory_space<vmem>>, vector<1x1024xf32>
    %4 = vector.broadcast %3 : vector<1x1024xf32> to vector<2x1024xf32>
    %5 = arith.addf %2, %4 : vector<2x1024xf32>
    %cst_5 = arith.constant 0.000000e+00 : f32
    %6 = vector.broadcast %cst_5 : f32 to vector<2x1024xf32>
    %7 = arith.maximumf %5, %6 : vector<2x1024xf32>
    %c0_6 = arith.constant 0 : index
    %c0_7 = arith.constant 0 : index
    %8 = vector.load %arg4[%c0_6, %c0_7] : memref<2x1024xf32, #tpu.memory_space<vmem>>, vector<2x1024xf32>
    tpu.vector_store %arg4[%c0_6, %c0_7], %7 {strides = array<i32>} : memref<2x1024xf32, #tpu.memory_space<vmem>>, vector<2x1024xf32>,
    return
  }
  func.func @transform_0(%arg0: i32) -> (i32, i32) {
    %c0_i32 = arith.constant 0 : i32
    %c0_i32_0 = arith.constant 0 : i32
    return %arg0, %c0_i32 : i32, i32
  }
  func.func @transform_1(%arg0: i32) -> (i32, i32) {
    %c0_i32 = arith.constant 0 : i32
    %c0_i32_0 = arith.constant 0 : i32
    %c0_i32_1 = arith.constant 0 : i32
    return %c0_i32, %c0_i32_0 : i32, i32
  }
  func.func @transform_2(%arg0: i32) -> (i32, i32) {
    %c0_i32 = arith.constant 0 : i32
    %c0_i32_0 = arith.constant 0 : i32
    %c0_i32_1 = arith.constant 0 : i32
    return %c0_i32, %c0_i32_0 : i32, i32
  }
  func.func @transform_3(%arg0: i32) -> (i32, i32) {
    %c0_i32 = arith.constant 0 : i32
    %c0_i32_0 = arith.constant 0 : i32
    return %arg0, %c0_i32 : i32, i32
  }
}

module attributes {stable_mosaic.version = 11 : i64} {
  func.func @_cmm_logits_kernel(%arg0: memref<2x1000xf32, #tpu.memory_space<vmem>>, %arg1: memref<1000x256xf32, #tpu.memory_space<vmem>>, %arg2: memref<1x256xf32, #tpu.memory_space<vmem>>, %arg3: memref<2x128xf32, #tpu.memory_space<vmem>>) attributes {dimension_semantics = [], scalar_prefetch = 0 : i64, scratch_operands = 0 : i64, tpu.core_type = #tpu.core_type<tc>} {
    %c0 = arith.constant 0 : index
    %c0_0 = arith.constant 0 : index
    %0 = vector.load %arg0[%c0, %c0_0] : memref<2x1000xf32, #tpu.memory_space<vmem>>, vector<2x1000xf32>
    %c0_1 = arith.constant 0 : index
    %c0_2 = arith.constant 0 : index
    %1 = vector.load %arg1[%c0_1, %c0_2] : memref<1000x256xf32, #tpu.memory_space<vmem>>, vector<1000x256xf32>
    %cst = arith.constant dense<0.000000e+00> : vector<2x256xf32>
    %2 = tpu.matmul %0, %1, %cst {dimension_numbers = #tpu.dot_dimension_numbers<[1], [0], [0], [1], [0, 0, 1, 1], [], []>} : vector<2x1000xf32>, vector<1000x256xf32>, vector<2x256xf32> -> vector<2x256xf32>
    %c0_3 = arith.constant 0 : index
    %c0_4 = arith.constant 0 : index
    %3 = vector.load %arg2[%c0_3, %c0_4] : memref<1x256xf32, #tpu.memory_space<vmem>>, vector<1x256xf32>
    %4 = vector.broadcast %3 : vector<1x256xf32> to vector<2x256xf32>
    %5 = arith.addf %2, %4 : vector<2x256xf32>
    %6 = vector.extract_strided_slice %5 {offsets = [0, 0], sizes = [2, 128], strides = [1, 1]} : vector<2x256xf32> to vector<2x128xf32>
    %7 = vector.extract_strided_slice %5 {offsets = [0, 128], sizes = [2, 128], strides = [1, 1]} : vector<2x256xf32> to vector<2x128xf32>
    %8 = arith.mulf %6, %6 : vector<2x128xf32>
    %9 = arith.mulf %7, %7 : vector<2x128xf32>
    %10 = arith.addf %8, %9 : vector<2x128xf32>
    %11 = math.sqrt %10 : vector<2x128xf32>
    %12 = tpu.iota {dimensions = array<i32: 1>} : vector<2x128xi32>
    %c10_i32 = arith.constant 10 : i32
    %13 = vector.broadcast %c10_i32 : i32 to vector<2x128xi32>
    %14 = arith.cmpi slt, %12, %13 : vector<2x128xi32>
    %cst_5 = arith.constant 0xFF800000 : f32
    %15 = vector.broadcast %cst_5 : f32 to vector<2x128xf32>
    %16 = arith.select %14, %11, %15 : vector<2x128xi1>, vector<2x128xf32>
    %cst_6 = arith.constant dense<0xFF800000> : vector<2xf32>
    %17 = vector.multi_reduction <maximumf>, %16, %cst_6 [1] : vector<2x128xf32> to vector<2xf32>
    %18 = vector.shape_cast %17 : vector<2xf32> to vector<2x1xf32>
    %19 = vector.broadcast %18 : vector<2x1xf32> to vector<2x128xf32>
    %20 = arith.subf %11, %19 : vector<2x128xf32>
    %21 = math.exp %20 : vector<2x128xf32>
    %cst_7 = arith.constant 0.000000e+00 : f32
    %22 = vector.broadcast %cst_7 : f32 to vector<2x128xf32>
    %23 = arith.select %14, %21, %22 : vector<2x128xi1>, vector<2x128xf32>
    %cst_8 = arith.constant dense<0.000000e+00> : vector<2xf32>
    %24 = vector.multi_reduction <add>, %23, %cst_8 [1] : vector<2x128xf32> to vector<2xf32>
    %25 = vector.shape_cast %24 : vector<2xf32> to vector<2x1xf32>
    %26 = math.log %25 : vector<2x1xf32>
    %27 = vector.broadcast %18 : vector<2x1xf32> to vector<2x128xf32>
    %28 = arith.subf %11, %27 : vector<2x128xf32>
    %29 = vector.broadcast %26 : vector<2x1xf32> to vector<2x128xf32>
    %30 = arith.subf %28, %29 : vector<2x128xf32>
    %c0_9 = arith.constant 0 : index
    %c0_10 = arith.constant 0 : index
    %31 = vector.load %arg3[%c0_9, %c0_10] : memref<2x128xf32, #tpu.memory_space<vmem>>, vector<2x128xf32>
    tpu.vector_store %arg3[%c0_9, %c0_10], %30 {strides = array<i32>} : memref<2x128xf32, #tpu.memory_space<vmem>>, vector<2x128xf32>,
    return
  }
}

</mosaic_0001>

<llo_original>
// kernel: polarnet_forward.6
$region0: #{polarnet_forward.6}
  #allocation0 [shape = 'u32[]', space=smem, size = 0x4, offset = 0x4, fixed_abs, tag = 'smem constant byte address 0x4 - core index']
  #allocation1 [shape = 'u32[144,128]{1,0:T(1,128)}', space=vmem, size = 0x12000, scoped, tag = 'internal scratch']
  %s0 = inlined_call_operand.vmem [shape: f32[1152,50], index: 0, kind: input, shape index: {}]
  %s1 = inlined_call_operand.vmem [shape: f32[50,256], index: 1, kind: input, shape index: {}]
  %s2 = inlined_call_operand.vmem [shape: f32[1,256], index: 2, kind: input, shape index: {}]
  %s3 = inlined_call_operand.vmem [shape: f32[1152,256], index: 3, kind: output, shape index: {}]
  %s4 = sld [smem:[#allocation0]]
  $region45: #{polarnet_forward.6} parent=0
    _
  %s6 = ssub.s32 1, %s4
  %s7 = scalar_select 0, %s6, %s4
  loop: start=0, step=1, limit=4
  $region2: #{polarnet_forward.6} parent=0 // loop_pre_header
    _
  $region3: #{polarnet_forward.6} parent=0 // loop_header
    %s9 = sphi 0, %s13
    %p10 = scmp.ge.s32.totalorder %s9, 4
    %s19 = sphi 0, %s21
    %s22 = sphi 0, %s19
    %s23 = sphi 0, %s22
    %s39 = sphi 0, %s23
    %s43 = sphi 0, %s43
    %s45 = sphi 0, %s43
    %s46 = sphi 0, %s45
    %s60 = sphi 0, %s46
    %s64 = sphi 0, %s64
    %s66 = sphi 0, %s64
    %s67 = sphi 0, %s66
    %s81 = sphi 0, %s67
    %s87 = sphi 0, %s89
    %s90 = sphi 0, %s87
    %s91 = sphi 0, %s90
    %s107 = sphi 0, %s91
  $region4: #{polarnet_forward.6} parent=0 // loop_header_branch
    %12 = sbr.rel (%p10) target = $region8
  $region5: #{polarnet_forward.6} parent=0 // loop_body
    %s14 = ssub.s32 %s9, 1
    %s15 = ssub.s32 %s9, 2
    %s16 = sadd.s32 %s9, 1
    %s17 = ssub.s32 %s9, %s16
    %p18 = scmp.eq.s32.totalorder %s17, 0
    %s20 = sadd.s32 %s19, 1
    %s21 = scalar_select %p18, %s19, %s20
    %p24 = pneg %p18
    %p25 = scmp.eq.s32.totalorder %s9, 1
    %p26 = por %p24, %p25
    %p27 = scmp.ne.s32.totalorder %s19, %s22
    %p28 = scmp.eq.s32.totalorder %s9, 0
    %p29 = por %p27, %p28
    %p30 = scmp.ne.s32.totalorder %s19, %s22
    %p31 = scmp.eq.s32.totalorder %s14, 1
    %p32 = por %p30, %p31
    %p33 = scmp.ne.s32.totalorder %s22, %s23
    %p34 = scmp.eq.s32.totalorder %s14, 0
    %p35 = por %p33, %p34
    %p36 = scmp.ne.s32.totalorder %s22, %s23
    %p37 = scmp.eq.s32.totalorder %s15, 1
    %p38 = por %p36, %p37
    %p40 = scmp.ne.s32.totalorder %s23, %s39
    %p41 = scmp.eq.s32.totalorder %s15, 0
    %p42 = por %p40, %p41
    %s44 = sadd.s32 %s43, 1
    %p47 = scmp.eq.s32.totalorder %s9, 1
    %p48 = scmp.ne.s32.totalorder %s43, %s45
    %p49 = scmp.eq.s32.totalorder %s9, 0
    %p50 = por %p48, %p49
    %p51 = scmp.ne.s32.totalorder %s43, %s45
    %p52 = scmp.eq.s32.totalorder %s14, 1
    %p53 = por %p51, %p52
    %p54 = scmp.ne.s32.totalorder %s45, %s46
    %p55 = scmp.eq.s32.totalorder %s14, 0
    %p56 = por %p54, %p55
    %p57 = scmp.ne.s32.totalorder %s45, %s46
    %p58 = scmp.eq.s32.totalorder %s15, 1
    %p59 = por %p57, %p58
    %p61 = scmp.ne.s32.totalorder %s46, %s60
    %p62 = scmp.eq.s32.totalorder %s15, 0
    %p63 = por %p61, %p62
    %s65 = sadd.s32 %s64, 1
    %p68 = scmp.eq.s32.totalorder %s9, 1
    %p69 = scmp.ne.s32.totalorder %s64, %s66
    %p70 = scmp.eq.s32.totalorder %s9, 0
    %p71 = por %p69, %p70
    %p72 = scmp.ne.s32.totalorder %s64, %s66
    %p73 = scmp.eq.s32.totalorder %s14, 1
    %p74 = por %p72, %p73
    %p75 = scmp.ne.s32.totalorder %s66, %s67
    %p76 = scmp.eq.s32.totalorder %s14, 0
    %p77 = por %p75, %p76
    %p78 = scmp.ne.s32.totalorder %s66, %s67
    %p79 = scmp.eq.s32.totalorder %s15, 1
    %p80 = por %p78, %p79
    %p82 = scmp.ne.s32.totalorder %s67, %s81
    %p83 = scmp.eq.s32.totalorder %s15, 0
    %p84 = por %p82, %p83
    %s85 = ssub.s32 %s9, %s16
    %p86 = scmp.eq.s32.totalorder %s85, 0
    %s88 = sadd.s32 %s87, 1
    %s89 = scalar_select %p86, %s87, %s88
    %p92 = pneg %p86
    %p93 = scmp.eq.s32.totalorder %s9, 1
    %p94 = por %p92, %p93
    %p95 = scmp.ne.s32.totalorder %s87, %s90
    %p96 = scmp.eq.s32.totalorder %s9, 0
    %p97 = por %p95, %p96
    %p98 = scmp.ne.s32.totalorder %s87, %s90
    %p99 = scmp.eq.s32.totalorder %s14, 1
    %p100 = por %p98, %p99
    %p101 = scmp.ne.s32.totalorder %s90, %s91
    %p102 = scmp.eq.s32.totalorder %s14, 0
    %p103 = por %p101, %p102
    %p104 = scmp.ne.s32.totalorder %s90, %s91
    %p105 = scmp.eq.s32.totalorder %s15, 1
    %p106 = por %p104, %p105
    %p108 = scmp.ne.s32.totalorder %s91, %s107
    %p109 = scmp.eq.s32.totalorder %s15, 0
    %p110 = por %p108, %p109
    %p111 = scmp.le.s32.totalorder 1, %s9
    %p112 = scmp.lt.s32.totalorder %s9, 3
    %p113 = pnand %p111, %p112
    %p114 = pneg %p113
    // Predicated region
    $region9: #{polarnet_forward.6} parent=5 // pred_check
      _
    $region10: #{polarnet_forward.6} parent=5 // pred_check_branch
      %116 = sbr.rel (%p113) target = $region12
    $region11: #{polarnet_forward.6} parent=5 // pred_region
      %s117 = ssub.s32 %s9, 1
      // Predicated region
      $region13: #{polarnet_forward.6} parent=11 // pred_check
        %p118 = pneg %p56
      $region14: #{polarnet_forward.6} parent=11 // pred_check_branch
        %120 = sbr.rel (%p118) target = $region16
      $region15: #{polarnet_forward.6} parent=11 // pred_region
        _
      $region16: #{polarnet_forward.6} parent=11 // pred_fallthru
        _
      // Predicated region
      $region17: #{polarnet_forward.6} parent=11 // pred_check
        %p121 = pneg %p77
      $region18: #{polarnet_forward.6} parent=11 // pred_check_branch
        %123 = sbr.rel (%p121) target = $region20
      $region19: #{polarnet_forward.6} parent=11 // pred_region
        _
      $region20: #{polarnet_forward.6} parent=11 // pred_fallthru
        _
    $region12: #{polarnet_forward.6} parent=5 // pred_fallthru
      _
    %p124 = scmp.lt.s32.totalorder %s9, 2
    // Predicated region
    $region21: #{polarnet_forward.6} parent=5 // pred_check
      %p125 = pneg %p124
    $region22: #{polarnet_forward.6} parent=5 // pred_check_branch
      %127 = sbr.rel (%p125) target = $region24
    $region23: #{polarnet_forward.6} parent=5 // pred_region
      // Predicated region
      $region25: #{polarnet_forward.6} parent=23 // pred_check
        %p128 = pneg %p29
      $region26: #{polarnet_forward.6} parent=23 // pred_check_branch
        %130 = sbr.rel (%p128) target = $region28
      $region27: #{polarnet_forward.6} parent=23 // pred_region
        %s131 = smul.u32 72, %s9
        %p132 = scmp.lt.s32.totalorder %s131, 143
        %s133 = scalar_select %p132, %s131, 143
        %s134 = smul.addr %s133, 8
        %s135 = scalar_lea.vmem %s0, %s134
        %s136 = smul.u32 72, %s9
      $region28: #{polarnet_forward.6} parent=23 // pred_fallthru
        _
    $region24: #{polarnet_forward.6} parent=5 // pred_fallthru
      _
    %p137 = scmp.le.s32.totalorder 1, %s9
    %p138 = scmp.lt.s32.totalorder %s9, 3
    %p139 = pnand %p137, %p138
    %p140 = pneg %p139
    // Predicated region
    $region29: #{polarnet_forward.6} parent=5 // pred_check
      _
    $region30: #{polarnet_forward.6} parent=5 // pred_check_branch
      %142 = sbr.rel (%p139) target = $region32
    $region31: #{polarnet_forward.6} parent=5 // pred_region
      %s143 = ssub.s32 %s9, 1
      %s144 = smul.u32 72, %s14
      %p145 = scmp.lt.s32.totalorder %s144, 143
      %s146 = scalar_select %p145, %s144, 143
      %s147 = smul.addr %s146, 8
      %s148 = scalar_lea.vmem %s0, %s147
      %p149 = pneg %p35
      %p150 = pneg %p32
      %p151 = pneg %p56
      %p152 = pneg %p53
      %p153 = pneg %p77
      %p154 = pneg %p74
      %p155 = pneg %p103
      %p156 = pneg %p100
      %s157 = smul.u32 72, %s14
      %p158 = scmp.lt.s32.totalorder %s157, 143
      %s159 = scalar_select %p158, %s157, 143
      %s160 = smul.addr %s159, 2
      %s161 = smul.addr %s160, 8
      %s162 = scalar_lea.vmem %s3, %s161
      %s163 = smul.u32 72, %s14
      %p164 = scmp.lt.s32.totalorder %s163, 143
      %s165 = scalar_select %p164, %s163, 143
      %s166 = smul.addr %s165, 8
      %s167 = scalar_lea.vmem %s0, %s166
      %s168 = smul.u32 72, %s14
      %s169 = smul.u32 72, %s14
      %p170 = scmp.lt.s32.totalorder %s169, 143
      %s171 = scalar_select %p170, %s169, 143
      %s172 = smul.addr %s171, 2
      %s173 = smul.addr %s172, 8
      %s174 = scalar_lea.vmem %s3, %s173
      %s175 = smul.u32 72, %s14
      %v176 = vld [vmem:[%s167] sm:$0xff]
      %v177 = vld [vmem:[%s167 + $0x8] sm:$0xff]
      %v178 = vld [vmem:[%s167 + $0x10] sm:$0xff]
      %v179 = vld [vmem:[%s167 + $0x18] sm:$0xff]
      %v180 = vld [vmem:[%s167 + $0x20] sm:$0xff]
      %v181 = vld [vmem:[%s167 + $0x28] sm:$0xff]
      %v182 = vld [vmem:[%s167 + $0x30] sm:$0xff]
      %v183 = vld [vmem:[%s167 + $0x38] sm:$0xff]
      %v184 = vld [vmem:[%s167 + $0x40] sm:$0xff]
      %v185 = vld [vmem:[%s167 + $0x48] sm:$0xff]
      %v186 = vld [vmem:[%s167 + $0x50] sm:$0xff]
      %v187 = vld [vmem:[%s167 + $0x58] sm:$0xff]
      %v188 = vld [vmem:[%s167 + $0x60] sm:$0xff]
      %v189 = vld [vmem:[%s167 + $0x68] sm:$0xff]
      %v190 = vld [vmem:[%s167 + $0x70] sm:$0xff]
      %v191 = vld [vmem:[%s167 + $0x78] sm:$0xff]
      %v192 = vld [vmem:[%s167 + $0x80] sm:$0xff]
      %v193 = vld [vmem:[%s167 + $0x88] sm:$0xff]
      %v194 = vld [vmem:[%s167 + $0x90] sm:$0xff]
      %v195 = vld [vmem:[%s167 + $0x98] sm:$0xff]
      %v196 = vld [vmem:[%s167 + $0xa0] sm:$0xff]
      %v197 = vld [vmem:[%s167 + $0xa8] sm:$0xff]
      %v198 = vld [vmem:[%s167 + $0xb0] sm:$0xff]
      %v199 = vld [vmem:[%s167 + $0xb8] sm:$0xff]
      %v200 = vld [vmem:[%s167 + $0xc0] sm:$0xff]
      %v201 = vld [vmem:[%s167 + $0xc8] sm:$0xff]
      %v202 = vld [vmem:[%s167 + $0xd0] sm:$0xff]
      %v203 = vld [vmem:[%s167 + $0xd8] sm:$0xff]
      %v204 = vld [vmem:[%s167 + $0xe0] sm:$0xff]
      %v205 = vld [vmem:[%s167 + $0xe8] sm:$0xff]
      %v206 = vld [vmem:[%s167 + $0xf0] sm:$0xff]
      %v207 = vld [vmem:[%s167 + $0xf8] sm:$0xff]
      %v208 = vld [vmem:[%s167 + $0x100] sm:$0xff]
      %v209 = vld [vmem:[%s167 + $0x108] sm:$0xff]
      %v210 = vld [vmem:[%s167 + $0x110] sm:$0xff]
      %v211 = vld [vmem:[%s167 + $0x118] sm:$0xff]
      %v212 = vld [vmem:[%s167 + $0x120] sm:$0xff]
      %v213 = vld [vmem:[%s167 + $0x128] sm:$0xff]
      %v214 = vld [vmem:[%s167 + $0x130] sm:$0xff]
      %v215 = vld [vmem:[%s167 + $0x138] sm:$0xff]
      %v216 = vld [vmem:[%s167 + $0x140] sm:$0xff]
      %v217 = vld [vmem:[%s167 + $0x148] sm:$0xff]
      %v218 = vld [vmem:[%s167 + $0x150] sm:$0xff]
      %v219 = vld [vmem:[%s167 + $0x158] sm:$0xff]
      %v220 = vld [vmem:[%s167 + $0x160] sm:$0xff]
      %v221 = vld [vmem:[%s167 + $0x168] sm:$0xff]
      %v222 = vld [vmem:[%s167 + $0x170] sm:$0xff]
      %v223 = vld [vmem:[%s167 + $0x178] sm:$0xff]
      %v224 = vld [vmem:[%s167 + $0x180] sm:$0xff]
      %v225 = vld [vmem:[%s167 + $0x188] sm:$0xff]
      %v226 = vld [vmem:[%s167 + $0x190] sm:$0xff]
      %v227 = vld [vmem:[%s167 + $0x198] sm:$0xff]
      %v228 = vld [vmem:[%s167 + $0x1a0] sm:$0xff]
      %v229 = vld [vmem:[%s167 + $0x1a8] sm:$0xff]
      %v230 = vld [vmem:[%s167 + $0x1b0] sm:$0xff]
      %v231 = vld [vmem:[%s167 + $0x1b8] sm:$0xff]
      %v232 = vld [vmem:[%s167 + $0x1c0] sm:$0xff]
      %v233 = vld [vmem:[%s167 + $0x1c8] sm:$0xff]
      %v234 = vld [vmem:[%s167 + $0x1d0] sm:$0xff]
      %v235 = vld [vmem:[%s167 + $0x1d8] sm:$0xff]
      %v236 = vld [vmem:[%s167 + $0x1e0] sm:$0xff]
      %v237 = vld [vmem:[%s167 + $0x1e8] sm:$0xff]
      %v238 = vld [vmem:[%s167 + $0x1f0] sm:$0xff]
      %v239 = vld [vmem:[%s167 + $0x1f8] sm:$0xff]
      %v240 = vld [vmem:[%s167 + $0x200] sm:$0xff]
      %v241 = vld [vmem:[%s167 + $0x208] sm:$0xff]
      %v242 = vld [vmem:[%s167 + $0x210] sm:$0xff]
      %v243 = vld [vmem:[%s167 + $0x218] sm:$0xff]
      %v244 = vld [vmem:[%s167 + $0x220] sm:$0xff]
      %v245 = vld [vmem:[%s167 + $0x228] sm:$0xff]
      %v246 = vld [vmem:[%s167 + $0x230] sm:$0xff]
      %v247 = vld [vmem:[%s167 + $0x238] sm:$0xff]
      %v248 = vld [vmem:[%s1] sm:$0xff]
      %v249 = vld [vmem:[%s1 + $0x8] sm:$0xff]
      %v250 = vld [vmem:[%s1 + $0x10] sm:$0xff]
      %v251 = vld [vmem:[%s1 + $0x18] sm:$0xff]
      %v252 = vld [vmem:[%s1 + $0x20] sm:$0xff]
      %v253 = vld [vmem:[%s1 + $0x28] sm:$0xff]
      %v254 = vld [vmem:[%s1 + $0x30] sm:$0xff]
      %v255 = vld [vmem:[%s1 + $0x38] sm:$0xff]
      %v256 = vld [vmem:[%s1 + $0x40] sm:$0xff]
      %v257 = vld [vmem:[%s1 + $0x48] sm:$0xff]
      %v258 = vld [vmem:[%s1 + $0x50] sm:$0xff]
      %v259 = vld [vmem:[%s1 + $0x58] sm:$0xff]
      %v260 = vld [vmem:[%s1 + $0x60] sm:$0x3]
      %v261 = vld [vmem:[%s1 + $0x68] sm:$0x3]
      %v262 = vld [vmem:[%s2] sm:$0x3]
      %v264 = vlaneseq
      %v265 = vshrl.u32 %v264, 7
      %v266 = vsub.s32 0, %v265
      %v267 = vrot.slane %v262, %v266
      %v268 = vlaneseq
      %v269 = vshrl.u32 %v268, 7
      %v270 = vsub.s32 1, %v269
      %v271 = vrot.slane %v262, %v270
      %vm274 = vcmask 408576
      %v276 = vsel %vm274, %v176, 0
      %v279 = vsel %vm274, %v177, 0
      %v282 = vsel %vm274, %v178, 0
      %v285 = vsel %vm274, %v179, 0
      %v288 = vsel %vm274, %v180, 0
      %v291 = vsel %vm274, %v181, 0
      %v294 = vsel %vm274, %v182, 0
      %v297 = vsel %vm274, %v183, 0
      %v300 = vsel %vm274, %v184, 0
      %v303 = vsel %vm274, %v185, 0
      %v306 = vsel %vm274, %v186, 0
      %v309 = vsel %vm274, %v187, 0
      %v312 = vsel %vm274, %v188, 0
      %v315 = vsel %vm274, %v189, 0
      %v318 = vsel %vm274, %v190, 0
      %v321 = vsel %vm274, %v191, 0
      %v324 = vsel %vm274, %v192, 0
      %v327 = vsel %vm274, %v193, 0
      %v330 = vsel %vm274, %v194, 0
      %v333 = vsel %vm274, %v195, 0
      %v336 = vsel %vm274, %v196, 0
      %v339 = vsel %vm274, %v197, 0
      %v342 = vsel %vm274, %v198, 0
      %v345 = vsel %vm274, %v199, 0
      %v348 = vsel %vm274, %v200, 0
      %v351 = vsel %vm274, %v201, 0
      %v354 = vsel %vm274, %v202, 0
      %v357 = vsel %vm274, %v203, 0
      %v360 = vsel %vm274, %v204, 0
      %v363 = vsel %vm274, %v205, 0
      %v366 = vsel %vm274, %v206, 0
      %v369 = vsel %vm274, %v207, 0
      %v372 = vsel %vm274, %v208, 0
      %v375 = vsel %vm274, %v209, 0
      %v378 = vsel %vm274, %v210, 0
      %v381 = vsel %vm274, %v211, 0
      %v384 = vsel %vm274, %v212, 0
      %v387 = vsel %vm274, %v213, 0
      %v390 = vsel %vm274, %v214, 0
      %v393 = vsel %vm274, %v215, 0
      %v396 = vsel %vm274, %v216, 0
      %v399 = vsel %vm274, %v217, 0
      %v402 = vsel %vm274, %v218, 0
      %v405 = vsel %vm274, %v219, 0
      %v408 = vsel %vm274, %v220, 0
      %v411 = vsel %vm274, %v221, 0
      %v414 = vsel %vm274, %v222, 0
      %v417 = vsel %vm274, %v223, 0
      %v420 = vsel %vm274, %v224, 0
      %v423 = vsel %vm274, %v225, 0
      %v426 = vsel %vm274, %v226, 0
      %v429 = vsel %vm274, %v227, 0
      %v432 = vsel %vm274, %v228, 0
      %v435 = vsel %vm274, %v229, 0
      %v438 = vsel %vm274, %v230, 0
      %v441 = vsel %vm274, %v231, 0
      %v444 = vsel %vm274, %v232, 0
      %v447 = vsel %vm274, %v233, 0
      %v450 = vsel %vm274, %v234, 0
      %v453 = vsel %vm274, %v235, 0
      %v456 = vsel %vm274, %v236, 0
      %v459 = vsel %vm274, %v237, 0
      %v462 = vsel %vm274, %v238, 0
      %v465 = vsel %vm274, %v239, 0
      %v468 = vsel %vm274, %v240, 0
      %v471 = vsel %vm274, %v241, 0
      %v474 = vsel %vm274, %v242, 0
      %v477 = vsel %vm274, %v243, 0
      %v480 = vsel %vm274, %v244, 0
      %v483 = vsel %vm274, %v245, 0
      %v486 = vsel %vm274, %v246, 0
      %v489 = vsel %vm274, %v247, 0
      %vm491 = vcmask 1041408
      %v493 = vsel %vm491, %v260, 0
      %v496 = vsel %vm491, %v261, 0
      %498 = vmatprep.subr.mxu0 0.0
      %499 = vmatpush1.msra.mxu0 0.0
      %500 = vmatprep.subr.mxu0 0.0
      %501 = vmatpush1.msra.mxu0 0.0
      %502 = vmatprep.subr.mxu0 0.0
      %503 = vmatpush1.msra.mxu0 0.0
      %504 = vmatprep.subr.mxu0 0.0
      %505 = vmatpush1.msra.mxu0 0.0
      %506 = vmatprep.subr.mxu0 0.0
      %507 = vmatpush1.msra.mxu0 0.0
      %508 = vmatprep.subr.mxu0 0.0
      %509 = vmatpush1.msra.mxu0 0.0
      %510 = vmatprep.subr.mxu0 0.0
      %511 = vmatpush1.msra.mxu0 0.0
      %512 = vmatprep.subr.mxu0 0.0
      %513 = vmatpush1.msra.mxu0 0.0
      %514 = vmatprep.subr.mxu0 0.0
      %515 = vmatpush1.msra.mxu0 0.0
      %516 = vmatprep.subr.mxu0 %v496
      %517 = vmatpush1.msra.mxu0 %v493
      %518 = vmatprep.subr.mxu0 %v259
      %519 = vmatpush1.msra.mxu0 %v258
      %520 = vmatprep.subr.mxu0 %v257
      %521 = vmatpush1.msra.mxu0 %v256
      %522 = vmatprep.subr.mxu0 %v255
      %523 = vmatpush1.msra.mxu0 %v254
      %524 = vmatprep.subr.mxu0 %v253
      %525 = vmatpush1.msra.mxu0 %v252
      %526 = vmatprep.subr.mxu0 %v251
      %527 = vmatpush1.msra.mxu0 %v250
      %528 = vmatprep.subr.mxu0 %v249
      %529 = vmatpush1.msra.mxu0 %v248
      %530 = vmatprep.subr.mxu0 0.0
      %531 = vmatpush2.msra.mxu0 0.0
      %532 = vmatprep.subr.mxu0 0.0
      %533 = vmatpush2.msra.mxu0 0.0
      %534 = vmatprep.subr.mxu0 0.0
      %535 = vmatpush2.msra.mxu0 0.0
      %536 = vmatprep.subr.mxu0 0.0
      %537 = vmatpush2.msra.mxu0 0.0
      %538 = vmatprep.subr.mxu0 0.0
      %539 = vmatpush2.msra.mxu0 0.0
      %540 = vmatprep.subr.mxu0 0.0
      %541 = vmatpush2.msra.mxu0 0.0
      %542 = vmatprep.subr.mxu0 0.0
      %543 = vmatpush2.msra.mxu0 0.0
      %544 = vmatprep.subr.mxu0 0.0
      %545 = vmatpush2.msra.mxu0 0.0
      %546 = vmatprep.subr.mxu0 0.0
      %547 = vmatpush2.msra.mxu0 0.0
      %548 = vmatprep.subr.mxu0 0.0
      %549 = vmatpush2.msra.mxu0 0.0
      %550 = vmatprep.subr.mxu0 0.0
      %551 = vmatpush2.msra.mxu0 0.0
      %552 = vmatprep.subr.mxu0 0.0
      %553 = vmatpush2.msra.mxu0 0.0
      %554 = vmatprep.subr.mxu0 0.0
      %555 = vmatpush2.msra.mxu0 0.0
      %556 = vmatprep.subr.mxu0 0.0
      %557 = vmatpush2.msra.mxu0 0.0
      %558 = vmatprep.subr.mxu0 0.0
      %559 = vmatpush2.msra.mxu0 0.0
      %560 = vmatprep.subr.mxu0 0.0
      %561 = vmatpush2.msra.mxu0 0.0
      %562 = vmatprep.mubr.f32.mxu0 0.0
      %563 = vmatmul.mubr.f32.gmra.mxu0 %v276
      %v564 = vpop.f32.mrf.mxu0
      %v565 = vadd.f32 %v267, %v564
      %v566 = vpop.f32.mrf.mxu0
      %v567 = vadd.f32 %v271, %v566
      %568 = vmatprep.mubr.f32.mxu0 0.0
      %569 = vmatmul.mubr.f32.gmra.mxu0 %v279
      %v570 = vpop.f32.mrf.mxu0
      %v571 = vadd.f32 %v267, %v570
      %v572 = vpop.f32.mrf.mxu0
      %v573 = vadd.f32 %v271, %v572
      %574 = vmatprep.mubr.f32.mxu0 0.0
      %575 = vmatmul.mubr.f32.gmra.mxu0 %v282
      %v576 = vpop.f32.mrf.mxu0
      %v577 = vadd.f32 %v267, %v576
      %v578 = vpop.f32.mrf.mxu0
      %v579 = vadd.f32 %v271, %v578
      %580 = vmatprep.mubr.f32.mxu0 0.0
      %581 = vmatmul.mubr.f32.gmra.mxu0 %v285
      %v582 = vpop.f32.mrf.mxu0
      %v583 = vadd.f32 %v267, %v582
      %v584 = vpop.f32.mrf.mxu0
      %v585 = vadd.f32 %v271, %v584
      %586 = vmatprep.mubr.f32.mxu0 0.0
      %587 = vmatmul.mubr.f32.gmra.mxu0 %v288
      %v588 = vpop.f32.mrf.mxu0
      %v589 = vadd.f32 %v267, %v588
      %v590 = vpop.f32.mrf.mxu0
      %v591 = vadd.f32 %v271, %v590
      %592 = vmatprep.mubr.f32.mxu0 0.0
      %593 = vmatmul.mubr.f32.gmra.mxu0 %v291
      %v594 = vpop.f32.mrf.mxu0
      %v595 = vadd.f32 %v267, %v594
      %v596 = vpop.f32.mrf.mxu0
      %v597 = vadd.f32 %v271, %v596
      %598 = vmatprep.mubr.f32.mxu0 0.0
      %599 = vmatmul.mubr.f32.gmra.mxu0 %v294
      %v600 = vpop.f32.mrf.mxu0
      %v601 = vadd.f32 %v267, %v600
      %v602 = vpop.f32.mrf.mxu0
      %v603 = vadd.f32 %v271, %v602
      %604 = vmatprep.mubr.f32.mxu0 0.0
      %605 = vmatmul.mubr.f32.gmra.mxu0 %v297
      %v606 = vpop.f32.mrf.mxu0
      %v607 = vadd.f32 %v267, %v606
      %v608 = vpop.f32.mrf.mxu0
      %v609 = vadd.f32 %v271, %v608
      %610 = vmatprep.mubr.f32.mxu0 0.0
      %611 = vmatmul.mubr.f32.gmra.mxu0 %v300
      %v612 = vpop.f32.mrf.mxu0
      %v613 = vadd.f32 %v267, %v612
      %v614 = vpop.f32.mrf.mxu0
      %v615 = vadd.f32 %v271, %v614
      %616 = vmatprep.mubr.f32.mxu0 0.0
      %617 = vmatmul.mubr.f32.gmra.mxu0 %v303
      %v618 = vpop.f32.mrf.mxu0
      %v619 = vadd.f32 %v267, %v618
      %v620 = vpop.f32.mrf.mxu0
      %v621 = vadd.f32 %v271, %v620
      %622 = vmatprep.mubr.f32.mxu0 0.0
      %623 = vmatmul.mubr.f32.gmra.mxu0 %v306
      %v624 = vpop.f32.mrf.mxu0
      %v625 = vadd.f32 %v267, %v624
      %v626 = vpop.f32.mrf.mxu0
      %v627 = vadd.f32 %v271, %v626
      %628 = vmatprep.mubr.f32.mxu0 0.0
      %629 = vmatmul.mubr.f32.gmra.mxu0 %v309
      %v630 = vpop.f32.mrf.mxu0
      %v631 = vadd.f32 %v267, %v630
      %v632 = vpop.f32.mrf.mxu0
      %v633 = vadd.f32 %v271, %v632
      %634 = vmatprep.mubr.f32.mxu0 0.0
      %635 = vmatmul.mubr.f32.gmra.mxu0 %v312
      %v636 = vpop.f32.mrf.mxu0
      %v637 = vadd.f32 %v267, %v636
      %v638 = vpop.f32.mrf.mxu0
      %v639 = vadd.f32 %v271, %v638
      %640 = vmatprep.mubr.f32.mxu0 0.0
      %641 = vmatmul.mubr.f32.gmra.mxu0 %v315
      %v642 = vpop.f32.mrf.mxu0
      %v643 = vadd.f32 %v267, %v642
      %v644 = vpop.f32.mrf.mxu0
      %v645 = vadd.f32 %v271, %v644
      %646 = vmatprep.mubr.f32.mxu0 0.0
      %647 = vmatmul.mubr.f32.gmra.mxu0 %v318
      %v648 = vpop.f32.mrf.mxu0
      %v649 = vadd.f32 %v267, %v648
      %v650 = vpop.f32.mrf.mxu0
      %v651 = vadd.f32 %v271, %v650
      %652 = vmatprep.mubr.f32.mxu0 0.0
      %653 = vmatmul.mubr.f32.gmra.mxu0 %v321
      %v654 = vpop.f32.mrf.mxu0
      %v655 = vadd.f32 %v267, %v654
      %v656 = vpop.f32.mrf.mxu0
      %v657 = vadd.f32 %v271, %v656
      %658 = vmatprep.mubr.f32.mxu0 0.0
      %659 = vmatmul.mubr.f32.gmra.mxu0 %v324
      %v660 = vpop.f32.mrf.mxu0
      %v661 = vadd.f32 %v267, %v660
      %v662 = vpop.f32.mrf.mxu0
      %v663 = vadd.f32 %v271, %v662
      %664 = vmatprep.mubr.f32.mxu0 0.0
      %665 = vmatmul.mubr.f32.gmra.mxu0 %v327
      %v666 = vpop.f32.mrf.mxu0
      %v667 = vadd.f32 %v267, %v666
      %v668 = vpop.f32.mrf.mxu0
      %v669 = vadd.f32 %v271, %v668
      %670 = vmatprep.mubr.f32.mxu0 0.0
      %671 = vmatmul.mubr.f32.gmra.mxu0 %v330
      %v672 = vpop.f32.mrf.mxu0
      %v673 = vadd.f32 %v267, %v672
      %v674 = vpop.f32.mrf.mxu0
      %v675 = vadd.f32 %v271, %v674
      %676 = vmatprep.mubr.f32.mxu0 0.0
      %677 = vmatmul.mubr.f32.gmra.mxu0 %v333
      %v678 = vpop.f32.mrf.mxu0
      %v679 = vadd.f32 %v267, %v678
      %v680 = vpop.f32.mrf.mxu0
      %v681 = vadd.f32 %v271, %v680
      %682 = vmatprep.mubr.f32.mxu0 0.0
      %683 = vmatmul.mubr.f32.gmra.mxu0 %v336
      %v684 = vpop.f32.mrf.mxu0
      %v685 = vadd.f32 %v267, %v684
      %v686 = vpop.f32.mrf.mxu0
      %v687 = vadd.f32 %v271, %v686
      %688 = vmatprep.mubr.f32.mxu0 0.0
      %689 = vmatmul.mubr.f32.gmra.mxu0 %v339
      %v690 = vpop.f32.mrf.mxu0
      %v691 = vadd.f32 %v267, %v690
      %v692 = vpop.f32.mrf.mxu0
      %v693 = vadd.f32 %v271, %v692
      %694 = vmatprep.mubr.f32.mxu0 0.0
      %695 = vmatmul.mubr.f32.gmra.mxu0 %v342
      %v696 = vpop.f32.mrf.mxu0
      %v697 = vadd.f32 %v267, %v696
      %v698 = vpop.f32.mrf.mxu0
      %v699 = vadd.f32 %v271, %v698
      %700 = vmatprep.mubr.f32.mxu0 0.0
      %701 = vmatmul.mubr.f32.gmra.mxu0 %v345
      %v702 = vpop.f32.mrf.mxu0
      %v703 = vadd.f32 %v267, %v702
      %v704 = vpop.f32.mrf.mxu0
      %v705 = vadd.f32 %v271, %v704
      %706 = vmatprep.mubr.f32.mxu0 0.0
      %707 = vmatmul.mubr.f32.gmra.mxu0 %v348
      %v708 = vpop.f32.mrf.mxu0
      %v709 = vadd.f32 %v267, %v708
      %v710 = vpop.f32.mrf.mxu0
      %v711 = vadd.f32 %v271, %v710
      %712 = vmatprep.mubr.f32.mxu0 0.0
      %713 = vmatmul.mubr.f32.gmra.mxu0 %v351
      %v714 = vpop.f32.mrf.mxu0
      %v715 = vadd.f32 %v267, %v714
      %v716 = vpop.f32.mrf.mxu0
      %v717 = vadd.f32 %v271, %v716
      %718 = vmatprep.mubr.f32.mxu0 0.0
      %719 = vmatmul.mubr.f32.gmra.mxu0 %v354
      %v720 = vpop.f32.mrf.mxu0
      %v721 = vadd.f32 %v267, %v720
      %v722 = vpop.f32.mrf.mxu0
      %v723 = vadd.f32 %v271, %v722
      %724 = vmatprep.mubr.f32.mxu0 0.0
      %725 = vmatmul.mubr.f32.gmra.mxu0 %v357
      %v726 = vpop.f32.mrf.mxu0
      %v727 = vadd.f32 %v267, %v726
      %v728 = vpop.f32.mrf.mxu0
      %v729 = vadd.f32 %v271, %v728
      %730 = vmatprep.mubr.f32.mxu0 0.0
      %731 = vmatmul.mubr.f32.gmra.mxu0 %v360
      %v732 = vpop.f32.mrf.mxu0
      %v733 = vadd.f32 %v267, %v732
      %v734 = vpop.f32.mrf.mxu0
      %v735 = vadd.f32 %v271, %v734
      %736 = vmatprep.mubr.f32.mxu0 0.0
      %737 = vmatmul.mubr.f32.gmra.mxu0 %v363
      %v738 = vpop.f32.mrf.mxu0
      %v739 = vadd.f32 %v267, %v738
      %v740 = vpop.f32.mrf.mxu0
      %v741 = vadd.f32 %v271, %v740
      %742 = vmatprep.mubr.f32.mxu0 0.0
      %743 = vmatmul.mubr.f32.gmra.mxu0 %v366
      %v744 = vpop.f32.mrf.mxu0
      %v745 = vadd.f32 %v267, %v744
      %v746 = vpop.f32.mrf.mxu0
      %v747 = vadd.f32 %v271, %v746
      %748 = vmatprep.mubr.f32.mxu0 0.0
      %749 = vmatmul.mubr.f32.gmra.mxu0 %v369
      %v750 = vpop.f32.mrf.mxu0
      %v751 = vadd.f32 %v267, %v750
      %v752 = vpop.f32.mrf.mxu0
      %v753 = vadd.f32 %v271, %v752
      %754 = vmatprep.mubr.f32.mxu0 0.0
      %755 = vmatmul.mubr.f32.gmra.mxu0 %v372
      %v756 = vpop.f32.mrf.mxu0
      %v757 = vadd.f32 %v267, %v756
      %v758 = vpop.f32.mrf.mxu0
      %v759 = vadd.f32 %v271, %v758
      %760 = vmatprep.mubr.f32.mxu0 0.0
      %761 = vmatmul.mubr.f32.gmra.mxu0 %v375
      %v762 = vpop.f32.mrf.mxu0
      %v763 = vadd.f32 %v267, %v762
      %v764 = vpop.f32.mrf.mxu0
      %v765 = vadd.f32 %v271, %v764
      %766 = vmatprep.mubr.f32.mxu0 0.0
      %767 = vmatmul.mubr.f32.gmra.mxu0 %v378
      %v768 = vpop.f32.mrf.mxu0
      %v769 = vadd.f32 %v267, %v768
      %v770 = vpop.f32.mrf.mxu0
      %v771 = vadd.f32 %v271, %v770
      %772 = vmatprep.mubr.f32.mxu0 0.0
      %773 = vmatmul.mubr.f32.gmra.mxu0 %v381
      %v774 = vpop.f32.mrf.mxu0
      %v775 = vadd.f32 %v267, %v774
      %v776 = vpop.f32.mrf.mxu0
      %v777 = vadd.f32 %v271, %v776
      %778 = vmatprep.mubr.f32.mxu0 0.0
      %779 = vmatmul.mubr.f32.gmra.mxu0 %v384
      %v780 = vpop.f32.mrf.mxu0
      %v781 = vadd.f32 %v267, %v780
      %v782 = vpop.f32.mrf.mxu0
      %v783 = vadd.f32 %v271, %v782
      %784 = vmatprep.mubr.f32.mxu0 0.0
      %785 = vmatmul.mubr.f32.gmra.mxu0 %v387
      %v786 = vpop.f32.mrf.mxu0
      %v787 = vadd.f32 %v267, %v786
      %v788 = vpop.f32.mrf.mxu0
      %v789 = vadd.f32 %v271, %v788
      %790 = vmatprep.mubr.f32.mxu0 0.0
      %791 = vmatmul.mubr.f32.gmra.mxu0 %v390
      %v792 = vpop.f32.mrf.mxu0
      %v793 = vadd.f32 %v267, %v792
      %v794 = vpop.f32.mrf.mxu0
      %v795 = vadd.f32 %v271, %v794
      %796 = vmatprep.mubr.f32.mxu0 0.0
      %797 = vmatmul.mubr.f32.gmra.mxu0 %v393
      %v798 = vpop.f32.mrf.mxu0
      %v799 = vadd.f32 %v267, %v798
      %v800 = vpop.f32.mrf.mxu0
      %v801 = vadd.f32 %v271, %v800
      %802 = vmatprep.mubr.f32.mxu0 0.0
      %803 = vmatmul.mubr.f32.gmra.mxu0 %v396
      %v804 = vpop.f32.mrf.mxu0
      %v805 = vadd.f32 %v267, %v804
      %v806 = vpop.f32.mrf.mxu0
      %v807 = vadd.f32 %v271, %v806
      %808 = vmatprep.mubr.f32.mxu0 0.0
      %809 = vmatmul.mubr.f32.gmra.mxu0 %v399
      %v810 = vpop.f32.mrf.mxu0
      %v811 = vadd.f32 %v267, %v810
      %v812 = vpop.f32.mrf.mxu0
      %v813 = vadd.f32 %v271, %v812
      %814 = vmatprep.mubr.f32.mxu0 0.0
      %815 = vmatmul.mubr.f32.gmra.mxu0 %v402
      %v816 = vpop.f32.mrf.mxu0
      %v817 = vadd.f32 %v267, %v816
      %v818 = vpop.f32.mrf.mxu0
      %v819 = vadd.f32 %v271, %v818
      %820 = vmatprep.mubr.f32.mxu0 0.0
      %821 = vmatmul.mubr.f32.gmra.mxu0 %v405
      %v822 = vpop.f32.mrf.mxu0
      %v823 = vadd.f32 %v267, %v822
      %v824 = vpop.f32.mrf.mxu0
      %v825 = vadd.f32 %v271, %v824
      %826 = vmatprep.mubr.f32.mxu0 0.0
      %827 = vmatmul.mubr.f32.gmra.mxu0 %v408
      %v828 = vpop.f32.mrf.mxu0
      %v829 = vadd.f32 %v267, %v828
      %v830 = vpop.f32.mrf.mxu0
      %v831 = vadd.f32 %v271, %v830
      %832 = vmatprep.mubr.f32.mxu0 0.0
      %833 = vmatmul.mubr.f32.gmra.mxu0 %v411
      %v834 = vpop.f32.mrf.mxu0
      %v835 = vadd.f32 %v267, %v834
      %v836 = vpop.f32.mrf.mxu0
      %v837 = vadd.f32 %v271, %v836
      %838 = vmatprep.mubr.f32.mxu0 0.0
      %839 = vmatmul.mubr.f32.gmra.mxu0 %v414
      %v840 = vpop.f32.mrf.mxu0
      %v841 = vadd.f32 %v267, %v840
      %v842 = vpop.f32.mrf.mxu0
      %v843 = vadd.f32 %v271, %v842
      %844 = vmatprep.mubr.f32.mxu0 0.0
      %845 = vmatmul.mubr.f32.gmra.mxu0 %v417
      %v846 = vpop.f32.mrf.mxu0
      %v847 = vadd.f32 %v267, %v846
      %v848 = vpop.f32.mrf.mxu0
      %v849 = vadd.f32 %v271, %v848
      %850 = vmatprep.mubr.f32.mxu0 0.0
      %851 = vmatmul.mubr.f32.gmra.mxu0 %v420
      %v852 = vpop.f32.mrf.mxu0
      %v853 = vadd.f32 %v267, %v852
      %v854 = vpop.f32.mrf.mxu0
      %v855 = vadd.f32 %v271, %v854
      %856 = vmatprep.mubr.f32.mxu0 0.0
      %857 = vmatmul.mubr.f32.gmra.mxu0 %v423
      %v858 = vpop.f32.mrf.mxu0
      %v859 = vadd.f32 %v267, %v858
      %v860 = vpop.f32.mrf.mxu0
      %v861 = vadd.f32 %v271, %v860
      %862 = vmatprep.mubr.f32.mxu0 0.0
      %863 = vmatmul.mubr.f32.gmra.mxu0 %v426
      %v864 = vpop.f32.mrf.mxu0
      %v865 = vadd.f32 %v267, %v864
      %v866 = vpop.f32.mrf.mxu0
      %v867 = vadd.f32 %v271, %v866
      %868 = vmatprep.mubr.f32.mxu0 0.0
      %869 = vmatmul.mubr.f32.gmra.mxu0 %v429
      %v870 = vpop.f32.mrf.mxu0
      %v871 = vadd.f32 %v267, %v870
      %v872 = vpop.f32.mrf.mxu0
      %v873 = vadd.f32 %v271, %v872
      %874 = vmatprep.mubr.f32.mxu0 0.0
      %875 = vmatmul.mubr.f32.gmra.mxu0 %v432
      %v876 = vpop.f32.mrf.mxu0
      %v877 = vadd.f32 %v267, %v876
      %v878 = vpop.f32.mrf.mxu0
      %v879 = vadd.f32 %v271, %v878
      %880 = vmatprep.mubr.f32.mxu0 0.0
      %881 = vmatmul.mubr.f32.gmra.mxu0 %v435
      %v882 = vpop.f32.mrf.mxu0
      %v883 = vadd.f32 %v267, %v882
      %v884 = vpop.f32.mrf.mxu0
      %v885 = vadd.f32 %v271, %v884
      %886 = vmatprep.mubr.f32.mxu0 0.0
      %887 = vmatmul.mubr.f32.gmra.mxu0 %v438
      %v888 = vpop.f32.mrf.mxu0
      %v889 = vadd.f32 %v267, %v888
      %v890 = vpop.f32.mrf.mxu0
      %v891 = vadd.f32 %v271, %v890
      %892 = vmatprep.mubr.f32.mxu0 0.0
      %893 = vmatmul.mubr.f32.gmra.mxu0 %v441
      %v894 = vpop.f32.mrf.mxu0
      %v895 = vadd.f32 %v267, %v894
      %v896 = vpop.f32.mrf.mxu0
      %v897 = vadd.f32 %v271, %v896
      %898 = vmatprep.mubr.f32.mxu0 0.0
      %899 = vmatmul.mubr.f32.gmra.mxu0 %v444
      %v900 = vpop.f32.mrf.mxu0
      %v901 = vadd.f32 %v267, %v900
      %v902 = vpop.f32.mrf.mxu0
      %v903 = vadd.f32 %v271, %v902
      %904 = vmatprep.mubr.f32.mxu0 0.0
      %905 = vmatmul.mubr.f32.gmra.mxu0 %v447
      %v906 = vpop.f32.mrf.mxu0
      %v907 = vadd.f32 %v267, %v906
      %v908 = vpop.f32.mrf.mxu0
      %v909 = vadd.f32 %v271, %v908
      %910 = vmatprep.mubr.f32.mxu0 0.0
      %911 = vmatmul.mubr.f32.gmra.mxu0 %v450
      %v912 = vpop.f32.mrf.mxu0
      %v913 = vadd.f32 %v267, %v912
      %v914 = vpop.f32.mrf.mxu0
      %v915 = vadd.f32 %v271, %v914
      %916 = vmatprep.mubr.f32.mxu0 0.0
      %917 = vmatmul.mubr.f32.gmra.mxu0 %v453
      %v918 = vpop.f32.mrf.mxu0
      %v919 = vadd.f32 %v267, %v918
      %v920 = vpop.f32.mrf.mxu0
      %v921 = vadd.f32 %v271, %v920
      %922 = vmatprep.mubr.f32.mxu0 0.0
      %923 = vmatmul.mubr.f32.gmra.mxu0 %v456
      %v924 = vpop.f32.mrf.mxu0
      %v925 = vadd.f32 %v267, %v924
      %v926 = vpop.f32.mrf.mxu0
      %v927 = vadd.f32 %v271, %v926
      %928 = vmatprep.mubr.f32.mxu0 0.0
      %929 = vmatmul.mubr.f32.gmra.mxu0 %v459
      %v930 = vpop.f32.mrf.mxu0
      %v931 = vadd.f32 %v267, %v930
      %v932 = vpop.f32.mrf.mxu0
      %v933 = vadd.f32 %v271, %v932
      %934 = vmatprep.mubr.f32.mxu0 0.0
      %935 = vmatmul.mubr.f32.gmra.mxu0 %v462
      %v936 = vpop.f32.mrf.mxu0
      %v937 = vadd.f32 %v267, %v936
      %v938 = vpop.f32.mrf.mxu0
      %v939 = vadd.f32 %v271, %v938
      %940 = vmatprep.mubr.f32.mxu0 0.0
      %941 = vmatmul.mubr.f32.gmra.mxu0 %v465
      %v942 = vpop.f32.mrf.mxu0
      %v943 = vadd.f32 %v267, %v942
      %v944 = vpop.f32.mrf.mxu0
      %v945 = vadd.f32 %v271, %v944
      %946 = vmatprep.mubr.f32.mxu0 0.0
      %947 = vmatmul.mubr.f32.gmra.mxu0 %v468
      %v948 = vpop.f32.mrf.mxu0
      %v949 = vadd.f32 %v267, %v948
      %v950 = vpop.f32.mrf.mxu0
      %v951 = vadd.f32 %v271, %v950
      %952 = vmatprep.mubr.f32.mxu0 0.0
      %953 = vmatmul.mubr.f32.gmra.mxu0 %v471
      %v954 = vpop.f32.mrf.mxu0
      %v955 = vadd.f32 %v267, %v954
      %v956 = vpop.f32.mrf.mxu0
      %v957 = vadd.f32 %v271, %v956
      %958 = vmatprep.mubr.f32.mxu0 0.0
      %959 = vmatmul.mubr.f32.gmra.mxu0 %v474
      %v960 = vpop.f32.mrf.mxu0
      %v961 = vadd.f32 %v267, %v960
      %v962 = vpop.f32.mrf.mxu0
      %v963 = vadd.f32 %v271, %v962
      %964 = vmatprep.mubr.f32.mxu0 0.0
      %965 = vmatmul.mubr.f32.gmra.mxu0 %v477
      %v966 = vpop.f32.mrf.mxu0
      %v967 = vadd.f32 %v267, %v966
      %v968 = vpop.f32.mrf.mxu0
      %v969 = vadd.f32 %v271, %v968
      %970 = vmatprep.mubr.f32.mxu0 0.0
      %971 = vmatmul.mubr.f32.gmra.mxu0 %v480
      %v972 = vpop.f32.mrf.mxu0
      %v973 = vadd.f32 %v267, %v972
      %v974 = vpop.f32.mrf.mxu0
      %v975 = vadd.f32 %v271, %v974
      %976 = vmatprep.mubr.f32.mxu0 0.0
      %977 = vmatmul.mubr.f32.gmra.mxu0 %v483
      %v978 = vpop.f32.mrf.mxu0
      %v979 = vadd.f32 %v267, %v978
      %v980 = vpop.f32.mrf.mxu0
      %v981 = vadd.f32 %v271, %v980
      %982 = vmatprep.mubr.f32.mxu0 0.0
      %983 = vmatmul.mubr.f32.gmra.mxu0 %v486
      %v984 = vpop.f32.mrf.mxu0
      %v985 = vadd.f32 %v267, %v984
      %v986 = vpop.f32.mrf.mxu0
      %v987 = vadd.f32 %v271, %v986
      %988 = vmatprep.mubr.f32.mxu0 0.0
      %989 = vmatmul.mubr.f32.gmra.mxu0 %v489
      %v990 = vpop.f32.mrf.mxu0
      %v991 = vadd.f32 %v267, %v990
      %v992 = vpop.f32.mrf.mxu0
      %v993 = vadd.f32 %v271, %v992
      %994 = vdwg.mxu0
      %v995 = vmax.f32 %v565, 0.0
      %v996 = vmax.f32 %v567, 0.0
      %v997 = vmax.f32 %v571, 0.0
      %v998 = vmax.f32 %v573, 0.0
      %v999 = vmax.f32 %v577, 0.0
      %v1000 = vmax.f32 %v579, 0.0
      %v1001 = vmax.f32 %v583, 0.0
      %v1002 = vmax.f32 %v585, 0.0
      %v1003 = vmax.f32 %v589, 0.0
      %v1004 = vmax.f32 %v591, 0.0
      %v1005 = vmax.f32 %v595, 0.0
      %v1006 = vmax.f32 %v597, 0.0
      %v1007 = vmax.f32 %v601, 0.0
      %v1008 = vmax.f32 %v603, 0.0
      %v1009 = vmax.f32 %v607, 0.0
      %v1010 = vmax.f32 %v609, 0.0
      %v1011 = vmax.f32 %v613, 0.0
      %v1012 = vmax.f32 %v615, 0.0
      %v1013 = vmax.f32 %v619, 0.0
      %v1014 = vmax.f32 %v621, 0.0
      %v1015 = vmax.f32 %v625, 0.0
      %v1016 = vmax.f32 %v627, 0.0
      %v1017 = vmax.f32 %v631, 0.0
      %v1018 = vmax.f32 %v633, 0.0
      %v1019 = vmax.f32 %v637, 0.0
      %v1020 = vmax.f32 %v639, 0.0
      %v1021 = vmax.f32 %v643, 0.0
      %v1022 = vmax.f32 %v645, 0.0
      %v1023 = vmax.f32 %v649, 0.0
      %v1024 = vmax.f32 %v651, 0.0
      %v1025 = vmax.f32 %v655, 0.0
      %v1026 = vmax.f32 %v657, 0.0
      %v1027 = vmax.f32 %v661, 0.0
      %v1028 = vmax.f32 %v663, 0.0
      %v1029 = vmax.f32 %v667, 0.0
      %v1030 = vmax.f32 %v669, 0.0
      %v1031 = vmax.f32 %v673, 0.0
      %v1032 = vmax.f32 %v675, 0.0
      %v1033 = vmax.f32 %v679, 0.0
      %v1034 = vmax.f32 %v681, 0.0
      %v1035 = vmax.f32 %v685, 0.0
      %v1036 = vmax.f32 %v687, 0.0
      %v1037 = vmax.f32 %v691, 0.0
      %v1038 = vmax.f32 %v693, 0.0
      %v1039 = vmax.f32 %v697, 0.0
      %v1040 = vmax.f32 %v699, 0.0
      %v1041 = vmax.f32 %v703, 0.0
      %v1042 = vmax.f32 %v705, 0.0
      %v1043 = vmax.f32 %v709, 0.0
      %v1044 = vmax.f32 %v711, 0.0
      %v1045 = vmax.f32 %v715, 0.0
      %v1046 = vmax.f32 %v717, 0.0
      %v1047 = vmax.f32 %v721, 0.0
      %v1048 = vmax.f32 %v723, 0.0
      %v1049 = vmax.f32 %v727, 0.0
      %v1050 = vmax.f32 %v729, 0.0
      %v1051 = vmax.f32 %v733, 0.0
      %v1052 = vmax.f32 %v735, 0.0
      %v1053 = vmax.f32 %v739, 0.0
      %v1054 = vmax.f32 %v741, 0.0
      %v1055 = vmax.f32 %v745, 0.0
      %v1056 = vmax.f32 %v747, 0.0
      %v1057 = vmax.f32 %v751, 0.0
      %v1058 = vmax.f32 %v753, 0.0
      %v1059 = vmax.f32 %v757, 0.0
      %v1060 = vmax.f32 %v759, 0.0
      %v1061 = vmax.f32 %v763, 0.0
      %v1062 = vmax.f32 %v765, 0.0
      %v1063 = vmax.f32 %v769, 0.0
      %v1064 = vmax.f32 %v771, 0.0
      %v1065 = vmax.f32 %v775, 0.0
      %v1066 = vmax.f32 %v777, 0.0
      %v1067 = vmax.f32 %v781, 0.0
      %v1068 = vmax.f32 %v783, 0.0
      %v1069 = vmax.f32 %v787, 0.0
      %v1070 = vmax.f32 %v789, 0.0
      %v1071 = vmax.f32 %v793, 0.0
      %v1072 = vmax.f32 %v795, 0.0
      %v1073 = vmax.f32 %v799, 0.0
      %v1074 = vmax.f32 %v801, 0.0
      %v1075 = vmax.f32 %v805, 0.0
      %v1076 = vmax.f32 %v807, 0.0
      %v1077 = vmax.f32 %v811, 0.0
      %v1078 = vmax.f32 %v813, 0.0
      %v1079 = vmax.f32 %v817, 0.0
      %v1080 = vmax.f32 %v819, 0.0
      %v1081 = vmax.f32 %v823, 0.0
      %v1082 = vmax.f32 %v825, 0.0
      %v1083 = vmax.f32 %v829, 0.0
      %v1084 = vmax.f32 %v831, 0.0
      %v1085 = vmax.f32 %v835, 0.0
      %v1086 = vmax.f32 %v837, 0.0
      %v1087 = vmax.f32 %v841, 0.0
      %v1088 = vmax.f32 %v843, 0.0
      %v1089 = vmax.f32 %v847, 0.0
      %v1090 = vmax.f32 %v849, 0.0
      %v1091 = vmax.f32 %v853, 0.0
      %v1092 = vmax.f32 %v855, 0.0
      %v1093 = vmax.f32 %v859, 0.0
      %v1094 = vmax.f32 %v861, 0.0
      %v1095 = vmax.f32 %v865, 0.0
      %v1096 = vmax.f32 %v867, 0.0
      %v1097 = vmax.f32 %v871, 0.0
      %v1098 = vmax.f32 %v873, 0.0
      %v1099 = vmax.f32 %v877, 0.0
      %v1100 = vmax.f32 %v879, 0.0
      %v1101 = vmax.f32 %v883, 0.0
      %v1102 = vmax.f32 %v885, 0.0
      %v1103 = vmax.f32 %v889, 0.0
      %v1104 = vmax.f32 %v891, 0.0
      %v1105 = vmax.f32 %v895, 0.0
      %v1106 = vmax.f32 %v897, 0.0
      %v1107 = vmax.f32 %v901, 0.0
      %v1108 = vmax.f32 %v903, 0.0
      %v1109 = vmax.f32 %v907, 0.0
      %v1110 = vmax.f32 %v909, 0.0
      %v1111 = vmax.f32 %v913, 0.0
      %v1112 = vmax.f32 %v915, 0.0
      %v1113 = vmax.f32 %v919, 0.0
      %v1114 = vmax.f32 %v921, 0.0
      %v1115 = vmax.f32 %v925, 0.0
      %v1116 = vmax.f32 %v927, 0.0
      %v1117 = vmax.f32 %v931, 0.0
      %v1118 = vmax.f32 %v933, 0.0
      %v1119 = vmax.f32 %v937, 0.0
      %v1120 = vmax.f32 %v939, 0.0
      %v1121 = vmax.f32 %v943, 0.0
      %v1122 = vmax.f32 %v945, 0.0
      %v1123 = vmax.f32 %v949, 0.0
      %v1124 = vmax.f32 %v951, 0.0
      %v1125 = vmax.f32 %v955, 0.0
      %v1126 = vmax.f32 %v957, 0.0
      %v1127 = vmax.f32 %v961, 0.0
      %v1128 = vmax.f32 %v963, 0.0
      %v1129 = vmax.f32 %v967, 0.0
      %v1130 = vmax.f32 %v969, 0.0
      %v1131 = vmax.f32 %v973, 0.0
      %v1132 = vmax.f32 %v975, 0.0
      %v1133 = vmax.f32 %v979, 0.0
      %v1134 = vmax.f32 %v981, 0.0
      %v1135 = vmax.f32 %v985, 0.0
      %v1136 = vmax.f32 %v987, 0.0
      %v1137 = vmax.f32 %v991, 0.0
      %v1138 = vmax.f32 %v993, 0.0
      %1139 = vst [vmem:[%s174] sm:$0xff] %v995
      %1140 = vst [vmem:[%s174 + $0x8] sm:$0xff] %v996
      %1141 = vst [vmem:[%s174 + $0x10] sm:$0xff] %v997
      %1142 = vst [vmem:[%s174 + $0x18] sm:$0xff] %v998
      %1143 = vst [vmem:[%s174 + $0x20] sm:$0xff] %v999
      %1144 = vst [vmem:[%s174 + $0x28] sm:$0xff] %v1000
      %1145 = vst [vmem:[%s174 + $0x30] sm:$0xff] %v1001
      %1146 = vst [vmem:[%s174 + $0x38] sm:$0xff] %v1002
      %1147 = vst [vmem:[%s174 + $0x40] sm:$0xff] %v1003
      %1148 = vst [vmem:[%s174 + $0x48] sm:$0xff] %v1004
      %1149 = vst [vmem:[%s174 + $0x50] sm:$0xff] %v1005
      %1150 = vst [vmem:[%s174 + $0x58] sm:$0xff] %v1006
      %1151 = vst [vmem:[%s174 + $0x60] sm:$0xff] %v1007
      %1152 = vst [vmem:[%s174 + $0x68] sm:$0xff] %v1008
      %1153 = vst [vmem:[%s174 + $0x70] sm:$0xff] %v1009
      %1154 = vst [vmem:[%s174 + $0x78] sm:$0xff] %v1010
      %1155 = vst [vmem:[%s174 + $0x80] sm:$0xff] %v1011
      %1156 = vst [vmem:[%s174 + $0x88] sm:$0xff] %v1012
      %1157 = vst [vmem:[%s174 + $0x90] sm:$0xff] %v1013
      %1158 = vst [vmem:[%s174 + $0x98] sm:$0xff] %v1014
      %1159 = vst [vmem:[%s174 + $0xa0] sm:$0xff] %v1015
      %1160 = vst [vmem:[%s174 + $0xa8] sm:$0xff] %v1016
      %1161 = vst [vmem:[%s174 + $0xb0] sm:$0xff] %v1017
      %1162 = vst [vmem:[%s174 + $0xb8] sm:$0xff] %v1018
      %1163 = vst [vmem:[%s174 + $0xc0] sm:$0xff] %v1019
      %1164 = vst [vmem:[%s174 + $0xc8] sm:$0xff] %v1020
      %1165 = vst [vmem:[%s174 + $0xd0] sm:$0xff] %v1021
      %1166 = vst [vmem:[%s174 + $0xd8] sm:$0xff] %v1022
      %1167 = vst [vmem:[%s174 + $0xe0] sm:$0xff] %v1023
      %1168 = vst [vmem:[%s174 + $0xe8] sm:$0xff] %v1024
      %1169 = vst [vmem:[%s174 + $0xf0] sm:$0xff] %v1025
      %1170 = vst [vmem:[%s174 + $0xf8] sm:$0xff] %v1026
      %1171 = vst [vmem:[%s174 + $0x100] sm:$0xff] %v1027
      %1172 = vst [vmem:[%s174 + $0x108] sm:$0xff] %v1028
      %1173 = vst [vmem:[%s174 + $0x110] sm:$0xff] %v1029
      %1174 = vst [vmem:[%s174 + $0x118] sm:$0xff] %v1030
      %1175 = vst [vmem:[%s174 + $0x120] sm:$0xff] %v1031
      %1176 = vst [vmem:[%s174 + $0x128] sm:$0xff] %v1032
      %1177 = vst [vmem:[%s174 + $0x130] sm:$0xff] %v1033
      %1178 = vst [vmem:[%s174 + $0x138] sm:$0xff] %v1034
      %1179 = vst [vmem:[%s174 + $0x140] sm:$0xff] %v1035
      %1180 = vst [vmem:[%s174 + $0x148] sm:$0xff] %v1036
      %1181 = vst [vmem:[%s174 + $0x150] sm:$0xff] %v1037
      %1182 = vst [vmem:[%s174 + $0x158] sm:$0xff] %v1038
      %1183 = vst [vmem:[%s174 + $0x160] sm:$0xff] %v1039
      %1184 = vst [vmem:[%s174 + $0x168] sm:$0xff] %v1040
      %1185 = vst [vmem:[%s174 + $0x170] sm:$0xff] %v1041
      %1186 = vst [vmem:[%s174 + $0x178] sm:$0xff] %v1042
      %1187 = vst [vmem:[%s174 + $0x180] sm:$0xff] %v1043
      %1188 = vst [vmem:[%s174 + $0x188] sm:$0xff] %v1044
      %1189 = vst [vmem:[%s174 + $0x190] sm:$0xff] %v1045
      %1190 = vst [vmem:[%s174 + $0x198] sm:$0xff] %v1046
      %1191 = vst [vmem:[%s174 + $0x1a0] sm:$0xff] %v1047
      %1192 = vst [vmem:[%s174 + $0x1a8] sm:$0xff] %v1048
      %1193 = vst [vmem:[%s174 + $0x1b0] sm:$0xff] %v1049
      %1194 = vst [vmem:[%s174 + $0x1b8] sm:$0xff] %v1050
      %1195 = vst [vmem:[%s174 + $0x1c0] sm:$0xff] %v1051
      %1196 = vst [vmem:[%s174 + $0x1c8] sm:$0xff] %v1052
      %1197 = vst [vmem:[%s174 + $0x1d0] sm:$0xff] %v1053
      %1198 = vst [vmem:[%s174 + $0x1d8] sm:$0xff] %v1054
      %1199 = vst [vmem:[%s174 + $0x1e0] sm:$0xff] %v1055
      %1200 = vst [vmem:[%s174 + $0x1e8] sm:$0xff] %v1056
      %1201 = vst [vmem:[%s174 + $0x1f0] sm:$0xff] %v1057
      %1202 = vst [vmem:[%s174 + $0x1f8] sm:$0xff] %v1058
      %1203 = vst [vmem:[%s174 + $0x200] sm:$0xff] %v1059
      %1204 = vst [vmem:[%s174 + $0x208] sm:$0xff] %v1060
      %1205 = vst [vmem:[%s174 + $0x210] sm:$0xff] %v1061
      %1206 = vst [vmem:[%s174 + $0x218] sm:$0xff] %v1062
      %1207 = vst [vmem:[%s174 + $0x220] sm:$0xff] %v1063
      %1208 = vst [vmem:[%s174 + $0x228] sm:$0xff] %v1064
      %1209 = vst [vmem:[%s174 + $0x230] sm:$0xff] %v1065
      %1210 = vst [vmem:[%s174 + $0x238] sm:$0xff] %v1066
      %1211 = vst [vmem:[%s174 + $0x240] sm:$0xff] %v1067
      %1212 = vst [vmem:[%s174 + $0x248] sm:$0xff] %v1068
      %1213 = vst [vmem:[%s174 + $0x250] sm:$0xff] %v1069
      %1214 = vst [vmem:[%s174 + $0x258] sm:$0xff] %v1070
      %1215 = vst [vmem:[%s174 + $0x260] sm:$0xff] %v1071
      %1216 = vst [vmem:[%s174 + $0x268] sm:$0xff] %v1072
      %1217 = vst [vmem:[%s174 + $0x270] sm:$0xff] %v1073
      %1218 = vst [vmem:[%s174 + $0x278] sm:$0xff] %v1074
      %1219 = vst [vmem:[%s174 + $0x280] sm:$0xff] %v1075
      %1220 = vst [vmem:[%s174 + $0x288] sm:$0xff] %v1076
      %1221 = vst [vmem:[%s174 + $0x290] sm:$0xff] %v1077
      %1222 = vst [vmem:[%s174 + $0x298] sm:$0xff] %v1078
      %1223 = vst [vmem:[%s174 + $0x2a0] sm:$0xff] %v1079
      %1224 = vst [vmem:[%s174 + $0x2a8] sm:$0xff] %v1080
      %1225 = vst [vmem:[%s174 + $0x2b0] sm:$0xff] %v1081
      %1226 = vst [vmem:[%s174 + $0x2b8] sm:$0xff] %v1082
      %1227 = vst [vmem:[%s174 + $0x2c0] sm:$0xff] %v1083
      %1228 = vst [vmem:[%s174 + $0x2c8] sm:$0xff] %v1084
      %1229 = vst [vmem:[%s174 + $0x2d0] sm:$0xff] %v1085
      %1230 = vst [vmem:[%s174 + $0x2d8] sm:$0xff] %v1086
      %1231 = vst [vmem:[%s174 + $0x2e0] sm:$0xff] %v1087
      %1232 = vst [vmem:[%s174 + $0x2e8] sm:$0xff] %v1088
      %1233 = vst [vmem:[%s174 + $0x2f0] sm:$0xff] %v1089
      %1234 = vst [vmem:[%s174 + $0x2f8] sm:$0xff] %v1090
      %1235 = vst [vmem:[%s174 + $0x300] sm:$0xff] %v1091
      %1236 = vst [vmem:[%s174 + $0x308] sm:$0xff] %v1092
      %1237 = vst [vmem:[%s174 + $0x310] sm:$0xff] %v1093
      %1238 = vst [vmem:[%s174 + $0x318] sm:$0xff] %v1094
      %1239 = vst [vmem:[%s174 + $0x320] sm:$0xff] %v1095
      %1240 = vst [vmem:[%s174 + $0x328] sm:$0xff] %v1096
      %1241 = vst [vmem:[%s174 + $0x330] sm:$0xff] %v1097
      %1242 = vst [vmem:[%s174 + $0x338] sm:$0xff] %v1098
      %1243 = vst [vmem:[%s174 + $0x340] sm:$0xff] %v1099
      %1244 = vst [vmem:[%s174 + $0x348] sm:$0xff] %v1100
      %1245 = vst [vmem:[%s174 + $0x350] sm:$0xff] %v1101
      %1246 = vst [vmem:[%s174 + $0x358] sm:$0xff] %v1102
      %1247 = vst [vmem:[%s174 + $0x360] sm:$0xff] %v1103
      %1248 = vst [vmem:[%s174 + $0x368] sm:$0xff] %v1104
      %1249 = vst [vmem:[%s174 + $0x370] sm:$0xff] %v1105
      %1250 = vst [vmem:[%s174 + $0x378] sm:$0xff] %v1106
      %1251 = vst [vmem:[%s174 + $0x380] sm:$0xff] %v1107
      %1252 = vst [vmem:[%s174 + $0x388] sm:$0xff] %v1108
      %1253 = vst [vmem:[%s174 + $0x390] sm:$0xff] %v1109
      %1254 = vst [vmem:[%s174 + $0x398] sm:$0xff] %v1110
      %1255 = vst [vmem:[%s174 + $0x3a0] sm:$0xff] %v1111
      %1256 = vst [vmem:[%s174 + $0x3a8] sm:$0xff] %v1112
      %1257 = vst [vmem:[%s174 + $0x3b0] sm:$0xff] %v1113
      %1258 = vst [vmem:[%s174 + $0x3b8] sm:$0xff] %v1114
      %1259 = vst [vmem:[%s174 + $0x3c0] sm:$0xff] %v1115
      %1260 = vst [vmem:[%s174 + $0x3c8] sm:$0xff] %v1116
      %1261 = vst [vmem:[%s174 + $0x3d0] sm:$0xff] %v1117
      %1262 = vst [vmem:[%s174 + $0x3d8] sm:$0xff] %v1118
      %1263 = vst [vmem:[%s174 + $0x3e0] sm:$0xff] %v1119
      %1264 = vst [vmem:[%s174 + $0x3e8] sm:$0xff] %v1120
      %1265 = vst [vmem:[%s174 + $0x3f0] sm:$0xff] %v1121
      %1266 = vst [vmem:[%s174 + $0x3f8] sm:$0xff] %v1122
      %1267 = vst [vmem:[%s174 + $0x400] sm:$0xff] %v1123
      %1268 = vst [vmem:[%s174 + $0x408] sm:$0xff] %v1124
      %1269 = vst [vmem:[%s174 + $0x410] sm:$0xff] %v1125
      %1270 = vst [vmem:[%s174 + $0x418] sm:$0xff] %v1126
      %1271 = vst [vmem:[%s174 + $0x420] sm:$0xff] %v1127
      %1272 = vst [vmem:[%s174 + $0x428] sm:$0xff] %v1128
      %1273 = vst [vmem:[%s174 + $0x430] sm:$0xff] %v1129
      %1274 = vst [vmem:[%s174 + $0x438] sm:$0xff] %v1130
      %1275 = vst [vmem:[%s174 + $0x440] sm:$0xff] %v1131
      %1276 = vst [vmem:[%s174 + $0x448] sm:$0xff] %v1132
      %1277 = vst [vmem:[%s174 + $0x450] sm:$0xff] %v1133
      %1278 = vst [vmem:[%s174 + $0x458] sm:$0xff] %v1134
      %1279 = vst [vmem:[%s174 + $0x460] sm:$0xff] %v1135
      %1280 = vst [vmem:[%s174 + $0x468] sm:$0xff] %v1136
      %1281 = vst [vmem:[%s174 + $0x470] sm:$0xff] %v1137
      %1282 = vst [vmem:[%s174 + $0x478] sm:$0xff] %v1138
      %s1283 = smul.u32 72, %s14
      %p1284 = scmp.lt.s32.totalorder %s1283, 143
      %s1285 = scalar_select %p1284, %s1283, 143
      %s1286 = smul.addr %s1285, 2
      %s1287 = smul.addr %s1286, 8
      %s1288 = scalar_lea.vmem %s3, %s1287
      // Predicated region
      $region33: #{polarnet_forward.6} parent=31 // pred_check
        %p1289 = pneg %p100
      $region34: #{polarnet_forward.6} parent=31 // pred_check_branch
        %1291 = sbr.rel (%p1289) target = $region36
      $region35: #{polarnet_forward.6} parent=31 // pred_region
        %s1292 = smul.u32 72, %s14
      $region36: #{polarnet_forward.6} parent=31 // pred_fallthru
        _
    $region32: #{polarnet_forward.6} parent=5 // pred_fallthru
      _
    %p1293 = scmp.le.s32.totalorder 2, %s9
    // Predicated region
    $region37: #{polarnet_forward.6} parent=5 // pred_check
      %p1294 = pneg %p1293
    $region38: #{polarnet_forward.6} parent=5 // pred_check_branch
      %1296 = sbr.rel (%p1294) target = $region40
    $region39: #{polarnet_forward.6} parent=5 // pred_region
      %s1297 = ssub.s32 %s9, 2
      // Predicated region
      $region41: #{polarnet_forward.6} parent=39 // pred_check
        %p1298 = pneg %p106
      $region42: #{polarnet_forward.6} parent=39 // pred_check_branch
        %1300 = sbr.rel (%p1298) target = $region44
      $region43: #{polarnet_forward.6} parent=39 // pred_region
        %s1301 = smul.u32 72, %s15
        %p1302 = scmp.lt.s32.totalorder %s1301, 143
        %s1303 = scalar_select %p1302, %s1301, 143
        %s1304 = smul.addr %s1303, 2
        %s1305 = smul.addr %s1304, 8
        %s1306 = scalar_lea.vmem %s3, %s1305
      $region44: #{polarnet_forward.6} parent=39 // pred_fallthru
        _
    $region40: #{polarnet_forward.6} parent=5 // pred_fallthru
      _
  $region6: #{polarnet_forward.6} parent=0 // loop_footer
    %s13 = sadd.s32 1, %s9
  $region7: #{polarnet_forward.6} parent=0 // loop_footer_branch
    %8 = sbr.rel target = $region3
  $region8: #{polarnet_forward.6} parent=0 // loop_exit
    _

// kernel: polarnet_forward.7
$region0: #{polarnet_forward.7}
  #allocation0 [shape = 'u32[]', space=smem, size = 0x4, offset = 0x4, fixed_abs, tag = 'smem constant byte address 0x4 - core index']
  #allocation1 [shape = 'u32[144,128]{1,0:T(1,128)}', space=vmem, size = 0x12000, scoped, tag = 'internal scratch']
  %s0 = inlined_call_operand.vmem [shape: f32[4,2880], index: 0, kind: input, shape index: {}]
  %s1 = inlined_call_operand.vmem [shape: f32[4,2880], index: 1, kind: input, shape index: {}]
  %s2 = inlined_call_operand.vmem [shape: f32[1,2880], index: 2, kind: output, shape index: {0}]
  %s3 = inlined_call_operand.vmem [shape: f32[1,2880], index: 3, kind: output, shape index: {1}]
  %4 = xla_tuple %s2, %s3
  %s5 = sld [smem:[#allocation0]]
  $region26: #{polarnet_forward.7} parent=0
    _
  %s7 = ssub.s32 1, %s5
  %s8 = scalar_select 0, %s7, %s5
  // Predicated region
  $region2: #{polarnet_forward.7} parent=0 // pred_check
    _
  $region3: #{polarnet_forward.7} parent=0 // pred_check_branch
    %10 = sbr.rel (0) target = $region5
  $region4: #{polarnet_forward.7} parent=0 // pred_region
    _
  $region5: #{polarnet_forward.7} parent=0 // pred_fallthru
    _
  // Predicated region
  $region6: #{polarnet_forward.7} parent=0 // pred_check
    _
  $region7: #{polarnet_forward.7} parent=0 // pred_check_branch
    %12 = sbr.rel (0) target = $region9
  $region8: #{polarnet_forward.7} parent=0 // pred_region
    _
  $region9: #{polarnet_forward.7} parent=0 // pred_fallthru
    _
  %v13 = vld [vmem:[%s0] sm:$0xff]
  %v14 = vld [vmem:[%s0 + $0x8] sm:$0xff]
  %v15 = vld [vmem:[%s0 + $0x10] sm:$0xff]
  %v16 = vld [vmem:[%s0 + $0x18] sm:$0xff]
  %v17 = vld [vmem:[%s0 + $0x20] sm:$0xff]
  %v18 = vld [vmem:[%s0 + $0x28] sm:$0xff]
  %v19 = vld [vmem:[%s0 + $0x30] sm:$0xff]
  %v20 = vld [vmem:[%s0 + $0x38] sm:$0xff]
  %v21 = vld [vmem:[%s0 + $0x40] sm:$0xff]
  %v22 = vld [vmem:[%s0 + $0x48] sm:$0xff]
  %v23 = vld [vmem:[%s0 + $0x50] sm:$0xff]
  %v24 = vld [vmem:[%s0 + $0x58] sm:$0xf]
  %v25 = vld [vmem:[%s1] sm:$0xff]
  %v26 = vld [vmem:[%s1 + $0x8] sm:$0xff]
  %v27 = vld [vmem:[%s1 + $0x10] sm:$0xff]
  %v28 = vld [vmem:[%s1 + $0x18] sm:$0xff]
  %v29 = vld [vmem:[%s1 + $0x20] sm:$0xff]
  %v30 = vld [vmem:[%s1 + $0x28] sm:$0xff]
  %v31 = vld [vmem:[%s1 + $0x30] sm:$0xff]
  %v32 = vld [vmem:[%s1 + $0x38] sm:$0xff]
  %v33 = vld [vmem:[%s1 + $0x40] sm:$0xff]
  %v34 = vld [vmem:[%s1 + $0x48] sm:$0xff]
  %v35 = vld [vmem:[%s1 + $0x50] sm:$0xff]
  %v36 = vld [vmem:[%s1 + $0x58] sm:$0xf]
  %v37 = vmul.f32 %v13, %v13
  %v38 = vmul.f32 %v14, %v14
  %v39 = vmul.f32 %v15, %v15
  %v40 = vmul.f32 %v16, %v16
  %v41 = vmul.f32 %v17, %v17
  %v42 = vmul.f32 %v18, %v18
  %v43 = vmul.f32 %v19, %v19
  %v44 = vmul.f32 %v20, %v20
  %v45 = vmul.f32 %v21, %v21
  %v46 = vmul.f32 %v22, %v22
  %v47 = vmul.f32 %v23, %v23
  %v48 = vmul.f32 %v24, %v24
  %v49 = vmul.f32 %v25, %v25
  %v50 = vmul.f32 %v26, %v26
  %v51 = vmul.f32 %v27, %v27
  %v52 = vmul.f32 %v28, %v28
  %v53 = vmul.f32 %v29, %v29
  %v54 = vmul.f32 %v30, %v30
  %v55 = vmul.f32 %v31, %v31
  %v56 = vmul.f32 %v32, %v32
  %v57 = vmul.f32 %v33, %v33
  %v58 = vmul.f32 %v34, %v34
  %v59 = vmul.f32 %v35, %v35
  %v60 = vmul.f32 %v36, %v36
  %v61 = vadd.f32 %v37, %v49
  %v62 = vadd.f32 %v38, %v50
  %v63 = vadd.f32 %v39, %v51
  %v64 = vadd.f32 %v40, %v52
  %v65 = vadd.f32 %v41, %v53
  %v66 = vadd.f32 %v42, %v54
  %v67 = vadd.f32 %v43, %v55
  %v68 = vadd.f32 %v44, %v56
  %v69 = vadd.f32 %v45, %v57
  %v70 = vadd.f32 %v46, %v58
  %v71 = vadd.f32 %v47, %v59
  %v72 = vadd.f32 %v48, %v60
  %v85 = vrot.slane %v61, 7
  %v86 = vrot.slane %v62, 7
  %v87 = vrot.slane %v63, 7
  %v88 = vrot.slane %v64, 7
  %v89 = vrot.slane %v65, 7
  %v90 = vrot.slane %v66, 7
  %v91 = vrot.slane %v67, 7
  %v92 = vrot.slane %v68, 7
  %v93 = vrot.slane %v69, 7
  %v94 = vrot.slane %v70, 7
  %v95 = vrot.slane %v71, 7
  %v96 = vrot.slane %v72, 7
  %vm109 = vcmp.gt.f32.partialorder %v61, %v85
  %vm110 = vcmp.gt.f32.partialorder %v62, %v86
  %vm111 = vcmp.gt.f32.partialorder %v63, %v87
  %vm112 = vcmp.gt.f32.partialorder %v64, %v88
  %vm113 = vcmp.gt.f32.partialorder %v65, %v89
  %vm114 = vcmp.gt.f32.partialorder %v66, %v90
  %vm115 = vcmp.gt.f32.partialorder %v67, %v91
  %vm116 = vcmp.gt.f32.partialorder %v68, %v92
  %vm117 = vcmp.gt.f32.partialorder %v69, %v93
  %vm118 = vcmp.gt.f32.partialorder %v70, %v94
  %vm119 = vcmp.gt.f32.partialorder %v71, %v95
  %vm120 = vcmp.gt.f32.partialorder %v72, %v96
  %v121 = vsel %vm109, %v61, %v85
  %v122 = vsel %vm110, %v62, %v86
  %v123 = vsel %vm111, %v63, %v87
  %v124 = vsel %vm112, %v64, %v88
  %v125 = vsel %vm113, %v65, %v89
  %v126 = vsel %vm114, %v66, %v90
  %v127 = vsel %vm115, %v67, %v91
  %v128 = vsel %vm116, %v68, %v92
  %v129 = vsel %vm117, %v69, %v93
  %v130 = vsel %vm118, %v70, %v94
  %v131 = vsel %vm119, %v71, %v95
  %v132 = vsel %vm120, %v72, %v96
  %v145 = vrot.slane %v13, 7
  %v146 = vrot.slane %v14, 7
  %v147 = vrot.slane %v15, 7
  %v148 = vrot.slane %v16, 7
  %v149 = vrot.slane %v17, 7
  %v150 = vrot.slane %v18, 7
  %v151 = vrot.slane %v19, 7
  %v152 = vrot.slane %v20, 7
  %v153 = vrot.slane %v21, 7
  %v154 = vrot.slane %v22, 7
  %v155 = vrot.slane %v23, 7
  %v156 = vrot.slane %v24, 7
  %v169 = vsel %vm109, %v13, %v145
  %v170 = vsel %vm110, %v14, %v146
  %v171 = vsel %vm111, %v15, %v147
  %v172 = vsel %vm112, %v16, %v148
  %v173 = vsel %vm113, %v17, %v149
  %v174 = vsel %vm114, %v18, %v150
  %v175 = vsel %vm115, %v19, %v151
  %v176 = vsel %vm116, %v20, %v152
  %v177 = vsel %vm117, %v21, %v153
  %v178 = vsel %vm118, %v22, %v154
  %v179 = vsel %vm119, %v23, %v155
  %v180 = vsel %vm120, %v24, %v156
  %v193 = vrot.slane %v25, 7
  %v194 = vrot.slane %v26, 7
  %v195 = vrot.slane %v27, 7
  %v196 = vrot.slane %v28, 7
  %v197 = vrot.slane %v29, 7
  %v198 = vrot.slane %v30, 7
  %v199 = vrot.slane %v31, 7
  %v200 = vrot.slane %v32, 7
  %v201 = vrot.slane %v33, 7
  %v202 = vrot.slane %v34, 7
  %v203 = vrot.slane %v35, 7
  %v204 = vrot.slane %v36, 7
  %v217 = vsel %vm109, %v25, %v193
  %v218 = vsel %vm110, %v26, %v194
  %v219 = vsel %vm111, %v27, %v195
  %v220 = vsel %vm112, %v28, %v196
  %v221 = vsel %vm113, %v29, %v197
  %v222 = vsel %vm114, %v30, %v198
  %v223 = vsel %vm115, %v31, %v199
  %v224 = vsel %vm116, %v32, %v200
  %v225 = vsel %vm117, %v33, %v201
  %v226 = vsel %vm118, %v34, %v202
  %v227 = vsel %vm119, %v35, %v203
  %v228 = vsel %vm120, %v36, %v204
  %v241 = vrot.slane %v121, 7
  %v242 = vrot.slane %v122, 7
  %v243 = vrot.slane %v123, 7
  %v244 = vrot.slane %v124, 7
  %v245 = vrot.slane %v125, 7
  %v246 = vrot.slane %v126, 7
  %v247 = vrot.slane %v127, 7
  %v248 = vrot.slane %v128, 7
  %v249 = vrot.slane %v129, 7
  %v250 = vrot.slane %v130, 7
  %v251 = vrot.slane %v131, 7
  %v252 = vrot.slane %v132, 7
  %vm265 = vcmp.gt.f32.partialorder %v61, %v241
  %vm266 = vcmp.gt.f32.partialorder %v62, %v242
  %vm267 = vcmp.gt.f32.partialorder %v63, %v243
  %vm268 = vcmp.gt.f32.partialorder %v64, %v244
  %vm269 = vcmp.gt.f32.partialorder %v65, %v245
  %vm270 = vcmp.gt.f32.partialorder %v66, %v246
  %vm271 = vcmp.gt.f32.partialorder %v67, %v247
  %vm272 = vcmp.gt.f32.partialorder %v68, %v248
  %vm273 = vcmp.gt.f32.partialorder %v69, %v249
  %vm274 = vcmp.gt.f32.partialorder %v70, %v250
  %vm275 = vcmp.gt.f32.partialorder %v71, %v251
  %vm276 = vcmp.gt.f32.partialorder %v72, %v252
  %v277 = vsel %vm265, %v61, %v241
  %v278 = vsel %vm266, %v62, %v242
  %v279 = vsel %vm267, %v63, %v243
  %v280 = vsel %vm268, %v64, %v244
  %v281 = vsel %vm269, %v65, %v245
  %v282 = vsel %vm270, %v66, %v246
  %v283 = vsel %vm271, %v67, %v247
  %v284 = vsel %vm272, %v68, %v248
  %v285 = vsel %vm273, %v69, %v249
  %v286 = vsel %vm274, %v70, %v250
  %v287 = vsel %vm275, %v71, %v251
  %v288 = vsel %vm276, %v72, %v252
  %v301 = vrot.slane %v169, 7
  %v302 = vrot.slane %v170, 7
  %v303 = vrot.slane %v171, 7
  %v304 = vrot.slane %v172, 7
  %v305 = vrot.slane %v173, 7
  %v306 = vrot.slane %v174, 7
  %v307 = vrot.slane %v175, 7
  %v308 = vrot.slane %v176, 7
  %v309 = vrot.slane %v177, 7
  %v310 = vrot.slane %v178, 7
  %v311 = vrot.slane %v179, 7
  %v312 = vrot.slane %v180, 7
  %v325 = vsel %vm265, %v13, %v301
  %v326 = vsel %vm266, %v14, %v302
  %v327 = vsel %vm267, %v15, %v303
  %v328 = vsel %vm268, %v16, %v304
  %v329 = vsel %vm269, %v17, %v305
  %v330 = vsel %vm270, %v18, %v306
  %v331 = vsel %vm271, %v19, %v307
  %v332 = vsel %vm272, %v20, %v308
  %v333 = vsel %vm273, %v21, %v309
  %v334 = vsel %vm274, %v22, %v310
  %v335 = vsel %vm275, %v23, %v311
  %v336 = vsel %vm276, %v24, %v312
  %v349 = vrot.slane %v217, 7
  %v350 = vrot.slane %v218, 7
  %v351 = vrot.slane %v219, 7
  %v352 = vrot.slane %v220, 7
  %v353 = vrot.slane %v221, 7
  %v354 = vrot.slane %v222, 7
  %v355 = vrot.slane %v223, 7
  %v356 = vrot.slane %v224, 7
  %v357 = vrot.slane %v225, 7
  %v358 = vrot.slane %v226, 7
  %v359 = vrot.slane %v227, 7
  %v360 = vrot.slane %v228, 7
  %v373 = vsel %vm265, %v25, %v349
  %v374 = vsel %vm266, %v26, %v350
  %v375 = vsel %vm267, %v27, %v351
  %v376 = vsel %vm268, %v28, %v352
  %v377 = vsel %vm269, %v29, %v353
  %v378 = vsel %vm270, %v30, %v354
  %v379 = vsel %vm271, %v31, %v355
  %v380 = vsel %vm272, %v32, %v356
  %v381 = vsel %vm273, %v33, %v357
  %v382 = vsel %vm274, %v34, %v358
  %v383 = vsel %vm275, %v35, %v359
  %v384 = vsel %vm276, %v36, %v360
  %v397 = vrot.slane %v277, 7
  %v398 = vrot.slane %v278, 7
  %v399 = vrot.slane %v279, 7
  %v400 = vrot.slane %v280, 7
  %v401 = vrot.slane %v281, 7
  %v402 = vrot.slane %v282, 7
  %v403 = vrot.slane %v283, 7
  %v404 = vrot.slane %v284, 7
  %v405 = vrot.slane %v285, 7
  %v406 = vrot.slane %v286, 7
  %v407 = vrot.slane %v287, 7
  %v408 = vrot.slane %v288, 7
  %vm421 = vcmp.gt.f32.partialorder %v61, %v397
  %vm422 = vcmp.gt.f32.partialorder %v62, %v398
  %vm423 = vcmp.gt.f32.partialorder %v63, %v399
  %vm424 = vcmp.gt.f32.partialorder %v64, %v400
  %vm425 = vcmp.gt.f32.partialorder %v65, %v401
  %vm426 = vcmp.gt.f32.partialorder %v66, %v402
  %vm427 = vcmp.gt.f32.partialorder %v67, %v403
  %vm428 = vcmp.gt.f32.partialorder %v68, %v404
  %vm429 = vcmp.gt.f32.partialorder %v69, %v405
  %vm430 = vcmp.gt.f32.partialorder %v70, %v406
  %vm431 = vcmp.gt.f32.partialorder %v71, %v407
  %vm432 = vcmp.gt.f32.partialorder %v72, %v408
  %v445 = vrot.slane %v325, 7
  %v446 = vrot.slane %v326, 7
  %v447 = vrot.slane %v327, 7
  %v448 = vrot.slane %v328, 7
  %v449 = vrot.slane %v329, 7
  %v450 = vrot.slane %v330, 7
  %v451 = vrot.slane %v331, 7
  %v452 = vrot.slane %v332, 7
  %v453 = vrot.slane %v333, 7
  %v454 = vrot.slane %v334, 7
  %v455 = vrot.slane %v335, 7
  %v456 = vrot.slane %v336, 7
  %v469 = vsel %vm421, %v13, %v445
  %v470 = vsel %vm422, %v14, %v446
  %v471 = vsel %vm423, %v15, %v447
  %v472 = vsel %vm424, %v16, %v448
  %v473 = vsel %vm425, %v17, %v449
  %v474 = vsel %vm426, %v18, %v450
  %v475 = vsel %vm427, %v19, %v451
  %v476 = vsel %vm428, %v20, %v452
  %v477 = vsel %vm429, %v21, %v453
  %v478 = vsel %vm430, %v22, %v454
  %v479 = vsel %vm431, %v23, %v455
  %v480 = vsel %vm432, %v24, %v456
  %v493 = vrot.slane %v373, 7
  %v494 = vrot.slane %v374, 7
  %v495 = vrot.slane %v375, 7
  %v496 = vrot.slane %v376, 7
  %v497 = vrot.slane %v377, 7
  %v498 = vrot.slane %v378, 7
  %v499 = vrot.slane %v379, 7
  %v500 = vrot.slane %v380, 7
  %v501 = vrot.slane %v381, 7
  %v502 = vrot.slane %v382, 7
  %v503 = vrot.slane %v383, 7
  %v504 = vrot.slane %v384, 7
  %v517 = vsel %vm421, %v25, %v493
  %v518 = vsel %vm422, %v26, %v494
  %v519 = vsel %vm423, %v27, %v495
  %v520 = vsel %vm424, %v28, %v496
  %v521 = vsel %vm425, %v29, %v497
  %v522 = vsel %vm426, %v30, %v498
  %v523 = vsel %vm427, %v31, %v499
  %v524 = vsel %vm428, %v32, %v500
  %v525 = vsel %vm429, %v33, %v501
  %v526 = vsel %vm430, %v34, %v502
  %v527 = vsel %vm431, %v35, %v503
  %v528 = vsel %vm432, %v36, %v504
  %v542 = vunpack.c.l.s4 1966171168
  %v543 = vunpack.c.0.s8 %v542
  %v544 = vlaneseq
  %v545 = vshrl.u32 %v544, 7
  %v546 = vsub.s32 %v543, %v545
  %v547 = vrot.slane %v469, %v546
  %v549 = vunpack.c.l.s4 1966171168
  %v550 = vunpack.c.0.s8 %v549
  %v551 = vlaneseq
  %v552 = vshrl.u32 %v551, 7
  %v553 = vsub.s32 %v550, %v552
  %v554 = vrot.slane %v470, %v553
  %v556 = vunpack.c.l.s4 1966171168
  %v557 = vunpack.c.0.s8 %v556
  %v558 = vlaneseq
  %v559 = vshrl.u32 %v558, 7
  %v560 = vsub.s32 %v557, %v559
  %v561 = vrot.slane %v471, %v560
  %v563 = vunpack.c.l.s4 1966171168
  %v564 = vunpack.c.0.s8 %v563
  %v565 = vlaneseq
  %v566 = vshrl.u32 %v565, 7
  %v567 = vsub.s32 %v564, %v566
  %v568 = vrot.slane %v472, %v567
  %v569 = vcombine.high %v547, %v554
  %v570 = vcombine.high %v561, %v568
  %v572 = vunpack.c.l.s4 1966171168
  %v573 = vunpack.c.0.s8 %v572
  %v574 = vlaneseq
  %v575 = vshrl.u32 %v574, 7
  %v576 = vsub.s32 %v573, %v575
  %v577 = vrot.slane %v569, %v576
  %v579 = vunpack.c.l.s4 1966171168
  %v580 = vunpack.c.0.s8 %v579
  %v581 = vlaneseq
  %v582 = vshrl.u32 %v581, 7
  %v583 = vsub.s32 %v580, %v582
  %v584 = vrot.slane %v570, %v583
  %v585 = vcombine.high %v577, %v584
  %v587 = vunpack.c.l.s4 1966171168
  %v588 = vunpack.c.0.s8 %v587
  %v589 = vlaneseq
  %v590 = vshrl.u32 %v589, 7
  %v591 = vsub.s32 %v588, %v590
  %v592 = vrot.slane %v473, %v591
  %v594 = vunpack.c.l.s4 1966171168
  %v595 = vunpack.c.0.s8 %v594
  %v596 = vlaneseq
  %v597 = vshrl.u32 %v596, 7
  %v598 = vsub.s32 %v595, %v597
  %v599 = vrot.slane %v474, %v598
  %v601 = vunpack.c.l.s4 1966171168
  %v602 = vunpack.c.0.s8 %v601
  %v603 = vlaneseq
  %v604 = vshrl.u32 %v603, 7
  %v605 = vsub.s32 %v602, %v604
  %v606 = vrot.slane %v475, %v605
  %v608 = vunpack.c.l.s4 1966171168
  %v609 = vunpack.c.0.s8 %v608
  %v610 = vlaneseq
  %v611 = vshrl.u32 %v610, 7
  %v612 = vsub.s32 %v609, %v611
  %v613 = vrot.slane %v476, %v612
  %v614 = vcombine.high %v592, %v599
  %v615 = vcombine.high %v606, %v613
  %v617 = vunpack.c.l.s4 1966171168
  %v618 = vunpack.c.0.s8 %v617
  %v619 = vlaneseq
  %v620 = vshrl.u32 %v619, 7
  %v621 = vsub.s32 %v618, %v620
  %v622 = vrot.slane %v614, %v621
  %v624 = vunpack.c.l.s4 1966171168
  %v625 = vunpack.c.0.s8 %v624
  %v626 = vlaneseq
  %v627 = vshrl.u32 %v626, 7
  %v628 = vsub.s32 %v625, %v627
  %v629 = vrot.slane %v615, %v628
  %v630 = vcombine.high %v622, %v629
  %v632 = vunpack.c.l.s4 1966171168
  %v633 = vunpack.c.0.s8 %v632
  %v634 = vlaneseq
  %v635 = vshrl.u32 %v634, 7
  %v636 = vsub.s32 %v633, %v635
  %v637 = vrot.slane %v477, %v636
  %v639 = vunpack.c.l.s4 1966171168
  %v640 = vunpack.c.0.s8 %v639
  %v641 = vlaneseq
  %v642 = vshrl.u32 %v641, 7
  %v643 = vsub.s32 %v640, %v642
  %v644 = vrot.slane %v478, %v643
  %v646 = vunpack.c.l.s4 1966171168
  %v647 = vunpack.c.0.s8 %v646
  %v648 = vlaneseq
  %v649 = vshrl.u32 %v648, 7
  %v650 = vsub.s32 %v647, %v649
  %v651 = vrot.slane %v479, %v650
  %v653 = vunpack.c.l.s4 1966171168
  %v654 = vunpack.c.0.s8 %v653
  %v655 = vlaneseq
  %v656 = vshrl.u32 %v655, 7
  %v657 = vsub.s32 %v654, %v656
  %v658 = vrot.slane %v480, %v657
  %v659 = vcombine.high %v637, %v644
  %v660 = vcombine.high %v651, %v658
  %v662 = vunpack.c.l.s4 1966171168
  %v663 = vunpack.c.0.s8 %v662
  %v664 = vlaneseq
  %v665 = vshrl.u32 %v664, 7
  %v666 = vsub.s32 %v663, %v665
  %v667 = vrot.slane %v659, %v666
  %v669 = vunpack.c.l.s4 1966171168
  %v670 = vunpack.c.0.s8 %v669
  %v671 = vlaneseq
  %v672 = vshrl.u32 %v671, 7
  %v673 = vsub.s32 %v670, %v672
  %v674 = vrot.slane %v660, %v673
  %v675 = vcombine.high %v667, %v674
  %679 = vst [vmem:[%s2] sm:$0xff] %v585
  %680 = vst [vmem:[%s2 + $0x8] sm:$0xff] %v630
  %v681 = vlaneseq
  %vm682 = vcmp.ge.s32.totalorder %v681, 0
  %vm683 = vcmp.lt.s32.totalorder %v681, 832
  %vm684 = vmand %vm682, %vm683
  %685 = vst.msk [vmem:[%s2 + $0x10] sm:$0x7f] %vm684, %v675
  %v699 = vunpack.c.l.s4 1966171168
  %v700 = vunpack.c.0.s8 %v699
  %v701 = vlaneseq
  %v702 = vshrl.u32 %v701, 7
  %v703 = vsub.s32 %v700, %v702
  %v704 = vrot.slane %v517, %v703
  %v706 = vunpack.c.l.s4 1966171168
  %v707 = vunpack.c.0.s8 %v706
  %v708 = vlaneseq
  %v709 = vshrl.u32 %v708, 7
  %v710 = vsub.s32 %v707, %v709
  %v711 = vrot.slane %v518, %v710
  %v713 = vunpack.c.l.s4 1966171168
  %v714 = vunpack.c.0.s8 %v713
  %v715 = vlaneseq
  %v716 = vshrl.u32 %v715, 7
  %v717 = vsub.s32 %v714, %v716
  %v718 = vrot.slane %v519, %v717
  %v720 = vunpack.c.l.s4 1966171168
  %v721 = vunpack.c.0.s8 %v720
  %v722 = vlaneseq
  %v723 = vshrl.u32 %v722, 7
  %v724 = vsub.s32 %v721, %v723
  %v725 = vrot.slane %v520, %v724
  %v726 = vcombine.high %v704, %v711
  %v727 = vcombine.high %v718, %v725
  %v729 = vunpack.c.l.s4 1966171168
  %v730 = vunpack.c.0.s8 %v729
  %v731 = vlaneseq
  %v732 = vshrl.u32 %v731, 7
  %v733 = vsub.s32 %v730, %v732
  %v734 = vrot.slane %v726, %v733
  %v736 = vunpack.c.l.s4 1966171168
  %v737 = vunpack.c.0.s8 %v736
  %v738 = vlaneseq
  %v739 = vshrl.u32 %v738, 7
  %v740 = vsub.s32 %v737, %v739
  %v741 = vrot.slane %v727, %v740
  %v742 = vcombine.high %v734, %v741
  %v744 = vunpack.c.l.s4 1966171168
  %v745 = vunpack.c.0.s8 %v744
  %v746 = vlaneseq
  %v747 = vshrl.u32 %v746, 7
  %v748 = vsub.s32 %v745, %v747
  %v749 = vrot.slane %v521, %v748
  %v751 = vunpack.c.l.s4 1966171168
  %v752 = vunpack.c.0.s8 %v751
  %v753 = vlaneseq
  %v754 = vshrl.u32 %v753, 7
  %v755 = vsub.s32 %v752, %v754
  %v756 = vrot.slane %v522, %v755
  %v758 = vunpack.c.l.s4 1966171168
  %v759 = vunpack.c.0.s8 %v758
  %v760 = vlaneseq
  %v761 = vshrl.u32 %v760, 7
  %v762 = vsub.s32 %v759, %v761
  %v763 = vrot.slane %v523, %v762
  %v765 = vunpack.c.l.s4 1966171168
  %v766 = vunpack.c.0.s8 %v765
  %v767 = vlaneseq
  %v768 = vshrl.u32 %v767, 7
  %v769 = vsub.s32 %v766, %v768
  %v770 = vrot.slane %v524, %v769
  %v771 = vcombine.high %v749, %v756
  %v772 = vcombine.high %v763, %v770
  %v774 = vunpack.c.l.s4 1966171168
  %v775 = vunpack.c.0.s8 %v774
  %v776 = vlaneseq
  %v777 = vshrl.u32 %v776, 7
  %v778 = vsub.s32 %v775, %v777
  %v779 = vrot.slane %v771, %v778
  %v781 = vunpack.c.l.s4 1966171168
  %v782 = vunpack.c.0.s8 %v781
  %v783 = vlaneseq
  %v784 = vshrl.u32 %v783, 7
  %v785 = vsub.s32 %v782, %v784
  %v786 = vrot.slane %v772, %v785
  %v787 = vcombine.high %v779, %v786
  %v789 = vunpack.c.l.s4 1966171168
  %v790 = vunpack.c.0.s8 %v789
  %v791 = vlaneseq
  %v792 = vshrl.u32 %v791, 7
  %v793 = vsub.s32 %v790, %v792
  %v794 = vrot.slane %v525, %v793
  %v796 = vunpack.c.l.s4 1966171168
  %v797 = vunpack.c.0.s8 %v796
  %v798 = vlaneseq
  %v799 = vshrl.u32 %v798, 7
  %v800 = vsub.s32 %v797, %v799
  %v801 = vrot.slane %v526, %v800
  %v803 = vunpack.c.l.s4 1966171168
  %v804 = vunpack.c.0.s8 %v803
  %v805 = vlaneseq
  %v806 = vshrl.u32 %v805, 7
  %v807 = vsub.s32 %v804, %v806
  %v808 = vrot.slane %v527, %v807
  %v810 = vunpack.c.l.s4 1966171168
  %v811 = vunpack.c.0.s8 %v810
  %v812 = vlaneseq
  %v813 = vshrl.u32 %v812, 7
  %v814 = vsub.s32 %v811, %v813
  %v815 = vrot.slane %v528, %v814
  %v816 = vcombine.high %v794, %v801
  %v817 = vcombine.high %v808, %v815
  %v819 = vunpack.c.l.s4 1966171168
  %v820 = vunpack.c.0.s8 %v819
  %v821 = vlaneseq
  %v822 = vshrl.u32 %v821, 7
  %v823 = vsub.s32 %v820, %v822
  %v824 = vrot.slane %v816, %v823
  %v826 = vunpack.c.l.s4 1966171168
  %v827 = vunpack.c.0.s8 %v826
  %v828 = vlaneseq
  %v829 = vshrl.u32 %v828, 7
  %v830 = vsub.s32 %v827, %v829
  %v831 = vrot.slane %v817, %v830
  %v832 = vcombine.high %v824, %v831
  %836 = vst [vmem:[%s3] sm:$0xff] %v742
  %837 = vst [vmem:[%s3 + $0x8] sm:$0xff] %v787
  %838 = vst.msk [vmem:[%s3 + $0x10] sm:$0x7f] %vm684, %v832
  // Predicated region
  $region10: #{polarnet_forward.7} parent=0 // pred_check
    _
  $region11: #{polarnet_forward.7} parent=0 // pred_check_branch
    %840 = sbr.rel (0) target = $region13
  $region12: #{polarnet_forward.7} parent=0 // pred_region
    _
  $region13: #{polarnet_forward.7} parent=0 // pred_fallthru
    _
  // Predicated region
  $region14: #{polarnet_forward.7} parent=0 // pred_check
    _
  $region15: #{polarnet_forward.7} parent=0 // pred_check_branch
    %842 = sbr.rel (0) target = $region17
  $region16: #{polarnet_forward.7} parent=0 // pred_region
    _
  $region17: #{polarnet_forward.7} parent=0 // pred_fallthru
    _
  // Predicated region
  $region18: #{polarnet_forward.7} parent=0 // pred_check
    _
  $region19: #{polarnet_forward.7} parent=0 // pred_check_branch
    %844 = sbr.rel (0) target = $region21
  $region20: #{polarnet_forward.7} parent=0 // pred_region
    _
  $region21: #{polarnet_forward.7} parent=0 // pred_fallthru
    _
  // Predicated region
  $region22: #{polarnet_forward.7} parent=0 // pred_check
    _
  $region23: #{polarnet_forward.7} parent=0 // pred_check_branch
    %846 = sbr.rel (0) target = $region25
  $region24: #{polarnet_forward.7} parent=0 // pred_region
    _
  $region25: #{polarnet_forward.7} parent=0 // pred_fallthru
    _

// kernel: polarnet_forward.8
$region0: #{polarnet_forward.8}
  #allocation0 [shape = 'u32[]', space=smem, size = 0x4, offset = 0x4, fixed_abs, tag = 'smem constant byte address 0x4 - core index']
  #allocation1 [shape = 'u32[144,128]{1,0:T(1,128)}', space=vmem, size = 0x12000, scoped, tag = 'internal scratch']
  %s0 = inlined_call_operand.vmem [shape: f32[128,500], index: 0, kind: input, shape index: {}]
  %s1 = inlined_call_operand.vmem [shape: f32[500,256], index: 1, kind: input, shape index: {}]
  %s2 = inlined_call_operand.vmem [shape: f32[1,256], index: 2, kind: input, shape index: {}]
  %s3 = inlined_call_operand.vmem [shape: f32[128,256], index: 3, kind: output, shape index: {}]
  %s4 = sld [smem:[#allocation0]]
  $region22: #{polarnet_forward.8} parent=0
    _
  %s6 = ssub.s32 1, %s4
  %s7 = scalar_select 0, %s6, %s4
  // Predicated region
  $region2: #{polarnet_forward.8} parent=0 // pred_check
    _
  $region3: #{polarnet_forward.8} parent=0 // pred_check_branch
    %9 = sbr.rel (0) target = $region5
  $region4: #{polarnet_forward.8} parent=0 // pred_region
    _
  $region5: #{polarnet_forward.8} parent=0 // pred_fallthru
    _
  // Predicated region
  $region6: #{polarnet_forward.8} parent=0 // pred_check
    _
  $region7: #{polarnet_forward.8} parent=0 // pred_check_branch
    %11 = sbr.rel (0) target = $region9
  $region8: #{polarnet_forward.8} parent=0 // pred_region
    _
  $region9: #{polarnet_forward.8} parent=0 // pred_fallthru
    _
  // Predicated region
  $region10: #{polarnet_forward.8} parent=0 // pred_check
    _
  $region11: #{polarnet_forward.8} parent=0 // pred_check_branch
    %13 = sbr.rel (0) target = $region13
  $region12: #{polarnet_forward.8} parent=0 // pred_region
    _
  $region13: #{polarnet_forward.8} parent=0 // pred_fallthru
    _
  %v14 = vld [vmem:[%s0] sm:$0xff]
  %v15 = vld [vmem:[%s0 + $0x8] sm:$0xff]
  %v16 = vld [vmem:[%s0 + $0x10] sm:$0xff]
  %v17 = vld [vmem:[%s0 + $0x18] sm:$0xff]
  %v18 = vld [vmem:[%s0 + $0x20] sm:$0xff]
  %v19 = vld [vmem:[%s0 + $0x28] sm:$0xff]
  %v20 = vld [vmem:[%s0 + $0x30] sm:$0xff]
  %v21 = vld [vmem:[%s0 + $0x38] sm:$0xff]
  %v22 = vld [vmem:[%s0 + $0x40] sm:$0xff]
  %v23 = vld [vmem:[%s0 + $0x48] sm:$0xff]
  %v24 = vld [vmem:[%s0 + $0x50] sm:$0xff]
  %v25 = vld [vmem:[%s0 + $0x58] sm:$0xff]
  %v26 = vld [vmem:[%s0 + $0x60] sm:$0xff]
  %v27 = vld [vmem:[%s0 + $0x68] sm:$0xff]
  %v28 = vld [vmem:[%s0 + $0x70] sm:$0xff]
  %v29 = vld [vmem:[%s0 + $0x78] sm:$0xff]
  %v30 = vld [vmem:[%s0 + $0x80] sm:$0xff]
  %v31 = vld [vmem:[%s0 + $0x88] sm:$0xff]
  %v32 = vld [vmem:[%s0 + $0x90] sm:$0xff]
  %v33 = vld [vmem:[%s0 + $0x98] sm:$0xff]
  %v34 = vld [vmem:[%s0 + $0xa0] sm:$0xff]
  %v35 = vld [vmem:[%s0 + $0xa8] sm:$0xff]
  %v36 = vld [vmem:[%s0 + $0xb0] sm:$0xff]
  %v37 = vld [vmem:[%s0 + $0xb8] sm:$0xff]
  %v38 = vld [vmem:[%s0 + $0xc0] sm:$0xff]
  %v39 = vld [vmem:[%s0 + $0xc8] sm:$0xff]
  %v40 = vld [vmem:[%s0 + $0xd0] sm:$0xff]
  %v41 = vld [vmem:[%s0 + $0xd8] sm:$0xff]
  %v42 = vld [vmem:[%s0 + $0xe0] sm:$0xff]
  %v43 = vld [vmem:[%s0 + $0xe8] sm:$0xff]
  %v44 = vld [vmem:[%s0 + $0xf0] sm:$0xff]
  %v45 = vld [vmem:[%s0 + $0xf8] sm:$0xff]
  %v46 = vld [vmem:[%s0 + $0x100] sm:$0xff]
  %v47 = vld [vmem:[%s0 + $0x108] sm:$0xff]
  %v48 = vld [vmem:[%s0 + $0x110] sm:$0xff]
  %v49 = vld [vmem:[%s0 + $0x118] sm:$0xff]
  %v50 = vld [vmem:[%s0 + $0x120] sm:$0xff]
  %v51 = vld [vmem:[%s0 + $0x128] sm:$0xff]
  %v52 = vld [vmem:[%s0 + $0x130] sm:$0xff]
  %v53 = vld [vmem:[%s0 + $0x138] sm:$0xff]
  %v54 = vld [vmem:[%s0 + $0x140] sm:$0xff]
  %v55 = vld [vmem:[%s0 + $0x148] sm:$0xff]
  %v56 = vld [vmem:[%s0 + $0x150] sm:$0xff]
  %v57 = vld [vmem:[%s0 + $0x158] sm:$0xff]
  %v58 = vld [vmem:[%s0 + $0x160] sm:$0xff]
  %v59 = vld [vmem:[%s0 + $0x168] sm:$0xff]
  %v60 = vld [vmem:[%s0 + $0x170] sm:$0xff]
  %v61 = vld [vmem:[%s0 + $0x178] sm:$0xff]
  %v62 = vld [vmem:[%s0 + $0x180] sm:$0xff]
  %v63 = vld [vmem:[%s0 + $0x188] sm:$0xff]
  %v64 = vld [vmem:[%s0 + $0x190] sm:$0xff]
  %v65 = vld [vmem:[%s0 + $0x198] sm:$0xff]
  %v66 = vld [vmem:[%s0 + $0x1a0] sm:$0xff]
  %v67 = vld [vmem:[%s0 + $0x1a8] sm:$0xff]
  %v68 = vld [vmem:[%s0 + $0x1b0] sm:$0xff]
  %v69 = vld [vmem:[%s0 + $0x1b8] sm:$0xff]
  %v70 = vld [vmem:[%s0 + $0x1c0] sm:$0xff]
  %v71 = vld [vmem:[%s0 + $0x1c8] sm:$0xff]
  %v72 = vld [vmem:[%s0 + $0x1d0] sm:$0xff]
  %v73 = vld [vmem:[%s0 + $0x1d8] sm:$0xff]
  %v74 = vld [vmem:[%s0 + $0x1e0] sm:$0xff]
  %v75 = vld [vmem:[%s0 + $0x1e8] sm:$0xff]
  %v76 = vld [vmem:[%s0 + $0x1f0] sm:$0xff]
  %v77 = vld [vmem:[%s0 + $0x1f8] sm:$0xff]
  %v78 = vld [vmem:[%s1] sm:$0xff]
  %v79 = vld [vmem:[%s1 + $0x8] sm:$0xff]
  %v80 = vld [vmem:[%s1 + $0x10] sm:$0xff]
  %v81 = vld [vmem:[%s1 + $0x18] sm:$0xff]
  %v82 = vld [vmem:[%s1 + $0x20] sm:$0xff]
  %v83 = vld [vmem:[%s1 + $0x28] sm:$0xff]
  %v84 = vld [vmem:[%s1 + $0x30] sm:$0xff]
  %v85 = vld [vmem:[%s1 + $0x38] sm:$0xff]
  %v86 = vld [vmem:[%s1 + $0x40] sm:$0xff]
  %v87 = vld [vmem:[%s1 + $0x48] sm:$0xff]
  %v88 = vld [vmem:[%s1 + $0x50] sm:$0xff]
  %v89 = vld [vmem:[%s1 + $0x58] sm:$0xff]
  %v90 = vld [vmem:[%s1 + $0x60] sm:$0xff]
  %v91 = vld [vmem:[%s1 + $0x68] sm:$0xff]
  %v92 = vld [vmem:[%s1 + $0x70] sm:$0xff]
  %v93 = vld [vmem:[%s1 + $0x78] sm:$0xff]
  %v94 = vld [vmem:[%s1 + $0x80] sm:$0xff]
  %v95 = vld [vmem:[%s1 + $0x88] sm:$0xff]
  %v96 = vld [vmem:[%s1 + $0x90] sm:$0xff]
  %v97 = vld [vmem:[%s1 + $0x98] sm:$0xff]
  %v98 = vld [vmem:[%s1 + $0xa0] sm:$0xff]
  %v99 = vld [vmem:[%s1 + $0xa8] sm:$0xff]
  %v100 = vld [vmem:[%s1 + $0xb0] sm:$0xff]
  %v101 = vld [vmem:[%s1 + $0xb8] sm:$0xff]
  %v102 = vld [vmem:[%s1 + $0xc0] sm:$0xff]
  %v103 = vld [vmem:[%s1 + $0xc8] sm:$0xff]
  %v104 = vld [vmem:[%s1 + $0xd0] sm:$0xff]
  %v105 = vld [vmem:[%s1 + $0xd8] sm:$0xff]
  %v106 = vld [vmem:[%s1 + $0xe0] sm:$0xff]
  %v107 = vld [vmem:[%s1 + $0xe8] sm:$0xff]
  %v108 = vld [vmem:[%s1 + $0xf0] sm:$0xff]
  %v109 = vld [vmem:[%s1 + $0xf8] sm:$0xff]
  %v110 = vld [vmem:[%s1 + $0x100] sm:$0xff]
  %v111 = vld [vmem:[%s1 + $0x108] sm:$0xff]
  %v112 = vld [vmem:[%s1 + $0x110] sm:$0xff]
  %v113 = vld [vmem:[%s1 + $0x118] sm:$0xff]
  %v114 = vld [vmem:[%s1 + $0x120] sm:$0xff]
  %v115 = vld [vmem:[%s1 + $0x128] sm:$0xff]
  %v116 = vld [vmem:[%s1 + $0x130] sm:$0xff]
  %v117 = vld [vmem:[%s1 + $0x138] sm:$0xff]
  %v118 = vld [vmem:[%s1 + $0x140] sm:$0xff]
  %v119 = vld [vmem:[%s1 + $0x148] sm:$0xff]
  %v120 = vld [vmem:[%s1 + $0x150] sm:$0xff]
  %v121 = vld [vmem:[%s1 + $0x158] sm:$0xff]
  %v122 = vld [vmem:[%s1 + $0x160] sm:$0xff]
  %v123 = vld [vmem:[%s1 + $0x168] sm:$0xff]
  %v124 = vld [vmem:[%s1 + $0x170] sm:$0xff]
  %v125 = vld [vmem:[%s1 + $0x178] sm:$0xff]
  %v126 = vld [vmem:[%s1 + $0x180] sm:$0xff]
  %v127 = vld [vmem:[%s1 + $0x188] sm:$0xff]
  %v128 = vld [vmem:[%s1 + $0x190] sm:$0xff]
  %v129 = vld [vmem:[%s1 + $0x198] sm:$0xff]
  %v130 = vld [vmem:[%s1 + $0x1a0] sm:$0xff]
  %v131 = vld [vmem:[%s1 + $0x1a8] sm:$0xff]
  %v132 = vld [vmem:[%s1 + $0x1b0] sm:$0xff]
  %v133 = vld [vmem:[%s1 + $0x1b8] sm:$0xff]
  %v134 = vld [vmem:[%s1 + $0x1c0] sm:$0xff]
  %v135 = vld [vmem:[%s1 + $0x1c8] sm:$0xff]
  %v136 = vld [vmem:[%s1 + $0x1d0] sm:$0xff]
  %v137 = vld [vmem:[%s1 + $0x1d8] sm:$0xff]
  %v138 = vld [vmem:[%s1 + $0x1e0] sm:$0xff]
  %v139 = vld [vmem:[%s1 + $0x1e8] sm:$0xff]
  %v140 = vld [vmem:[%s1 + $0x1f0] sm:$0xff]
  %v141 = vld [vmem:[%s1 + $0x1f8] sm:$0xff]
  %v142 = vld [vmem:[%s1 + $0x200] sm:$0xff]
  %v143 = vld [vmem:[%s1 + $0x208] sm:$0xff]
  %v144 = vld [vmem:[%s1 + $0x210] sm:$0xff]
  %v145 = vld [vmem:[%s1 + $0x218] sm:$0xff]
  %v146 = vld [vmem:[%s1 + $0x220] sm:$0xff]
  %v147 = vld [vmem:[%s1 + $0x228] sm:$0xff]
  %v148 = vld [vmem:[%s1 + $0x230] sm:$0xff]
  %v149 = vld [vmem:[%s1 + $0x238] sm:$0xff]
  %v150 = vld [vmem:[%s1 + $0x240] sm:$0xff]
  %v151 = vld [vmem:[%s1 + $0x248] sm:$0xff]
  %v152 = vld [vmem:[%s1 + $0x250] sm:$0xff]
  %v153 = vld [vmem:[%s1 + $0x258] sm:$0xff]
  %v154 = vld [vmem:[%s1 + $0x260] sm:$0xff]
  %v155 = vld [vmem:[%s1 + $0x268] sm:$0xff]
  %v156 = vld [vmem:[%s1 + $0x270] sm:$0xff]
  %v157 = vld [vmem:[%s1 + $0x278] sm:$0xff]
  %v158 = vld [vmem:[%s1 + $0x280] sm:$0xff]
  %v159 = vld [vmem:[%s1 + $0x288] sm:$0xff]
  %v160 = vld [vmem:[%s1 + $0x290] sm:$0xff]
  %v161 = vld [vmem:[%s1 + $0x298] sm:$0xff]
  %v162 = vld [vmem:[%s1 + $0x2a0] sm:$0xff]
  %v163 = vld [vmem:[%s1 + $0x2a8] sm:$0xff]
  %v164 = vld [vmem:[%s1 + $0x2b0] sm:$0xff]
  %v165 = vld [vmem:[%s1 + $0x2b8] sm:$0xff]
  %v166 = vld [vmem:[%s1 + $0x2c0] sm:$0xff]
  %v167 = vld [vmem:[%s1 + $0x2c8] sm:$0xff]
  %v168 = vld [vmem:[%s1 + $0x2d0] sm:$0xff]
  %v169 = vld [vmem:[%s1 + $0x2d8] sm:$0xff]
  %v170 = vld [vmem:[%s1 + $0x2e0] sm:$0xff]
  %v171 = vld [vmem:[%s1 + $0x2e8] sm:$0xff]
  %v172 = vld [vmem:[%s1 + $0x2f0] sm:$0xff]
  %v173 = vld [vmem:[%s1 + $0x2f8] sm:$0xff]
  %v174 = vld [vmem:[%s1 + $0x300] sm:$0xff]
  %v175 = vld [vmem:[%s1 + $0x308] sm:$0xff]
  %v176 = vld [vmem:[%s1 + $0x310] sm:$0xff]
  %v177 = vld [vmem:[%s1 + $0x318] sm:$0xff]
  %v178 = vld [vmem:[%s1 + $0x320] sm:$0xff]
  %v179 = vld [vmem:[%s1 + $0x328] sm:$0xff]
  %v180 = vld [vmem:[%s1 + $0x330] sm:$0xff]
  %v181 = vld [vmem:[%s1 + $0x338] sm:$0xff]
  %v182 = vld [vmem:[%s1 + $0x340] sm:$0xff]
  %v183 = vld [vmem:[%s1 + $0x348] sm:$0xff]
  %v184 = vld [vmem:[%s1 + $0x350] sm:$0xff]
  %v185 = vld [vmem:[%s1 + $0x358] sm:$0xff]
  %v186 = vld [vmem:[%s1 + $0x360] sm:$0xff]
  %v187 = vld [vmem:[%s1 + $0x368] sm:$0xff]
  %v188 = vld [vmem:[%s1 + $0x370] sm:$0xff]
  %v189 = vld [vmem:[%s1 + $0x378] sm:$0xff]
  %v190 = vld [vmem:[%s1 + $0x380] sm:$0xff]
  %v191 = vld [vmem:[%s1 + $0x388] sm:$0xff]
  %v192 = vld [vmem:[%s1 + $0x390] sm:$0xff]
  %v193 = vld [vmem:[%s1 + $0x398] sm:$0xff]
  %v194 = vld [vmem:[%s1 + $0x3a0] sm:$0xff]
  %v195 = vld [vmem:[%s1 + $0x3a8] sm:$0xff]
  %v196 = vld [vmem:[%s1 + $0x3b0] sm:$0xff]
  %v197 = vld [vmem:[%s1 + $0x3b8] sm:$0xff]
  %v198 = vld [vmem:[%s1 + $0x3c0] sm:$0xff]
  %v199 = vld [vmem:[%s1 + $0x3c8] sm:$0xff]
  %v200 = vld [vmem:[%s1 + $0x3d0] sm:$0xff]
  %v201 = vld [vmem:[%s1 + $0x3d8] sm:$0xff]
  %v202 = vld [vmem:[%s1 + $0x3e0] sm:$0xf]
  %v203 = vld [vmem:[%s1 + $0x3e8] sm:$0xf]
  %v204 = vld [vmem:[%s2] sm:$0x3]
  %v206 = vlaneseq
  %v207 = vshrl.u32 %v206, 7
  %v208 = vsub.s32 0, %v207
  %v209 = vrot.slane %v204, %v208
  %v210 = vlaneseq
  %v211 = vshrl.u32 %v210, 7
  %v212 = vsub.s32 1, %v211
  %v213 = vrot.slane %v204, %v212
  %vm216 = vcmask 949248
  %v218 = vsel %vm216, %v17, 0
  %v221 = vsel %vm216, %v21, 0
  %v224 = vsel %vm216, %v25, 0
  %v227 = vsel %vm216, %v29, 0
  %v230 = vsel %vm216, %v33, 0
  %v233 = vsel %vm216, %v37, 0
  %v236 = vsel %vm216, %v41, 0
  %v239 = vsel %vm216, %v45, 0
  %v242 = vsel %vm216, %v49, 0
  %v245 = vsel %vm216, %v53, 0
  %v248 = vsel %vm216, %v57, 0
  %v251 = vsel %vm216, %v61, 0
  %v254 = vsel %vm216, %v65, 0
  %v257 = vsel %vm216, %v69, 0
  %v260 = vsel %vm216, %v73, 0
  %v263 = vsel %vm216, %v77, 0
  %vm265 = vcmask 1043456
  %v267 = vsel %vm265, %v202, 0
  %v270 = vsel %vm265, %v203, 0
  %272 = vmatprep.subr.mxu0 %v109
  %273 = vmatpush1.msra.mxu0 %v108
  %274 = vmatprep.subr.mxu0 %v107
  %275 = vmatpush1.msra.mxu0 %v106
  %276 = vmatprep.subr.mxu0 %v105
  %277 = vmatpush1.msra.mxu0 %v104
  %278 = vmatprep.subr.mxu0 %v103
  %279 = vmatpush1.msra.mxu0 %v102
  %280 = vmatprep.subr.mxu0 %v101
  %281 = vmatpush1.msra.mxu0 %v100
  %282 = vmatprep.subr.mxu0 %v99
  %283 = vmatpush1.msra.mxu0 %v98
  %284 = vmatprep.subr.mxu0 %v97
  %285 = vmatpush1.msra.mxu0 %v96
  %286 = vmatprep.subr.mxu0 %v95
  %287 = vmatpush1.msra.mxu0 %v94
  %288 = vmatprep.subr.mxu0 %v93
  %289 = vmatpush1.msra.mxu0 %v92
  %290 = vmatprep.subr.mxu0 %v91
  %291 = vmatpush1.msra.mxu0 %v90
  %292 = vmatprep.subr.mxu0 %v89
  %293 = vmatpush1.msra.mxu0 %v88
  %294 = vmatprep.subr.mxu0 %v87
  %295 = vmatpush1.msra.mxu0 %v86
  %296 = vmatprep.subr.mxu0 %v85
  %297 = vmatpush1.msra.mxu0 %v84
  %298 = vmatprep.subr.mxu0 %v83
  %299 = vmatpush1.msra.mxu0 %v82
  %300 = vmatprep.subr.mxu0 %v81
  %301 = vmatpush1.msra.mxu0 %v80
  %302 = vmatprep.subr.mxu0 %v79
  %303 = vmatpush1.msra.mxu0 %v78
  %304 = vmatprep.subr.mxu0 %v141
  %305 = vmatpush2.msra.mxu0 %v140
  %306 = vmatprep.subr.mxu0 %v139
  %307 = vmatpush2.msra.mxu0 %v138
  %308 = vmatprep.subr.mxu0 %v137
  %309 = vmatpush2.msra.mxu0 %v136
  %310 = vmatprep.subr.mxu0 %v135
  %311 = vmatpush2.msra.mxu0 %v134
  %312 = vmatprep.subr.mxu0 %v133
  %313 = vmatpush2.msra.mxu0 %v132
  %314 = vmatprep.subr.mxu0 %v131
  %315 = vmatpush2.msra.mxu0 %v130
  %316 = vmatprep.subr.mxu0 %v129
  %317 = vmatpush2.msra.mxu0 %v128
  %318 = vmatprep.subr.mxu0 %v127
  %319 = vmatpush2.msra.mxu0 %v126
  %320 = vmatprep.subr.mxu0 %v125
  %321 = vmatpush2.msra.mxu0 %v124
  %322 = vmatprep.subr.mxu0 %v123
  %323 = vmatpush2.msra.mxu0 %v122
  %324 = vmatprep.subr.mxu0 %v121
  %325 = vmatpush2.msra.mxu0 %v120
  %326 = vmatprep.subr.mxu0 %v119
  %327 = vmatpush2.msra.mxu0 %v118
  %328 = vmatprep.subr.mxu0 %v117
  %329 = vmatpush2.msra.mxu0 %v116
  %330 = vmatprep.subr.mxu0 %v115
  %331 = vmatpush2.msra.mxu0 %v114
  %332 = vmatprep.subr.mxu0 %v113
  %333 = vmatpush2.msra.mxu0 %v112
  %334 = vmatprep.subr.mxu0 %v111
  %335 = vmatpush2.msra.mxu0 %v110
  %336 = vmatprep.mubr.f32.mxu0 %v15
  %337 = vmatmul.mubr.f32.gmra.mxu0 %v14
  %v338 = vpop.f32.mrf.mxu0
  %v339 = vadd.f32 %v209, %v338
  %v340 = vpop.f32.mrf.mxu0
  %v341 = vadd.f32 %v213, %v340
  %342 = vmatprep.mubr.f32.mxu0 %v19
  %343 = vmatmul.mubr.f32.gmra.mxu0 %v18
  %v344 = vpop.f32.mrf.mxu0
  %v345 = vadd.f32 %v209, %v344
  %v346 = vpop.f32.mrf.mxu0
  %v347 = vadd.f32 %v213, %v346
  %348 = vmatprep.mubr.f32.mxu0 %v23
  %349 = vmatmul.mubr.f32.gmra.mxu0 %v22
  %v350 = vpop.f32.mrf.mxu0
  %v351 = vadd.f32 %v209, %v350
  %v352 = vpop.f32.mrf.mxu0
  %v353 = vadd.f32 %v213, %v352
  %354 = vmatprep.mubr.f32.mxu0 %v27
  %355 = vmatmul.mubr.f32.gmra.mxu0 %v26
  %v356 = vpop.f32.mrf.mxu0
  %v357 = vadd.f32 %v209, %v356
  %v358 = vpop.f32.mrf.mxu0
  %v359 = vadd.f32 %v213, %v358
  %360 = vmatprep.mubr.f32.mxu0 %v31
  %361 = vmatmul.mubr.f32.gmra.mxu0 %v30
  %v362 = vpop.f32.mrf.mxu0
  %v363 = vadd.f32 %v209, %v362
  %v364 = vpop.f32.mrf.mxu0
  %v365 = vadd.f32 %v213, %v364
  %366 = vmatprep.mubr.f32.mxu0 %v35
  %367 = vmatmul.mubr.f32.gmra.mxu0 %v34
  %v368 = vpop.f32.mrf.mxu0
  %v369 = vadd.f32 %v209, %v368
  %v370 = vpop.f32.mrf.mxu0
  %v371 = vadd.f32 %v213, %v370
  %372 = vmatprep.mubr.f32.mxu0 %v39
  %373 = vmatmul.mubr.f32.gmra.mxu0 %v38
  %v374 = vpop.f32.mrf.mxu0
  %v375 = vadd.f32 %v209, %v374
  %v376 = vpop.f32.mrf.mxu0
  %v377 = vadd.f32 %v213, %v376
  %378 = vmatprep.mubr.f32.mxu0 %v43
  %379 = vmatmul.mubr.f32.gmra.mxu0 %v42
  %v380 = vpop.f32.mrf.mxu0
  %v381 = vadd.f32 %v209, %v380
  %v382 = vpop.f32.mrf.mxu0
  %v383 = vadd.f32 %v213, %v382
  %384 = vmatprep.mubr.f32.mxu0 %v47
  %385 = vmatmul.mubr.f32.gmra.mxu0 %v46
  %v386 = vpop.f32.mrf.mxu0
  %v387 = vadd.f32 %v209, %v386
  %v388 = vpop.f32.mrf.mxu0
  %v389 = vadd.f32 %v213, %v388
  %390 = vmatprep.mubr.f32.mxu0 %v51
  %391 = vmatmul.mubr.f32.gmra.mxu0 %v50
  %v392 = vpop.f32.mrf.mxu0
  %v393 = vadd.f32 %v209, %v392
  %v394 = vpop.f32.mrf.mxu0
  %v395 = vadd.f32 %v213, %v394
  %396 = vmatprep.mubr.f32.mxu0 %v55
  %397 = vmatmul.mubr.f32.gmra.mxu0 %v54
  %v398 = vpop.f32.mrf.mxu0
  %v399 = vadd.f32 %v209, %v398
  %v400 = vpop.f32.mrf.mxu0
  %v401 = vadd.f32 %v213, %v400
  %402 = vmatprep.mubr.f32.mxu0 %v59
  %403 = vmatmul.mubr.f32.gmra.mxu0 %v58
  %v404 = vpop.f32.mrf.mxu0
  %v405 = vadd.f32 %v209, %v404
  %v406 = vpop.f32.mrf.mxu0
  %v407 = vadd.f32 %v213, %v406
  %408 = vmatprep.mubr.f32.mxu0 %v63
  %409 = vmatmul.mubr.f32.gmra.mxu0 %v62
  %v410 = vpop.f32.mrf.mxu0
  %v411 = vadd.f32 %v209, %v410
  %v412 = vpop.f32.mrf.mxu0
  %v413 = vadd.f32 %v213, %v412
  %414 = vmatprep.mubr.f32.mxu0 %v67
  %415 = vmatmul.mubr.f32.gmra.mxu0 %v66
  %v416 = vpop.f32.mrf.mxu0
  %v417 = vadd.f32 %v209, %v416
  %v418 = vpop.f32.mrf.mxu0
  %v419 = vadd.f32 %v213, %v418
  %420 = vmatprep.mubr.f32.mxu0 %v71
  %421 = vmatmul.mubr.f32.gmra.mxu0 %v70
  %v422 = vpop.f32.mrf.mxu0
  %v423 = vadd.f32 %v209, %v422
  %v424 = vpop.f32.mrf.mxu0
  %v425 = vadd.f32 %v213, %v424
  %426 = vmatprep.mubr.f32.mxu0 %v75
  %427 = vmatmul.mubr.f32.gmra.mxu0 %v74
  %v428 = vpop.f32.mrf.mxu0
  %v429 = vadd.f32 %v209, %v428
  %v430 = vpop.f32.mrf.mxu0
  %v431 = vadd.f32 %v213, %v430
  %432 = vdwg.mxu0
  %433 = vmatprep.subr.mxu0 %v173
  %434 = vmatpush1.msra.mxu0 %v172
  %435 = vmatprep.subr.mxu0 %v171
  %436 = vmatpush1.msra.mxu0 %v170
  %437 = vmatprep.subr.mxu0 %v169
  %438 = vmatpush1.msra.mxu0 %v168
  %439 = vmatprep.subr.mxu0 %v167
  %440 = vmatpush1.msra.mxu0 %v166
  %441 = vmatprep.subr.mxu0 %v165
  %442 = vmatpush1.msra.mxu0 %v164
  %443 = vmatprep.subr.mxu0 %v163
  %444 = vmatpush1.msra.mxu0 %v162
  %445 = vmatprep.subr.mxu0 %v161
  %446 = vmatpush1.msra.mxu0 %v160
  %447 = vmatprep.subr.mxu0 %v159
  %448 = vmatpush1.msra.mxu0 %v158
  %449 = vmatprep.subr.mxu0 %v157
  %450 = vmatpush1.msra.mxu0 %v156
  %451 = vmatprep.subr.mxu0 %v155
  %452 = vmatpush1.msra.mxu0 %v154
  %453 = vmatprep.subr.mxu0 %v153
  %454 = vmatpush1.msra.mxu0 %v152
  %455 = vmatprep.subr.mxu0 %v151
  %456 = vmatpush1.msra.mxu0 %v150
  %457 = vmatprep.subr.mxu0 %v149
  %458 = vmatpush1.msra.mxu0 %v148
  %459 = vmatprep.subr.mxu0 %v147
  %460 = vmatpush1.msra.mxu0 %v146
  %461 = vmatprep.subr.mxu0 %v145
  %462 = vmatpush1.msra.mxu0 %v144
  %463 = vmatprep.subr.mxu0 %v143
  %464 = vmatpush1.msra.mxu0 %v142
  %465 = vmatprep.subr.mxu0 0.0
  %466 = vmatpush2.msra.mxu0 0.0
  %467 = vmatprep.subr.mxu0 %v270
  %468 = vmatpush2.msra.mxu0 %v267
  %469 = vmatprep.subr.mxu0 %v201
  %470 = vmatpush2.msra.mxu0 %v200
  %471 = vmatprep.subr.mxu0 %v199
  %472 = vmatpush2.msra.mxu0 %v198
  %473 = vmatprep.subr.mxu0 %v197
  %474 = vmatpush2.msra.mxu0 %v196
  %475 = vmatprep.subr.mxu0 %v195
  %476 = vmatpush2.msra.mxu0 %v194
  %477 = vmatprep.subr.mxu0 %v193
  %478 = vmatpush2.msra.mxu0 %v192
  %479 = vmatprep.subr.mxu0 %v191
  %480 = vmatpush2.msra.mxu0 %v190
  %481 = vmatprep.subr.mxu0 %v189
  %482 = vmatpush2.msra.mxu0 %v188
  %483 = vmatprep.subr.mxu0 %v187
  %484 = vmatpush2.msra.mxu0 %v186
  %485 = vmatprep.subr.mxu0 %v185
  %486 = vmatpush2.msra.mxu0 %v184
  %487 = vmatprep.subr.mxu0 %v183
  %488 = vmatpush2.msra.mxu0 %v182
  %489 = vmatprep.subr.mxu0 %v181
  %490 = vmatpush2.msra.mxu0 %v180
  %491 = vmatprep.subr.mxu0 %v179
  %492 = vmatpush2.msra.mxu0 %v178
  %493 = vmatprep.subr.mxu0 %v177
  %494 = vmatpush2.msra.mxu0 %v176
  %495 = vmatprep.subr.mxu0 %v175
  %496 = vmatpush2.msra.mxu0 %v174
  %497 = vmatprep.mubr.f32.mxu0 %v218
  %498 = vmatmul.mubr.f32.gmra.mxu0 %v16
  %v499 = vpop.f32.mrf.mxu0
  %v500 = vadd.f32 %v339, %v499
  %v501 = vpop.f32.mrf.mxu0
  %v502 = vadd.f32 %v341, %v501
  %503 = vmatprep.mubr.f32.mxu0 %v221
  %504 = vmatmul.mubr.f32.gmra.mxu0 %v20
  %v505 = vpop.f32.mrf.mxu0
  %v506 = vadd.f32 %v345, %v505
  %v507 = vpop.f32.mrf.mxu0
  %v508 = vadd.f32 %v347, %v507
  %509 = vmatprep.mubr.f32.mxu0 %v224
  %510 = vmatmul.mubr.f32.gmra.mxu0 %v24
  %v511 = vpop.f32.mrf.mxu0
  %v512 = vadd.f32 %v351, %v511
  %v513 = vpop.f32.mrf.mxu0
  %v514 = vadd.f32 %v353, %v513
  %515 = vmatprep.mubr.f32.mxu0 %v227
  %516 = vmatmul.mubr.f32.gmra.mxu0 %v28
  %v517 = vpop.f32.mrf.mxu0
  %v518 = vadd.f32 %v357, %v517
  %v519 = vpop.f32.mrf.mxu0
  %v520 = vadd.f32 %v359, %v519
  %521 = vmatprep.mubr.f32.mxu0 %v230
  %522 = vmatmul.mubr.f32.gmra.mxu0 %v32
  %v523 = vpop.f32.mrf.mxu0
  %v524 = vadd.f32 %v363, %v523
  %v525 = vpop.f32.mrf.mxu0
  %v526 = vadd.f32 %v365, %v525
  %527 = vmatprep.mubr.f32.mxu0 %v233
  %528 = vmatmul.mubr.f32.gmra.mxu0 %v36
  %v529 = vpop.f32.mrf.mxu0
  %v530 = vadd.f32 %v369, %v529
  %v531 = vpop.f32.mrf.mxu0
  %v532 = vadd.f32 %v371, %v531
  %533 = vmatprep.mubr.f32.mxu0 %v236
  %534 = vmatmul.mubr.f32.gmra.mxu0 %v40
  %v535 = vpop.f32.mrf.mxu0
  %v536 = vadd.f32 %v375, %v535
  %v537 = vpop.f32.mrf.mxu0
  %v538 = vadd.f32 %v377, %v537
  %539 = vmatprep.mubr.f32.mxu0 %v239
  %540 = vmatmul.mubr.f32.gmra.mxu0 %v44
  %v541 = vpop.f32.mrf.mxu0
  %v542 = vadd.f32 %v381, %v541
  %v543 = vpop.f32.mrf.mxu0
  %v544 = vadd.f32 %v383, %v543
  %545 = vmatprep.mubr.f32.mxu0 %v242
  %546 = vmatmul.mubr.f32.gmra.mxu0 %v48
  %v547 = vpop.f32.mrf.mxu0
  %v548 = vadd.f32 %v387, %v547
  %v549 = vpop.f32.mrf.mxu0
  %v550 = vadd.f32 %v389, %v549
  %551 = vmatprep.mubr.f32.mxu0 %v245
  %552 = vmatmul.mubr.f32.gmra.mxu0 %v52
  %v553 = vpop.f32.mrf.mxu0
  %v554 = vadd.f32 %v393, %v553
  %v555 = vpop.f32.mrf.mxu0
  %v556 = vadd.f32 %v395, %v555
  %557 = vmatprep.mubr.f32.mxu0 %v248
  %558 = vmatmul.mubr.f32.gmra.mxu0 %v56
  %v559 = vpop.f32.mrf.mxu0
  %v560 = vadd.f32 %v399, %v559
  %v561 = vpop.f32.mrf.mxu0
  %v562 = vadd.f32 %v401, %v561
  %563 = vmatprep.mubr.f32.mxu0 %v251
  %564 = vmatmul.mubr.f32.gmra.mxu0 %v60
  %v565 = vpop.f32.mrf.mxu0
  %v566 = vadd.f32 %v405, %v565
  %v567 = vpop.f32.mrf.mxu0
  %v568 = vadd.f32 %v407, %v567
  %569 = vmatprep.mubr.f32.mxu0 %v254
  %570 = vmatmul.mubr.f32.gmra.mxu0 %v64
  %v571 = vpop.f32.mrf.mxu0
  %v572 = vadd.f32 %v411, %v571
  %v573 = vpop.f32.mrf.mxu0
  %v574 = vadd.f32 %v413, %v573
  %575 = vmatprep.mubr.f32.mxu0 %v257
  %576 = vmatmul.mubr.f32.gmra.mxu0 %v68
  %v577 = vpop.f32.mrf.mxu0
  %v578 = vadd.f32 %v417, %v577
  %v579 = vpop.f32.mrf.mxu0
  %v580 = vadd.f32 %v419, %v579
  %581 = vmatprep.mubr.f32.mxu0 %v260
  %582 = vmatmul.mubr.f32.gmra.mxu0 %v72
  %v583 = vpop.f32.mrf.mxu0
  %v584 = vadd.f32 %v423, %v583
  %v585 = vpop.f32.mrf.mxu0
  %v586 = vadd.f32 %v425, %v585
  %587 = vmatprep.mubr.f32.mxu0 %v263
  %588 = vmatmul.mubr.f32.gmra.mxu0 %v76
  %v589 = vpop.f32.mrf.mxu0
  %v590 = vadd.f32 %v429, %v589
  %v591 = vpop.f32.mrf.mxu0
  %v592 = vadd.f32 %v431, %v591
  %593 = vdwg.mxu0
  %v594 = vmax.f32 %v500, 0.0
  %v595 = vmax.f32 %v502, 0.0
  %v596 = vmax.f32 %v506, 0.0
  %v597 = vmax.f32 %v508, 0.0
  %v598 = vmax.f32 %v512, 0.0
  %v599 = vmax.f32 %v514, 0.0
  %v600 = vmax.f32 %v518, 0.0
  %v601 = vmax.f32 %v520, 0.0
  %v602 = vmax.f32 %v524, 0.0
  %v603 = vmax.f32 %v526, 0.0
  %v604 = vmax.f32 %v530, 0.0
  %v605 = vmax.f32 %v532, 0.0
  %v606 = vmax.f32 %v536, 0.0
  %v607 = vmax.f32 %v538, 0.0
  %v608 = vmax.f32 %v542, 0.0
  %v609 = vmax.f32 %v544, 0.0
  %v610 = vmax.f32 %v548, 0.0
  %v611 = vmax.f32 %v550, 0.0
  %v612 = vmax.f32 %v554, 0.0
  %v613 = vmax.f32 %v556, 0.0
  %v614 = vmax.f32 %v560, 0.0
  %v615 = vmax.f32 %v562, 0.0
  %v616 = vmax.f32 %v566, 0.0
  %v617 = vmax.f32 %v568, 0.0
  %v618 = vmax.f32 %v572, 0.0
  %v619 = vmax.f32 %v574, 0.0
  %v620 = vmax.f32 %v578, 0.0
  %v621 = vmax.f32 %v580, 0.0
  %v622 = vmax.f32 %v584, 0.0
  %v623 = vmax.f32 %v586, 0.0
  %v624 = vmax.f32 %v590, 0.0
  %v625 = vmax.f32 %v592, 0.0
  %626 = vst [vmem:[%s3] sm:$0xff] %v594
  %627 = vst [vmem:[%s3 + $0x8] sm:$0xff] %v595
  %628 = vst [vmem:[%s3 + $0x10] sm:$0xff] %v596
  %629 = vst [vmem:[%s3 + $0x18] sm:$0xff] %v597
  %630 = vst [vmem:[%s3 + $0x20] sm:$0xff] %v598
  %631 = vst [vmem:[%s3 + $0x28] sm:$0xff] %v599
  %632 = vst [vmem:[%s3 + $0x30] sm:$0xff] %v600
  %633 = vst [vmem:[%s3 + $0x38] sm:$0xff] %v601
  %634 = vst [vmem:[%s3 + $0x40] sm:$0xff] %v602
  %635 = vst [vmem:[%s3 + $0x48] sm:$0xff] %v603
  %636 = vst [vmem:[%s3 + $0x50] sm:$0xff] %v604
  %637 = vst [vmem:[%s3 + $0x58] sm:$0xff] %v605
  %638 = vst [vmem:[%s3 + $0x60] sm:$0xff] %v606
  %639 = vst [vmem:[%s3 + $0x68] sm:$0xff] %v607
  %640 = vst [vmem:[%s3 + $0x70] sm:$0xff] %v608
  %641 = vst [vmem:[%s3 + $0x78] sm:$0xff] %v609
  %642 = vst [vmem:[%s3 + $0x80] sm:$0xff] %v610
  %643 = vst [vmem:[%s3 + $0x88] sm:$0xff] %v611
  %644 = vst [vmem:[%s3 + $0x90] sm:$0xff] %v612
  %645 = vst [vmem:[%s3 + $0x98] sm:$0xff] %v613
  %646 = vst [vmem:[%s3 + $0xa0] sm:$0xff] %v614
  %647 = vst [vmem:[%s3 + $0xa8] sm:$0xff] %v615
  %648 = vst [vmem:[%s3 + $0xb0] sm:$0xff] %v616
  %649 = vst [vmem:[%s3 + $0xb8] sm:$0xff] %v617
  %650 = vst [vmem:[%s3 + $0xc0] sm:$0xff] %v618
  %651 = vst [vmem:[%s3 + $0xc8] sm:$0xff] %v619
  %652 = vst [vmem:[%s3 + $0xd0] sm:$0xff] %v620
  %653 = vst [vmem:[%s3 + $0xd8] sm:$0xff] %v621
  %654 = vst [vmem:[%s3 + $0xe0] sm:$0xff] %v622
  %655 = vst [vmem:[%s3 + $0xe8] sm:$0xff] %v623
  %656 = vst [vmem:[%s3 + $0xf0] sm:$0xff] %v624
  %657 = vst [vmem:[%s3 + $0xf8] sm:$0xff] %v625
  // Predicated region
  $region14: #{polarnet_forward.8} parent=0 // pred_check
    _
  $region15: #{polarnet_forward.8} parent=0 // pred_check_branch
    %659 = sbr.rel (0) target = $region17
  $region16: #{polarnet_forward.8} parent=0 // pred_region
    _
  $region17: #{polarnet_forward.8} parent=0 // pred_fallthru
    _
  // Predicated region
  $region18: #{polarnet_forward.8} parent=0 // pred_check
    _
  $region19: #{polarnet_forward.8} parent=0 // pred_check_branch
    %661 = sbr.rel (0) target = $region21
  $region20: #{polarnet_forward.8} parent=0 // pred_region
    _
  $region21: #{polarnet_forward.8} parent=0 // pred_fallthru
    _

// kernel: polarnet_forward.9
$region0: #{polarnet_forward.9}
  #allocation0 [shape = 'u32[]', space=smem, size = 0x4, offset = 0x4, fixed_abs, tag = 'smem constant byte address 0x4 - core index']
  #allocation1 [shape = 'u32[144,128]{1,0:T(1,128)}', space=vmem, size = 0x12000, scoped, tag = 'internal scratch']
  %s0 = inlined_call_operand.vmem [shape: f32[4,640], index: 0, kind: input, shape index: {}]
  %s1 = inlined_call_operand.vmem [shape: f32[4,640], index: 1, kind: input, shape index: {}]
  %s2 = inlined_call_operand.vmem [shape: f32[1,640], index: 2, kind: output, shape index: {0}]
  %s3 = inlined_call_operand.vmem [shape: f32[1,640], index: 3, kind: output, shape index: {1}]
  %4 = xla_tuple %s2, %s3
  %s5 = sld [smem:[#allocation0]]
  $region26: #{polarnet_forward.9} parent=0
    _
  %s7 = ssub.s32 1, %s5
  %s8 = scalar_select 0, %s7, %s5
  // Predicated region
  $region2: #{polarnet_forward.9} parent=0 // pred_check
    _
  $region3: #{polarnet_forward.9} parent=0 // pred_check_branch
    %10 = sbr.rel (0) target = $region5
  $region4: #{polarnet_forward.9} parent=0 // pred_region
    _
  $region5: #{polarnet_forward.9} parent=0 // pred_fallthru
    _
  // Predicated region
  $region6: #{polarnet_forward.9} parent=0 // pred_check
    _
  $region7: #{polarnet_forward.9} parent=0 // pred_check_branch
    %12 = sbr.rel (0) target = $region9
  $region8: #{polarnet_forward.9} parent=0 // pred_region
    _
  $region9: #{polarnet_forward.9} parent=0 // pred_fallthru
    _
  %v13 = vld [vmem:[%s0] sm:$0xff]
  %v14 = vld [vmem:[%s0 + $0x8] sm:$0xff]
  %v15 = vld [vmem:[%s0 + $0x10] sm:$0xf]
  %v16 = vld [vmem:[%s1] sm:$0xff]
  %v17 = vld [vmem:[%s1 + $0x8] sm:$0xff]
  %v18 = vld [vmem:[%s1 + $0x10] sm:$0xf]
  %v19 = vmul.f32 %v13, %v13
  %v20 = vmul.f32 %v14, %v14
  %v21 = vmul.f32 %v15, %v15
  %v22 = vmul.f32 %v16, %v16
  %v23 = vmul.f32 %v17, %v17
  %v24 = vmul.f32 %v18, %v18
  %v25 = vadd.f32 %v19, %v22
  %v26 = vadd.f32 %v20, %v23
  %v27 = vadd.f32 %v21, %v24
  %v31 = vrot.slane %v25, 7
  %v32 = vrot.slane %v26, 7
  %v33 = vrot.slane %v27, 7
  %vm37 = vcmp.gt.f32.partialorder %v25, %v31
  %vm38 = vcmp.gt.f32.partialorder %v26, %v32
  %vm39 = vcmp.gt.f32.partialorder %v27, %v33
  %v40 = vsel %vm37, %v25, %v31
  %v41 = vsel %vm38, %v26, %v32
  %v42 = vsel %vm39, %v27, %v33
  %v46 = vrot.slane %v13, 7
  %v47 = vrot.slane %v14, 7
  %v48 = vrot.slane %v15, 7
  %v52 = vsel %vm37, %v13, %v46
  %v53 = vsel %vm38, %v14, %v47
  %v54 = vsel %vm39, %v15, %v48
  %v58 = vrot.slane %v16, 7
  %v59 = vrot.slane %v17, 7
  %v60 = vrot.slane %v18, 7
  %v64 = vsel %vm37, %v16, %v58
  %v65 = vsel %vm38, %v17, %v59
  %v66 = vsel %vm39, %v18, %v60
  %v70 = vrot.slane %v40, 7
  %v71 = vrot.slane %v41, 7
  %v72 = vrot.slane %v42, 7
  %vm76 = vcmp.gt.f32.partialorder %v25, %v70
  %vm77 = vcmp.gt.f32.partialorder %v26, %v71
  %vm78 = vcmp.gt.f32.partialorder %v27, %v72
  %v79 = vsel %vm76, %v25, %v70
  %v80 = vsel %vm77, %v26, %v71
  %v81 = vsel %vm78, %v27, %v72
  %v85 = vrot.slane %v52, 7
  %v86 = vrot.slane %v53, 7
  %v87 = vrot.slane %v54, 7
  %v91 = vsel %vm76, %v13, %v85
  %v92 = vsel %vm77, %v14, %v86
  %v93 = vsel %vm78, %v15, %v87
  %v97 = vrot.slane %v64, 7
  %v98 = vrot.slane %v65, 7
  %v99 = vrot.slane %v66, 7
  %v103 = vsel %vm76, %v16, %v97
  %v104 = vsel %vm77, %v17, %v98
  %v105 = vsel %vm78, %v18, %v99
  %v109 = vrot.slane %v79, 7
  %v110 = vrot.slane %v80, 7
  %v111 = vrot.slane %v81, 7
  %vm115 = vcmp.gt.f32.partialorder %v25, %v109
  %vm116 = vcmp.gt.f32.partialorder %v26, %v110
  %vm117 = vcmp.gt.f32.partialorder %v27, %v111
  %v121 = vrot.slane %v91, 7
  %v122 = vrot.slane %v92, 7
  %v123 = vrot.slane %v93, 7
  %v127 = vsel %vm115, %v13, %v121
  %v128 = vsel %vm116, %v14, %v122
  %v129 = vsel %vm117, %v15, %v123
  %v133 = vrot.slane %v103, 7
  %v134 = vrot.slane %v104, 7
  %v135 = vrot.slane %v105, 7
  %v139 = vsel %vm115, %v16, %v133
  %v140 = vsel %vm116, %v17, %v134
  %v141 = vsel %vm117, %v18, %v135
  %v146 = vunpack.c.l.s4 1966171168
  %v147 = vunpack.c.0.s8 %v146
  %v148 = vlaneseq
  %v149 = vshrl.u32 %v148, 7
  %v150 = vsub.s32 %v147, %v149
  %v151 = vrot.slane %v127, %v150
  %v153 = vunpack.c.l.s4 1966171168
  %v154 = vunpack.c.0.s8 %v153
  %v155 = vlaneseq
  %v156 = vshrl.u32 %v155, 7
  %v157 = vsub.s32 %v154, %v156
  %v158 = vrot.slane %v128, %v157
  %v160 = vunpack.c.l.s4 1966171168
  %v161 = vunpack.c.0.s8 %v160
  %v162 = vlaneseq
  %v163 = vshrl.u32 %v162, 7
  %v164 = vsub.s32 %v161, %v163
  %v165 = vrot.slane %v129, %v164
  %v166 = vcombine.high %v151, %v158
  %v167 = vcombine.high %v165, %v165
  %v169 = vunpack.c.l.s4 1966171168
  %v170 = vunpack.c.0.s8 %v169
  %v171 = vlaneseq
  %v172 = vshrl.u32 %v171, 7
  %v173 = vsub.s32 %v170, %v172
  %v174 = vrot.slane %v166, %v173
  %v176 = vunpack.c.l.s4 1966171168
  %v177 = vunpack.c.0.s8 %v176
  %v178 = vlaneseq
  %v179 = vshrl.u32 %v178, 7
  %v180 = vsub.s32 %v177, %v179
  %v181 = vrot.slane %v167, %v180
  %v182 = vcombine.high %v174, %v181
  %v184 = vlaneseq
  %vm185 = vcmp.ge.s32.totalorder %v184, 0
  %vm186 = vcmp.lt.s32.totalorder %v184, 640
  %vm187 = vmand %vm185, %vm186
  %188 = vst.msk [vmem:[%s2] sm:$0x1f] %vm187, %v182
  %v193 = vunpack.c.l.s4 1966171168
  %v194 = vunpack.c.0.s8 %v193
  %v195 = vlaneseq
  %v196 = vshrl.u32 %v195, 7
  %v197 = vsub.s32 %v194, %v196
  %v198 = vrot.slane %v139, %v197
  %v200 = vunpack.c.l.s4 1966171168
  %v201 = vunpack.c.0.s8 %v200
  %v202 = vlaneseq
  %v203 = vshrl.u32 %v202, 7
  %v204 = vsub.s32 %v201, %v203
  %v205 = vrot.slane %v140, %v204
  %v207 = vunpack.c.l.s4 1966171168
  %v208 = vunpack.c.0.s8 %v207
  %v209 = vlaneseq
  %v210 = vshrl.u32 %v209, 7
  %v211 = vsub.s32 %v208, %v210
  %v212 = vrot.slane %v141, %v211
  %v213 = vcombine.high %v198, %v205
  %v214 = vcombine.high %v212, %v212
  %v216 = vunpack.c.l.s4 1966171168
  %v217 = vunpack.c.0.s8 %v216
  %v218 = vlaneseq
  %v219 = vshrl.u32 %v218, 7
  %v220 = vsub.s32 %v217, %v219
  %v221 = vrot.slane %v213, %v220
  %v223 = vunpack.c.l.s4 1966171168
  %v224 = vunpack.c.0.s8 %v223
  %v225 = vlaneseq
  %v226 = vshrl.u32 %v225, 7
  %v227 = vsub.s32 %v224, %v226
  %v228 = vrot.slane %v214, %v227
  %v229 = vcombine.high %v221, %v228
  %231 = vst.msk [vmem:[%s3] sm:$0x1f] %vm187, %v229
  // Predicated region
  $region10: #{polarnet_forward.9} parent=0 // pred_check
    _
  $region11: #{polarnet_forward.9} parent=0 // pred_check_branch
    %233 = sbr.rel (0) target = $region13
  $region12: #{polarnet_forward.9} parent=0 // pred_region
    _
  $region13: #{polarnet_forward.9} parent=0 // pred_fallthru
    _
  // Predicated region
  $region14: #{polarnet_forward.9} parent=0 // pred_check
    _
  $region15: #{polarnet_forward.9} parent=0 // pred_check_branch
    %235 = sbr.rel (0) target = $region17
  $region16: #{polarnet_forward.9} parent=0 // pred_region
    _
  $region17: #{polarnet_forward.9} parent=0 // pred_fallthru
    _
  // Predicated region
  $region18: #{polarnet_forward.9} parent=0 // pred_check
    _
  $region19: #{polarnet_forward.9} parent=0 // pred_check_branch
    %237 = sbr.rel (0) target = $region21
  $region20: #{polarnet_forward.9} parent=0 // pred_region
    _
  $region21: #{polarnet_forward.9} parent=0 // pred_fallthru
    _
  // Predicated region
  $region22: #{polarnet_forward.9} parent=0 // pred_check
    _
  $region23: #{polarnet_forward.9} parent=0 // pred_check_branch
    %239 = sbr.rel (0) target = $region25
  $region24: #{polarnet_forward.9} parent=0 // pred_region
    _
  $region25: #{polarnet_forward.9} parent=0 // pred_fallthru
    _

// kernel: polarnet_forward.10
$region0: #{polarnet_forward.10}
  #allocation0 [shape = 'u32[]', space=smem, size = 0x4, offset = 0x4, fixed_abs, tag = 'smem constant byte address 0x4 - core index']
  #allocation1 [shape = 'u32[144,128]{1,0:T(1,128)}', space=vmem, size = 0x12000, scoped, tag = 'internal scratch']
  %s0 = inlined_call_operand.vmem [shape: f32[2,640], index: 0, kind: input, shape index: {}]
  %s1 = inlined_call_operand.vmem [shape: f32[640,1024], index: 1, kind: input, shape index: {}]
  %s2 = inlined_call_operand.vmem [shape: f32[1,1024], index: 2, kind: input, shape index: {}]
  %s3 = inlined_call_operand.vmem [shape: f32[2,1024], index: 3, kind: output, shape index: {}]
  %s4 = sld [smem:[#allocation0]]
  $region22: #{polarnet_forward.10} parent=0
    _
  %s6 = ssub.s32 1, %s4
  %s7 = scalar_select 0, %s6, %s4
  // Predicated region
  $region2: #{polarnet_forward.10} parent=0 // pred_check
    _
  $region3: #{polarnet_forward.10} parent=0 // pred_check_branch
    %9 = sbr.rel (0) target = $region5
  $region4: #{polarnet_forward.10} parent=0 // pred_region
    _
  $region5: #{polarnet_forward.10} parent=0 // pred_fallthru
    _
  // Predicated region
  $region6: #{polarnet_forward.10} parent=0 // pred_check
    _
  $region7: #{polarnet_forward.10} parent=0 // pred_check_branch
    %11 = sbr.rel (0) target = $region9
  $region8: #{polarnet_forward.10} parent=0 // pred_region
    _
  $region9: #{polarnet_forward.10} parent=0 // pred_fallthru
    _
  // Predicated region
  $region10: #{polarnet_forward.10} parent=0 // pred_check
    _
  $region11: #{polarnet_forward.10} parent=0 // pred_check_branch
    %13 = sbr.rel (0) target = $region13
  $region12: #{polarnet_forward.10} parent=0 // pred_region
    _
  $region13: #{polarnet_forward.10} parent=0 // pred_fallthru
    _
  %v14 = vld [vmem:[%s0] sm:$0xff]
  %v15 = vld [vmem:[%s0 + $0x8] sm:$0x3]
  %v16 = vld [vmem:[%s1] sm:$0xff]
  %v17 = vld [vmem:[%s1 + $0x8] sm:$0xff]
  %v18 = vld [vmem:[%s1 + $0x10] sm:$0xff]
  %v19 = vld [vmem:[%s1 + $0x18] sm:$0xff]
  %v20 = vld [vmem:[%s1 + $0x20] sm:$0xff]
  %v21 = vld [vmem:[%s1 + $0x28] sm:$0xff]
  %v22 = vld [vmem:[%s1 + $0x30] sm:$0xff]
  %v23 = vld [vmem:[%s1 + $0x38] sm:$0xff]
  %v24 = vld [vmem:[%s1 + $0x40] sm:$0xff]
  %v25 = vld [vmem:[%s1 + $0x48] sm:$0xff]
  %v26 = vld [vmem:[%s1 + $0x50] sm:$0xff]
  %v27 = vld [vmem:[%s1 + $0x58] sm:$0xff]
  %v28 = vld [vmem:[%s1 + $0x60] sm:$0xff]
  %v29 = vld [vmem:[%s1 + $0x68] sm:$0xff]
  %v30 = vld [vmem:[%s1 + $0x70] sm:$0xff]
  %v31 = vld [vmem:[%s1 + $0x78] sm:$0xff]
  %v32 = vld [vmem:[%s1 + $0x80] sm:$0xff]
  %v33 = vld [vmem:[%s1 + $0x88] sm:$0xff]
  %v34 = vld [vmem:[%s1 + $0x90] sm:$0xff]
  %v35 = vld [vmem:[%s1 + $0x98] sm:$0xff]
  %v36 = vld [vmem:[%s1 + $0xa0] sm:$0xff]
  %v37 = vld [vmem:[%s1 + $0xa8] sm:$0xff]
  %v38 = vld [vmem:[%s1 + $0xb0] sm:$0xff]
  %v39 = vld [vmem:[%s1 + $0xb8] sm:$0xff]
  %v40 = vld [vmem:[%s1 + $0xc0] sm:$0xff]
  %v41 = vld [vmem:[%s1 + $0xc8] sm:$0xff]
  %v42 = vld [vmem:[%s1 + $0xd0] sm:$0xff]
  %v43 = vld [vmem:[%s1 + $0xd8] sm:$0xff]
  %v44 = vld [vmem:[%s1 + $0xe0] sm:$0xff]
  %v45 = vld [vmem:[%s1 + $0xe8] sm:$0xff]
  %v46 = vld [vmem:[%s1 + $0xf0] sm:$0xff]
  %v47 = vld [vmem:[%s1 + $0xf8] sm:$0xff]
  %v48 = vld [vmem:[%s1 + $0x100] sm:$0xff]
  %v49 = vld [vmem:[%s1 + $0x108] sm:$0xff]
  %v50 = vld [vmem:[%s1 + $0x110] sm:$0xff]
  %v51 = vld [vmem:[%s1 + $0x118] sm:$0xff]
  %v52 = vld [vmem:[%s1 + $0x120] sm:$0xff]
  %v53 = vld [vmem:[%s1 + $0x128] sm:$0xff]
  %v54 = vld [vmem:[%s1 + $0x130] sm:$0xff]
  %v55 = vld [vmem:[%s1 + $0x138] sm:$0xff]
  %v56 = vld [vmem:[%s1 + $0x140] sm:$0xff]
  %v57 = vld [vmem:[%s1 + $0x148] sm:$0xff]
  %v58 = vld [vmem:[%s1 + $0x150] sm:$0xff]
  %v59 = vld [vmem:[%s1 + $0x158] sm:$0xff]
  %v60 = vld [vmem:[%s1 + $0x160] sm:$0xff]
  %v61 = vld [vmem:[%s1 + $0x168] sm:$0xff]
  %v62 = vld [vmem:[%s1 + $0x170] sm:$0xff]
  %v63 = vld [vmem:[%s1 + $0x178] sm:$0xff]
  %v64 = vld [vmem:[%s1 + $0x180] sm:$0xff]
  %v65 = vld [vmem:[%s1 + $0x188] sm:$0xff]
  %v66 = vld [vmem:[%s1 + $0x190] sm:$0xff]
  %v67 = vld [vmem:[%s1 + $0x198] sm:$0xff]
  %v68 = vld [vmem:[%s1 + $0x1a0] sm:$0xff]
  %v69 = vld [vmem:[%s1 + $0x1a8] sm:$0xff]
  %v70 = vld [vmem:[%s1 + $0x1b0] sm:$0xff]
  %v71 = vld [vmem:[%s1 + $0x1b8] sm:$0xff]
  %v72 = vld [vmem:[%s1 + $0x1c0] sm:$0xff]
  %v73 = vld [vmem:[%s1 + $0x1c8] sm:$0xff]
  %v74 = vld [vmem:[%s1 + $0x1d0] sm:$0xff]
  %v75 = vld [vmem:[%s1 + $0x1d8] sm:$0xff]
  %v76 = vld [vmem:[%s1 + $0x1e0] sm:$0xff]
  %v77 = vld [vmem:[%s1 + $0x1e8] sm:$0xff]
  %v78 = vld [vmem:[%s1 + $0x1f0] sm:$0xff]
  %v79 = vld [vmem:[%s1 + $0x1f8] sm:$0xff]
  %v80 = vld [vmem:[%s1 + $0x200] sm:$0xff]
  %v81 = vld [vmem:[%s1 + $0x208] sm:$0xff]
  %v82 = vld [vmem:[%s1 + $0x210] sm:$0xff]
  %v83 = vld [vmem:[%s1 + $0x218] sm:$0xff]
  %v84 = vld [vmem:[%s1 + $0x220] sm:$0xff]
  %v85 = vld [vmem:[%s1 + $0x228] sm:$0xff]
  %v86 = vld [vmem:[%s1 + $0x230] sm:$0xff]
  %v87 = vld [vmem:[%s1 + $0x238] sm:$0xff]
  %v88 = vld [vmem:[%s1 + $0x240] sm:$0xff]
  %v89 = vld [vmem:[%s1 + $0x248] sm:$0xff]
  %v90 = vld [vmem:[%s1 + $0x250] sm:$0xff]
  %v91 = vld [vmem:[%s1 + $0x258] sm:$0xff]
  %v92 = vld [vmem:[%s1 + $0x260] sm:$0xff]
  %v93 = vld [vmem:[%s1 + $0x268] sm:$0xff]
  %v94 = vld [vmem:[%s1 + $0x270] sm:$0xff]
  %v95 = vld [vmem:[%s1 + $0x278] sm:$0xff]
  %v96 = vld [vmem:[%s1 + $0x280] sm:$0xff]
  %v97 = vld [vmem:[%s1 + $0x288] sm:$0xff]
  %v98 = vld [vmem:[%s1 + $0x290] sm:$0xff]
  %v99 = vld [vmem:[%s1 + $0x298] sm:$0xff]
  %v100 = vld [vmem:[%s1 + $0x2a0] sm:$0xff]
  %v101 = vld [vmem:[%s1 + $0x2a8] sm:$0xff]
  %v102 = vld [vmem:[%s1 + $0x2b0] sm:$0xff]
  %v103 = vld [vmem:[%s1 + $0x2b8] sm:$0xff]
  %v104 = vld [vmem:[%s1 + $0x2c0] sm:$0xff]
  %v105 = vld [vmem:[%s1 + $0x2c8] sm:$0xff]
  %v106 = vld [vmem:[%s1 + $0x2d0] sm:$0xff]
  %v107 = vld [vmem:[%s1 + $0x2d8] sm:$0xff]
  %v108 = vld [vmem:[%s1 + $0x2e0] sm:$0xff]
  %v109 = vld [vmem:[%s1 + $0x2e8] sm:$0xff]
  %v110 = vld [vmem:[%s1 + $0x2f0] sm:$0xff]
  %v111 = vld [vmem:[%s1 + $0x2f8] sm:$0xff]
  %v112 = vld [vmem:[%s1 + $0x300] sm:$0xff]
  %v113 = vld [vmem:[%s1 + $0x308] sm:$0xff]
  %v114 = vld [vmem:[%s1 + $0x310] sm:$0xff]
  %v115 = vld [vmem:[%s1 + $0x318] sm:$0xff]
  %v116 = vld [vmem:[%s1 + $0x320] sm:$0xff]
  %v117 = vld [vmem:[%s1 + $0x328] sm:$0xff]
  %v118 = vld [vmem:[%s1 + $0x330] sm:$0xff]
  %v119 = vld [vmem:[%s1 + $0x338] sm:$0xff]
  %v120 = vld [vmem:[%s1 + $0x340] sm:$0xff]
  %v121 = vld [vmem:[%s1 + $0x348] sm:$0xff]
  %v122 = vld [vmem:[%s1 + $0x350] sm:$0xff]
  %v123 = vld [vmem:[%s1 + $0x358] sm:$0xff]
  %v124 = vld [vmem:[%s1 + $0x360] sm:$0xff]
  %v125 = vld [vmem:[%s1 + $0x368] sm:$0xff]
  %v126 = vld [vmem:[%s1 + $0x370] sm:$0xff]
  %v127 = vld [vmem:[%s1 + $0x378] sm:$0xff]
  %v128 = vld [vmem:[%s1 + $0x380] sm:$0xff]
  %v129 = vld [vmem:[%s1 + $0x388] sm:$0xff]
  %v130 = vld [vmem:[%s1 + $0x390] sm:$0xff]
  %v131 = vld [vmem:[%s1 + $0x398] sm:$0xff]
  %v132 = vld [vmem:[%s1 + $0x3a0] sm:$0xff]
  %v133 = vld [vmem:[%s1 + $0x3a8] sm:$0xff]
  %v134 = vld [vmem:[%s1 + $0x3b0] sm:$0xff]
  %v135 = vld [vmem:[%s1 + $0x3b8] sm:$0xff]
  %v136 = vld [vmem:[%s1 + $0x3c0] sm:$0xff]
  %v137 = vld [vmem:[%s1 + $0x3c8] sm:$0xff]
  %v138 = vld [vmem:[%s1 + $0x3d0] sm:$0xff]
  %v139 = vld [vmem:[%s1 + $0x3d8] sm:$0xff]
  %v140 = vld [vmem:[%s1 + $0x3e0] sm:$0xff]
  %v141 = vld [vmem:[%s1 + $0x3e8] sm:$0xff]
  %v142 = vld [vmem:[%s1 + $0x3f0] sm:$0xff]
  %v143 = vld [vmem:[%s1 + $0x3f8] sm:$0xff]
  %v144 = vld [vmem:[%s1 + $0x400] sm:$0xff]
  %v145 = vld [vmem:[%s1 + $0x408] sm:$0xff]
  %v146 = vld [vmem:[%s1 + $0x410] sm:$0xff]
  %v147 = vld [vmem:[%s1 + $0x418] sm:$0xff]
  %v148 = vld [vmem:[%s1 + $0x420] sm:$0xff]
  %v149 = vld [vmem:[%s1 + $0x428] sm:$0xff]
  %v150 = vld [vmem:[%s1 + $0x430] sm:$0xff]
  %v151 = vld [vmem:[%s1 + $0x438] sm:$0xff]
  %v152 = vld [vmem:[%s1 + $0x440] sm:$0xff]
  %v153 = vld [vmem:[%s1 + $0x448] sm:$0xff]
  %v154 = vld [vmem:[%s1 + $0x450] sm:$0xff]
  %v155 = vld [vmem:[%s1 + $0x458] sm:$0xff]
  %v156 = vld [vmem:[%s1 + $0x460] sm:$0xff]
  %v157 = vld [vmem:[%s1 + $0x468] sm:$0xff]
  %v158 = vld [vmem:[%s1 + $0x470] sm:$0xff]
  %v159 = vld [vmem:[%s1 + $0x478] sm:$0xff]
  %v160 = vld [vmem:[%s1 + $0x480] sm:$0xff]
  %v161 = vld [vmem:[%s1 + $0x488] sm:$0xff]
  %v162 = vld [vmem:[%s1 + $0x490] sm:$0xff]
  %v163 = vld [vmem:[%s1 + $0x498] sm:$0xff]
  %v164 = vld [vmem:[%s1 + $0x4a0] sm:$0xff]
  %v165 = vld [vmem:[%s1 + $0x4a8] sm:$0xff]
  %v166 = vld [vmem:[%s1 + $0x4b0] sm:$0xff]
  %v167 = vld [vmem:[%s1 + $0x4b8] sm:$0xff]
  %v168 = vld [vmem:[%s1 + $0x4c0] sm:$0xff]
  %v169 = vld [vmem:[%s1 + $0x4c8] sm:$0xff]
  %v170 = vld [vmem:[%s1 + $0x4d0] sm:$0xff]
  %v171 = vld [vmem:[%s1 + $0x4d8] sm:$0xff]
  %v172 = vld [vmem:[%s1 + $0x4e0] sm:$0xff]
  %v173 = vld [vmem:[%s1 + $0x4e8] sm:$0xff]
  %v174 = vld [vmem:[%s1 + $0x4f0] sm:$0xff]
  %v175 = vld [vmem:[%s1 + $0x4f8] sm:$0xff]
  %v176 = vld [vmem:[%s1 + $0x500] sm:$0xff]
  %v177 = vld [vmem:[%s1 + $0x508] sm:$0xff]
  %v178 = vld [vmem:[%s1 + $0x510] sm:$0xff]
  %v179 = vld [vmem:[%s1 + $0x518] sm:$0xff]
  %v180 = vld [vmem:[%s1 + $0x520] sm:$0xff]
  %v181 = vld [vmem:[%s1 + $0x528] sm:$0xff]
  %v182 = vld [vmem:[%s1 + $0x530] sm:$0xff]
  %v183 = vld [vmem:[%s1 + $0x538] sm:$0xff]
  %v184 = vld [vmem:[%s1 + $0x540] sm:$0xff]
  %v185 = vld [vmem:[%s1 + $0x548] sm:$0xff]
  %v186 = vld [vmem:[%s1 + $0x550] sm:$0xff]
  %v187 = vld [vmem:[%s1 + $0x558] sm:$0xff]
  %v188 = vld [vmem:[%s1 + $0x560] sm:$0xff]
  %v189 = vld [vmem:[%s1 + $0x568] sm:$0xff]
  %v190 = vld [vmem:[%s1 + $0x570] sm:$0xff]
  %v191 = vld [vmem:[%s1 + $0x578] sm:$0xff]
  %v192 = vld [vmem:[%s1 + $0x580] sm:$0xff]
  %v193 = vld [vmem:[%s1 + $0x588] sm:$0xff]
  %v194 = vld [vmem:[%s1 + $0x590] sm:$0xff]
  %v195 = vld [vmem:[%s1 + $0x598] sm:$0xff]
  %v196 = vld [vmem:[%s1 + $0x5a0] sm:$0xff]
  %v197 = vld [vmem:[%s1 + $0x5a8] sm:$0xff]
  %v198 = vld [vmem:[%s1 + $0x5b0] sm:$0xff]
  %v199 = vld [vmem:[%s1 + $0x5b8] sm:$0xff]
  %v200 = vld [vmem:[%s1 + $0x5c0] sm:$0xff]
  %v201 = vld [vmem:[%s1 + $0x5c8] sm:$0xff]
  %v202 = vld [vmem:[%s1 + $0x5d0] sm:$0xff]
  %v203 = vld [vmem:[%s1 + $0x5d8] sm:$0xff]
  %v204 = vld [vmem:[%s1 + $0x5e0] sm:$0xff]
  %v205 = vld [vmem:[%s1 + $0x5e8] sm:$0xff]
  %v206 = vld [vmem:[%s1 + $0x5f0] sm:$0xff]
  %v207 = vld [vmem:[%s1 + $0x5f8] sm:$0xff]
  %v208 = vld [vmem:[%s1 + $0x600] sm:$0xff]
  %v209 = vld [vmem:[%s1 + $0x608] sm:$0xff]
  %v210 = vld [vmem:[%s1 + $0x610] sm:$0xff]
  %v211 = vld [vmem:[%s1 + $0x618] sm:$0xff]
  %v212 = vld [vmem:[%s1 + $0x620] sm:$0xff]
  %v213 = vld [vmem:[%s1 + $0x628] sm:$0xff]
  %v214 = vld [vmem:[%s1 + $0x630] sm:$0xff]
  %v215 = vld [vmem:[%s1 + $0x638] sm:$0xff]
  %v216 = vld [vmem:[%s1 + $0x640] sm:$0xff]
  %v217 = vld [vmem:[%s1 + $0x648] sm:$0xff]
  %v218 = vld [vmem:[%s1 + $0x650] sm:$0xff]
  %v219 = vld [vmem:[%s1 + $0x658] sm:$0xff]
  %v220 = vld [vmem:[%s1 + $0x660] sm:$0xff]
  %v221 = vld [vmem:[%s1 + $0x668] sm:$0xff]
  %v222 = vld [vmem:[%s1 + $0x670] sm:$0xff]
  %v223 = vld [vmem:[%s1 + $0x678] sm:$0xff]
  %v224 = vld [vmem:[%s1 + $0x680] sm:$0xff]
  %v225 = vld [vmem:[%s1 + $0x688] sm:$0xff]
  %v226 = vld [vmem:[%s1 + $0x690] sm:$0xff]
  %v227 = vld [vmem:[%s1 + $0x698] sm:$0xff]
  %v228 = vld [vmem:[%s1 + $0x6a0] sm:$0xff]
  %v229 = vld [vmem:[%s1 + $0x6a8] sm:$0xff]
  %v230 = vld [vmem:[%s1 + $0x6b0] sm:$0xff]
  %v231 = vld [vmem:[%s1 + $0x6b8] sm:$0xff]
  %v232 = vld [vmem:[%s1 + $0x6c0] sm:$0xff]
  %v233 = vld [vmem:[%s1 + $0x6c8] sm:$0xff]
  %v234 = vld [vmem:[%s1 + $0x6d0] sm:$0xff]
  %v235 = vld [vmem:[%s1 + $0x6d8] sm:$0xff]
  %v236 = vld [vmem:[%s1 + $0x6e0] sm:$0xff]
  %v237 = vld [vmem:[%s1 + $0x6e8] sm:$0xff]
  %v238 = vld [vmem:[%s1 + $0x6f0] sm:$0xff]
  %v239 = vld [vmem:[%s1 + $0x6f8] sm:$0xff]
  %v240 = vld [vmem:[%s1 + $0x700] sm:$0xff]
  %v241 = vld [vmem:[%s1 + $0x708] sm:$0xff]
  %v242 = vld [vmem:[%s1 + $0x710] sm:$0xff]
  %v243 = vld [vmem:[%s1 + $0x718] sm:$0xff]
  %v244 = vld [vmem:[%s1 + $0x720] sm:$0xff]
  %v245 = vld [vmem:[%s1 + $0x728] sm:$0xff]
  %v246 = vld [vmem:[%s1 + $0x730] sm:$0xff]
  %v247 = vld [vmem:[%s1 + $0x738] sm:$0xff]
  %v248 = vld [vmem:[%s1 + $0x740] sm:$0xff]
  %v249 = vld [vmem:[%s1 + $0x748] sm:$0xff]
  %v250 = vld [vmem:[%s1 + $0x750] sm:$0xff]
  %v251 = vld [vmem:[%s1 + $0x758] sm:$0xff]
  %v252 = vld [vmem:[%s1 + $0x760] sm:$0xff]
  %v253 = vld [vmem:[%s1 + $0x768] sm:$0xff]
  %v254 = vld [vmem:[%s1 + $0x770] sm:$0xff]
  %v255 = vld [vmem:[%s1 + $0x778] sm:$0xff]
  %v256 = vld [vmem:[%s1 + $0x780] sm:$0xff]
  %v257 = vld [vmem:[%s1 + $0x788] sm:$0xff]
  %v258 = vld [vmem:[%s1 + $0x790] sm:$0xff]
  %v259 = vld [vmem:[%s1 + $0x798] sm:$0xff]
  %v260 = vld [vmem:[%s1 + $0x7a0] sm:$0xff]
  %v261 = vld [vmem:[%s1 + $0x7a8] sm:$0xff]
  %v262 = vld [vmem:[%s1 + $0x7b0] sm:$0xff]
  %v263 = vld [vmem:[%s1 + $0x7b8] sm:$0xff]
  %v264 = vld [vmem:[%s1 + $0x7c0] sm:$0xff]
  %v265 = vld [vmem:[%s1 + $0x7c8] sm:$0xff]
  %v266 = vld [vmem:[%s1 + $0x7d0] sm:$0xff]
  %v267 = vld [vmem:[%s1 + $0x7d8] sm:$0xff]
  %v268 = vld [vmem:[%s1 + $0x7e0] sm:$0xff]
  %v269 = vld [vmem:[%s1 + $0x7e8] sm:$0xff]
  %v270 = vld [vmem:[%s1 + $0x7f0] sm:$0xff]
  %v271 = vld [vmem:[%s1 + $0x7f8] sm:$0xff]
  %v272 = vld [vmem:[%s1 + $0x800] sm:$0xff]
  %v273 = vld [vmem:[%s1 + $0x808] sm:$0xff]
  %v274 = vld [vmem:[%s1 + $0x810] sm:$0xff]
  %v275 = vld [vmem:[%s1 + $0x818] sm:$0xff]
  %v276 = vld [vmem:[%s1 + $0x820] sm:$0xff]
  %v277 = vld [vmem:[%s1 + $0x828] sm:$0xff]
  %v278 = vld [vmem:[%s1 + $0x830] sm:$0xff]
  %v279 = vld [vmem:[%s1 + $0x838] sm:$0xff]
  %v280 = vld [vmem:[%s1 + $0x840] sm:$0xff]
  %v281 = vld [vmem:[%s1 + $0x848] sm:$0xff]
  %v282 = vld [vmem:[%s1 + $0x850] sm:$0xff]
  %v283 = vld [vmem:[%s1 + $0x858] sm:$0xff]
  %v284 = vld [vmem:[%s1 + $0x860] sm:$0xff]
  %v285 = vld [vmem:[%s1 + $0x868] sm:$0xff]
  %v286 = vld [vmem:[%s1 + $0x870] sm:$0xff]
  %v287 = vld [vmem:[%s1 + $0x878] sm:$0xff]
  %v288 = vld [vmem:[%s1 + $0x880] sm:$0xff]
  %v289 = vld [vmem:[%s1 + $0x888] sm:$0xff]
  %v290 = vld [vmem:[%s1 + $0x890] sm:$0xff]
  %v291 = vld [vmem:[%s1 + $0x898] sm:$0xff]
  %v292 = vld [vmem:[%s1 + $0x8a0] sm:$0xff]
  %v293 = vld [vmem:[%s1 + $0x8a8] sm:$0xff]
  %v294 = vld [vmem:[%s1 + $0x8b0] sm:$0xff]
  %v295 = vld [vmem:[%s1 + $0x8b8] sm:$0xff]
  %v296 = vld [vmem:[%s1 + $0x8c0] sm:$0xff]
  %v297 = vld [vmem:[%s1 + $0x8c8] sm:$0xff]
  %v298 = vld [vmem:[%s1 + $0x8d0] sm:$0xff]
  %v299 = vld [vmem:[%s1 + $0x8d8] sm:$0xff]
  %v300 = vld [vmem:[%s1 + $0x8e0] sm:$0xff]
  %v301 = vld [vmem:[%s1 + $0x8e8] sm:$0xff]
  %v302 = vld [vmem:[%s1 + $0x8f0] sm:$0xff]
  %v303 = vld [vmem:[%s1 + $0x8f8] sm:$0xff]
  %v304 = vld [vmem:[%s1 + $0x900] sm:$0xff]
  %v305 = vld [vmem:[%s1 + $0x908] sm:$0xff]
  %v306 = vld [vmem:[%s1 + $0x910] sm:$0xff]
  %v307 = vld [vmem:[%s1 + $0x918] sm:$0xff]
  %v308 = vld [vmem:[%s1 + $0x920] sm:$0xff]
  %v309 = vld [vmem:[%s1 + $0x928] sm:$0xff]
  %v310 = vld [vmem:[%s1 + $0x930] sm:$0xff]
  %v311 = vld [vmem:[%s1 + $0x938] sm:$0xff]
  %v312 = vld [vmem:[%s1 + $0x940] sm:$0xff]
  %v313 = vld [vmem:[%s1 + $0x948] sm:$0xff]
  %v314 = vld [vmem:[%s1 + $0x950] sm:$0xff]
  %v315 = vld [vmem:[%s1 + $0x958] sm:$0xff]
  %v316 = vld [vmem:[%s1 + $0x960] sm:$0xff]
  %v317 = vld [vmem:[%s1 + $0x968] sm:$0xff]
  %v318 = vld [vmem:[%s1 + $0x970] sm:$0xff]
  %v319 = vld [vmem:[%s1 + $0x978] sm:$0xff]
  %v320 = vld [vmem:[%s1 + $0x980] sm:$0xff]
  %v321 = vld [vmem:[%s1 + $0x988] sm:$0xff]
  %v322 = vld [vmem:[%s1 + $0x990] sm:$0xff]
  %v323 = vld [vmem:[%s1 + $0x998] sm:$0xff]
  %v324 = vld [vmem:[%s1 + $0x9a0] sm:$0xff]
  %v325 = vld [vmem:[%s1 + $0x9a8] sm:$0xff]
  %v326 = vld [vmem:[%s1 + $0x9b0] sm:$0xff]
  %v327 = vld [vmem:[%s1 + $0x9b8] sm:$0xff]
  %v328 = vld [vmem:[%s1 + $0x9c0] sm:$0xff]
  %v329 = vld [vmem:[%s1 + $0x9c8] sm:$0xff]
  %v330 = vld [vmem:[%s1 + $0x9d0] sm:$0xff]
  %v331 = vld [vmem:[%s1 + $0x9d8] sm:$0xff]
  %v332 = vld [vmem:[%s1 + $0x9e0] sm:$0xff]
  %v333 = vld [vmem:[%s1 + $0x9e8] sm:$0xff]
  %v334 = vld [vmem:[%s1 + $0x9f0] sm:$0xff]
  %v335 = vld [vmem:[%s1 + $0x9f8] sm:$0xff]
  %v336 = vld [vmem:[%s1 + $0xa00] sm:$0xff]
  %v337 = vld [vmem:[%s1 + $0xa08] sm:$0xff]
  %v338 = vld [vmem:[%s1 + $0xa10] sm:$0xff]
  %v339 = vld [vmem:[%s1 + $0xa18] sm:$0xff]
  %v340 = vld [vmem:[%s1 + $0xa20] sm:$0xff]
  %v341 = vld [vmem:[%s1 + $0xa28] sm:$0xff]
  %v342 = vld [vmem:[%s1 + $0xa30] sm:$0xff]
  %v343 = vld [vmem:[%s1 + $0xa38] sm:$0xff]
  %v344 = vld [vmem:[%s1 + $0xa40] sm:$0xff]
  %v345 = vld [vmem:[%s1 + $0xa48] sm:$0xff]
  %v346 = vld [vmem:[%s1 + $0xa50] sm:$0xff]
  %v347 = vld [vmem:[%s1 + $0xa58] sm:$0xff]
  %v348 = vld [vmem:[%s1 + $0xa60] sm:$0xff]
  %v349 = vld [vmem:[%s1 + $0xa68] sm:$0xff]
  %v350 = vld [vmem:[%s1 + $0xa70] sm:$0xff]
  %v351 = vld [vmem:[%s1 + $0xa78] sm:$0xff]
  %v352 = vld [vmem:[%s1 + $0xa80] sm:$0xff]
  %v353 = vld [vmem:[%s1 + $0xa88] sm:$0xff]
  %v354 = vld [vmem:[%s1 + $0xa90] sm:$0xff]
  %v355 = vld [vmem:[%s1 + $0xa98] sm:$0xff]
  %v356 = vld [vmem:[%s1 + $0xaa0] sm:$0xff]
  %v357 = vld [vmem:[%s1 + $0xaa8] sm:$0xff]
  %v358 = vld [vmem:[%s1 + $0xab0] sm:$0xff]
  %v359 = vld [vmem:[%s1 + $0xab8] sm:$0xff]
  %v360 = vld [vmem:[%s1 + $0xac0] sm:$0xff]
  %v361 = vld [vmem:[%s1 + $0xac8] sm:$0xff]
  %v362 = vld [vmem:[%s1 + $0xad0] sm:$0xff]
  %v363 = vld [vmem:[%s1 + $0xad8] sm:$0xff]
  %v364 = vld [vmem:[%s1 + $0xae0] sm:$0xff]
  %v365 = vld [vmem:[%s1 + $0xae8] sm:$0xff]
  %v366 = vld [vmem:[%s1 + $0xaf0] sm:$0xff]
  %v367 = vld [vmem:[%s1 + $0xaf8] sm:$0xff]
  %v368 = vld [vmem:[%s1 + $0xb00] sm:$0xff]
  %v369 = vld [vmem:[%s1 + $0xb08] sm:$0xff]
  %v370 = vld [vmem:[%s1 + $0xb10] sm:$0xff]
  %v371 = vld [vmem:[%s1 + $0xb18] sm:$0xff]
  %v372 = vld [vmem:[%s1 + $0xb20] sm:$0xff]
  %v373 = vld [vmem:[%s1 + $0xb28] sm:$0xff]
  %v374 = vld [vmem:[%s1 + $0xb30] sm:$0xff]
  %v375 = vld [vmem:[%s1 + $0xb38] sm:$0xff]
  %v376 = vld [vmem:[%s1 + $0xb40] sm:$0xff]
  %v377 = vld [vmem:[%s1 + $0xb48] sm:$0xff]
  %v378 = vld [vmem:[%s1 + $0xb50] sm:$0xff]
  %v379 = vld [vmem:[%s1 + $0xb58] sm:$0xff]
  %v380 = vld [vmem:[%s1 + $0xb60] sm:$0xff]
  %v381 = vld [vmem:[%s1 + $0xb68] sm:$0xff]
  %v382 = vld [vmem:[%s1 + $0xb70] sm:$0xff]
  %v383 = vld [vmem:[%s1 + $0xb78] sm:$0xff]
  %v384 = vld [vmem:[%s1 + $0xb80] sm:$0xff]
  %v385 = vld [vmem:[%s1 + $0xb88] sm:$0xff]
  %v386 = vld [vmem:[%s1 + $0xb90] sm:$0xff]
  %v387 = vld [vmem:[%s1 + $0xb98] sm:$0xff]
  %v388 = vld [vmem:[%s1 + $0xba0] sm:$0xff]
  %v389 = vld [vmem:[%s1 + $0xba8] sm:$0xff]
  %v390 = vld [vmem:[%s1 + $0xbb0] sm:$0xff]
  %v391 = vld [vmem:[%s1 + $0xbb8] sm:$0xff]
  %v392 = vld [vmem:[%s1 + $0xbc0] sm:$0xff]
  %v393 = vld [vmem:[%s1 + $0xbc8] sm:$0xff]
  %v394 = vld [vmem:[%s1 + $0xbd0] sm:$0xff]
  %v395 = vld [vmem:[%s1 + $0xbd8] sm:$0xff]
  %v396 = vld [vmem:[%s1 + $0xbe0] sm:$0xff]
  %v397 = vld [vmem:[%s1 + $0xbe8] sm:$0xff]
  %v398 = vld [vmem:[%s1 + $0xbf0] sm:$0xff]
  %v399 = vld [vmem:[%s1 + $0xbf8] sm:$0xff]
  %v400 = vld [vmem:[%s1 + $0xc00] sm:$0xff]
  %v401 = vld [vmem:[%s1 + $0xc08] sm:$0xff]
  %v402 = vld [vmem:[%s1 + $0xc10] sm:$0xff]
  %v403 = vld [vmem:[%s1 + $0xc18] sm:$0xff]
  %v404 = vld [vmem:[%s1 + $0xc20] sm:$0xff]
  %v405 = vld [vmem:[%s1 + $0xc28] sm:$0xff]
  %v406 = vld [vmem:[%s1 + $0xc30] sm:$0xff]
  %v407 = vld [vmem:[%s1 + $0xc38] sm:$0xff]
  %v408 = vld [vmem:[%s1 + $0xc40] sm:$0xff]
  %v409 = vld [vmem:[%s1 + $0xc48] sm:$0xff]
  %v410 = vld [vmem:[%s1 + $0xc50] sm:$0xff]
  %v411 = vld [vmem:[%s1 + $0xc58] sm:$0xff]
  %v412 = vld [vmem:[%s1 + $0xc60] sm:$0xff]
  %v413 = vld [vmem:[%s1 + $0xc68] sm:$0xff]
  %v414 = vld [vmem:[%s1 + $0xc70] sm:$0xff]
  %v415 = vld [vmem:[%s1 + $0xc78] sm:$0xff]
  %v416 = vld [vmem:[%s1 + $0xc80] sm:$0xff]
  %v417 = vld [vmem:[%s1 + $0xc88] sm:$0xff]
  %v418 = vld [vmem:[%s1 + $0xc90] sm:$0xff]
  %v419 = vld [vmem:[%s1 + $0xc98] sm:$0xff]
  %v420 = vld [vmem:[%s1 + $0xca0] sm:$0xff]
  %v421 = vld [vmem:[%s1 + $0xca8] sm:$0xff]
  %v422 = vld [vmem:[%s1 + $0xcb0] sm:$0xff]
  %v423 = vld [vmem:[%s1 + $0xcb8] sm:$0xff]
  %v424 = vld [vmem:[%s1 + $0xcc0] sm:$0xff]
  %v425 = vld [vmem:[%s1 + $0xcc8] sm:$0xff]
  %v426 = vld [vmem:[%s1 + $0xcd0] sm:$0xff]
  %v427 = vld [vmem:[%s1 + $0xcd8] sm:$0xff]
  %v428 = vld [vmem:[%s1 + $0xce0] sm:$0xff]
  %v429 = vld [vmem:[%s1 + $0xce8] sm:$0xff]
  %v430 = vld [vmem:[%s1 + $0xcf0] sm:$0xff]
  %v431 = vld [vmem:[%s1 + $0xcf8] sm:$0xff]
  %v432 = vld [vmem:[%s1 + $0xd00] sm:$0xff]
  %v433 = vld [vmem:[%s1 + $0xd08] sm:$0xff]
  %v434 = vld [vmem:[%s1 + $0xd10] sm:$0xff]
  %v435 = vld [vmem:[%s1 + $0xd18] sm:$0xff]
  %v436 = vld [vmem:[%s1 + $0xd20] sm:$0xff]
  %v437 = vld [vmem:[%s1 + $0xd28] sm:$0xff]
  %v438 = vld [vmem:[%s1 + $0xd30] sm:$0xff]
  %v439 = vld [vmem:[%s1 + $0xd38] sm:$0xff]
  %v440 = vld [vmem:[%s1 + $0xd40] sm:$0xff]
  %v441 = vld [vmem:[%s1 + $0xd48] sm:$0xff]
  %v442 = vld [vmem:[%s1 + $0xd50] sm:$0xff]
  %v443 = vld [vmem:[%s1 + $0xd58] sm:$0xff]
  %v444 = vld [vmem:[%s1 + $0xd60] sm:$0xff]
  %v445 = vld [vmem:[%s1 + $0xd68] sm:$0xff]
  %v446 = vld [vmem:[%s1 + $0xd70] sm:$0xff]
  %v447 = vld [vmem:[%s1 + $0xd78] sm:$0xff]
  %v448 = vld [vmem:[%s1 + $0xd80] sm:$0xff]
  %v449 = vld [vmem:[%s1 + $0xd88] sm:$0xff]
  %v450 = vld [vmem:[%s1 + $0xd90] sm:$0xff]
  %v451 = vld [vmem:[%s1 + $0xd98] sm:$0xff]
  %v452 = vld [vmem:[%s1 + $0xda0] sm:$0xff]
  %v453 = vld [vmem:[%s1 + $0xda8] sm:$0xff]
  %v454 = vld [vmem:[%s1 + $0xdb0] sm:$0xff]
  %v455 = vld [vmem:[%s1 + $0xdb8] sm:$0xff]
  %v456 = vld [vmem:[%s1 + $0xdc0] sm:$0xff]
  %v457 = vld [vmem:[%s1 + $0xdc8] sm:$0xff]
  %v458 = vld [vmem:[%s1 + $0xdd0] sm:$0xff]
  %v459 = vld [vmem:[%s1 + $0xdd8] sm:$0xff]
  %v460 = vld [vmem:[%s1 + $0xde0] sm:$0xff]
  %v461 = vld [vmem:[%s1 + $0xde8] sm:$0xff]
  %v462 = vld [vmem:[%s1 + $0xdf0] sm:$0xff]
  %v463 = vld [vmem:[%s1 + $0xdf8] sm:$0xff]
  %v464 = vld [vmem:[%s1 + $0xe00] sm:$0xff]
  %v465 = vld [vmem:[%s1 + $0xe08] sm:$0xff]
  %v466 = vld [vmem:[%s1 + $0xe10] sm:$0xff]
  %v467 = vld [vmem:[%s1 + $0xe18] sm:$0xff]
  %v468 = vld [vmem:[%s1 + $0xe20] sm:$0xff]
  %v469 = vld [vmem:[%s1 + $0xe28] sm:$0xff]
  %v470 = vld [vmem:[%s1 + $0xe30] sm:$0xff]
  %v471 = vld [vmem:[%s1 + $0xe38] sm:$0xff]
  %v472 = vld [vmem:[%s1 + $0xe40] sm:$0xff]
  %v473 = vld [vmem:[%s1 + $0xe48] sm:$0xff]
  %v474 = vld [vmem:[%s1 + $0xe50] sm:$0xff]
  %v475 = vld [vmem:[%s1 + $0xe58] sm:$0xff]
  %v476 = vld [vmem:[%s1 + $0xe60] sm:$0xff]
  %v477 = vld [vmem:[%s1 + $0xe68] sm:$0xff]
  %v478 = vld [vmem:[%s1 + $0xe70] sm:$0xff]
  %v479 = vld [vmem:[%s1 + $0xe78] sm:$0xff]
  %v480 = vld [vmem:[%s1 + $0xe80] sm:$0xff]
  %v481 = vld [vmem:[%s1 + $0xe88] sm:$0xff]
  %v482 = vld [vmem:[%s1 + $0xe90] sm:$0xff]
  %v483 = vld [vmem:[%s1 + $0xe98] sm:$0xff]
  %v484 = vld [vmem:[%s1 + $0xea0] sm:$0xff]
  %v485 = vld [vmem:[%s1 + $0xea8] sm:$0xff]
  %v486 = vld [vmem:[%s1 + $0xeb0] sm:$0xff]
  %v487 = vld [vmem:[%s1 + $0xeb8] sm:$0xff]
  %v488 = vld [vmem:[%s1 + $0xec0] sm:$0xff]
  %v489 = vld [vmem:[%s1 + $0xec8] sm:$0xff]
  %v490 = vld [vmem:[%s1 + $0xed0] sm:$0xff]
  %v491 = vld [vmem:[%s1 + $0xed8] sm:$0xff]
  %v492 = vld [vmem:[%s1 + $0xee0] sm:$0xff]
  %v493 = vld [vmem:[%s1 + $0xee8] sm:$0xff]
  %v494 = vld [vmem:[%s1 + $0xef0] sm:$0xff]
  %v495 = vld [vmem:[%s1 + $0xef8] sm:$0xff]
  %v496 = vld [vmem:[%s1 + $0xf00] sm:$0xff]
  %v497 = vld [vmem:[%s1 + $0xf08] sm:$0xff]
  %v498 = vld [vmem:[%s1 + $0xf10] sm:$0xff]
  %v499 = vld [vmem:[%s1 + $0xf18] sm:$0xff]
  %v500 = vld [vmem:[%s1 + $0xf20] sm:$0xff]
  %v501 = vld [vmem:[%s1 + $0xf28] sm:$0xff]
  %v502 = vld [vmem:[%s1 + $0xf30] sm:$0xff]
  %v503 = vld [vmem:[%s1 + $0xf38] sm:$0xff]
  %v504 = vld [vmem:[%s1 + $0xf40] sm:$0xff]
  %v505 = vld [vmem:[%s1 + $0xf48] sm:$0xff]
  %v506 = vld [vmem:[%s1 + $0xf50] sm:$0xff]
  %v507 = vld [vmem:[%s1 + $0xf58] sm:$0xff]
  %v508 = vld [vmem:[%s1 + $0xf60] sm:$0xff]
  %v509 = vld [vmem:[%s1 + $0xf68] sm:$0xff]
  %v510 = vld [vmem:[%s1 + $0xf70] sm:$0xff]
  %v511 = vld [vmem:[%s1 + $0xf78] sm:$0xff]
  %v512 = vld [vmem:[%s1 + $0xf80] sm:$0xff]
  %v513 = vld [vmem:[%s1 + $0xf88] sm:$0xff]
  %v514 = vld [vmem:[%s1 + $0xf90] sm:$0xff]
  %v515 = vld [vmem:[%s1 + $0xf98] sm:$0xff]
  %v516 = vld [vmem:[%s1 + $0xfa0] sm:$0xff]
  %v517 = vld [vmem:[%s1 + $0xfa8] sm:$0xff]
  %v518 = vld [vmem:[%s1 + $0xfb0] sm:$0xff]
  %v519 = vld [vmem:[%s1 + $0xfb8] sm:$0xff]
  %v520 = vld [vmem:[%s1 + $0xfc0] sm:$0xff]
  %v521 = vld [vmem:[%s1 + $0xfc8] sm:$0xff]
  %v522 = vld [vmem:[%s1 + $0xfd0] sm:$0xff]
  %v523 = vld [vmem:[%s1 + $0xfd8] sm:$0xff]
  %v524 = vld [vmem:[%s1 + $0xfe0] sm:$0xff]
  %v525 = vld [vmem:[%s1 + $0xfe8] sm:$0xff]
  %v526 = vld [vmem:[%s1 + $0xff0] sm:$0xff]
  %v527 = vld [vmem:[%s1 + $0xff8] sm:$0xff]
  %v528 = vld [vmem:[%s1 + $0x1000] sm:$0xff]
  %v529 = vld [vmem:[%s1 + $0x1008] sm:$0xff]
  %v530 = vld [vmem:[%s1 + $0x1010] sm:$0xff]
  %v531 = vld [vmem:[%s1 + $0x1018] sm:$0xff]
  %v532 = vld [vmem:[%s1 + $0x1020] sm:$0xff]
  %v533 = vld [vmem:[%s1 + $0x1028] sm:$0xff]
  %v534 = vld [vmem:[%s1 + $0x1030] sm:$0xff]
  %v535 = vld [vmem:[%s1 + $0x1038] sm:$0xff]
  %v536 = vld [vmem:[%s1 + $0x1040] sm:$0xff]
  %v537 = vld [vmem:[%s1 + $0x1048] sm:$0xff]
  %v538 = vld [vmem:[%s1 + $0x1050] sm:$0xff]
  %v539 = vld [vmem:[%s1 + $0x1058] sm:$0xff]
  %v540 = vld [vmem:[%s1 + $0x1060] sm:$0xff]
  %v541 = vld [vmem:[%s1 + $0x1068] sm:$0xff]
  %v542 = vld [vmem:[%s1 + $0x1070] sm:$0xff]
  %v543 = vld [vmem:[%s1 + $0x1078] sm:$0xff]
  %v544 = vld [vmem:[%s1 + $0x1080] sm:$0xff]
  %v545 = vld [vmem:[%s1 + $0x1088] sm:$0xff]
  %v546 = vld [vmem:[%s1 + $0x1090] sm:$0xff]
  %v547 = vld [vmem:[%s1 + $0x1098] sm:$0xff]
  %v548 = vld [vmem:[%s1 + $0x10a0] sm:$0xff]
  %v549 = vld [vmem:[%s1 + $0x10a8] sm:$0xff]
  %v550 = vld [vmem:[%s1 + $0x10b0] sm:$0xff]
  %v551 = vld [vmem:[%s1 + $0x10b8] sm:$0xff]
  %v552 = vld [vmem:[%s1 + $0x10c0] sm:$0xff]
  %v553 = vld [vmem:[%s1 + $0x10c8] sm:$0xff]
  %v554 = vld [vmem:[%s1 + $0x10d0] sm:$0xff]
  %v555 = vld [vmem:[%s1 + $0x10d8] sm:$0xff]
  %v556 = vld [vmem:[%s1 + $0x10e0] sm:$0xff]
  %v557 = vld [vmem:[%s1 + $0x10e8] sm:$0xff]
  %v558 = vld [vmem:[%s1 + $0x10f0] sm:$0xff]
  %v559 = vld [vmem:[%s1 + $0x10f8] sm:$0xff]
  %v560 = vld [vmem:[%s1 + $0x1100] sm:$0xff]
  %v561 = vld [vmem:[%s1 + $0x1108] sm:$0xff]
  %v562 = vld [vmem:[%s1 + $0x1110] sm:$0xff]
  %v563 = vld [vmem:[%s1 + $0x1118] sm:$0xff]
  %v564 = vld [vmem:[%s1 + $0x1120] sm:$0xff]
  %v565 = vld [vmem:[%s1 + $0x1128] sm:$0xff]
  %v566 = vld [vmem:[%s1 + $0x1130] sm:$0xff]
  %v567 = vld [vmem:[%s1 + $0x1138] sm:$0xff]
  %v568 = vld [vmem:[%s1 + $0x1140] sm:$0xff]
  %v569 = vld [vmem:[%s1 + $0x1148] sm:$0xff]
  %v570 = vld [vmem:[%s1 + $0x1150] sm:$0xff]
  %v571 = vld [vmem:[%s1 + $0x1158] sm:$0xff]
  %v572 = vld [vmem:[%s1 + $0x1160] sm:$0xff]
  %v573 = vld [vmem:[%s1 + $0x1168] sm:$0xff]
  %v574 = vld [vmem:[%s1 + $0x1170] sm:$0xff]
  %v575 = vld [vmem:[%s1 + $0x1178] sm:$0xff]
  %v576 = vld [vmem:[%s1 + $0x1180] sm:$0xff]
  %v577 = vld [vmem:[%s1 + $0x1188] sm:$0xff]
  %v578 = vld [vmem:[%s1 + $0x1190] sm:$0xff]
  %v579 = vld [vmem:[%s1 + $0x1198] sm:$0xff]
  %v580 = vld [vmem:[%s1 + $0x11a0] sm:$0xff]
  %v581 = vld [vmem:[%s1 + $0x11a8] sm:$0xff]
  %v582 = vld [vmem:[%s1 + $0x11b0] sm:$0xff]
  %v583 = vld [vmem:[%s1 + $0x11b8] sm:$0xff]
  %v584 = vld [vmem:[%s1 + $0x11c0] sm:$0xff]
  %v585 = vld [vmem:[%s1 + $0x11c8] sm:$0xff]
  %v586 = vld [vmem:[%s1 + $0x11d0] sm:$0xff]
  %v587 = vld [vmem:[%s1 + $0x11d8] sm:$0xff]
  %v588 = vld [vmem:[%s1 + $0x11e0] sm:$0xff]
  %v589 = vld [vmem:[%s1 + $0x11e8] sm:$0xff]
  %v590 = vld [vmem:[%s1 + $0x11f0] sm:$0xff]
  %v591 = vld [vmem:[%s1 + $0x11f8] sm:$0xff]
  %v592 = vld [vmem:[%s1 + $0x1200] sm:$0xff]
  %v593 = vld [vmem:[%s1 + $0x1208] sm:$0xff]
  %v594 = vld [vmem:[%s1 + $0x1210] sm:$0xff]
  %v595 = vld [vmem:[%s1 + $0x1218] sm:$0xff]
  %v596 = vld [vmem:[%s1 + $0x1220] sm:$0xff]
  %v597 = vld [vmem:[%s1 + $0x1228] sm:$0xff]
  %v598 = vld [vmem:[%s1 + $0x1230] sm:$0xff]
  %v599 = vld [vmem:[%s1 + $0x1238] sm:$0xff]
  %v600 = vld [vmem:[%s1 + $0x1240] sm:$0xff]
  %v601 = vld [vmem:[%s1 + $0x1248] sm:$0xff]
  %v602 = vld [vmem:[%s1 + $0x1250] sm:$0xff]
  %v603 = vld [vmem:[%s1 + $0x1258] sm:$0xff]
  %v604 = vld [vmem:[%s1 + $0x1260] sm:$0xff]
  %v605 = vld [vmem:[%s1 + $0x1268] sm:$0xff]
  %v606 = vld [vmem:[%s1 + $0x1270] sm:$0xff]
  %v607 = vld [vmem:[%s1 + $0x1278] sm:$0xff]
  %v608 = vld [vmem:[%s1 + $0x1280] sm:$0xff]
  %v609 = vld [vmem:[%s1 + $0x1288] sm:$0xff]
  %v610 = vld [vmem:[%s1 + $0x1290] sm:$0xff]
  %v611 = vld [vmem:[%s1 + $0x1298] sm:$0xff]
  %v612 = vld [vmem:[%s1 + $0x12a0] sm:$0xff]
  %v613 = vld [vmem:[%s1 + $0x12a8] sm:$0xff]
  %v614 = vld [vmem:[%s1 + $0x12b0] sm:$0xff]
  %v615 = vld [vmem:[%s1 + $0x12b8] sm:$0xff]
  %v616 = vld [vmem:[%s1 + $0x12c0] sm:$0xff]
  %v617 = vld [vmem:[%s1 + $0x12c8] sm:$0xff]
  %v618 = vld [vmem:[%s1 + $0x12d0] sm:$0xff]
  %v619 = vld [vmem:[%s1 + $0x12d8] sm:$0xff]
  %v620 = vld [vmem:[%s1 + $0x12e0] sm:$0xff]
  %v621 = vld [vmem:[%s1 + $0x12e8] sm:$0xff]
  %v622 = vld [vmem:[%s1 + $0x12f0] sm:$0xff]
  %v623 = vld [vmem:[%s1 + $0x12f8] sm:$0xff]
  %v624 = vld [vmem:[%s1 + $0x1300] sm:$0xff]
  %v625 = vld [vmem:[%s1 + $0x1308] sm:$0xff]
  %v626 = vld [vmem:[%s1 + $0x1310] sm:$0xff]
  %v627 = vld [vmem:[%s1 + $0x1318] sm:$0xff]
  %v628 = vld [vmem:[%s1 + $0x1320] sm:$0xff]
  %v629 = vld [vmem:[%s1 + $0x1328] sm:$0xff]
  %v630 = vld [vmem:[%s1 + $0x1330] sm:$0xff]
  %v631 = vld [vmem:[%s1 + $0x1338] sm:$0xff]
  %v632 = vld [vmem:[%s1 + $0x1340] sm:$0xff]
  %v633 = vld [vmem:[%s1 + $0x1348] sm:$0xff]
  %v634 = vld [vmem:[%s1 + $0x1350] sm:$0xff]
  %v635 = vld [vmem:[%s1 + $0x1358] sm:$0xff]
  %v636 = vld [vmem:[%s1 + $0x1360] sm:$0xff]
  %v637 = vld [vmem:[%s1 + $0x1368] sm:$0xff]
  %v638 = vld [vmem:[%s1 + $0x1370] sm:$0xff]
  %v639 = vld [vmem:[%s1 + $0x1378] sm:$0xff]
  %v640 = vld [vmem:[%s1 + $0x1380] sm:$0xff]
  %v641 = vld [vmem:[%s1 + $0x1388] sm:$0xff]
  %v642 = vld [vmem:[%s1 + $0x1390] sm:$0xff]
  %v643 = vld [vmem:[%s1 + $0x1398] sm:$0xff]
  %v644 = vld [vmem:[%s1 + $0x13a0] sm:$0xff]
  %v645 = vld [vmem:[%s1 + $0x13a8] sm:$0xff]
  %v646 = vld [vmem:[%s1 + $0x13b0] sm:$0xff]
  %v647 = vld [vmem:[%s1 + $0x13b8] sm:$0xff]
  %v648 = vld [vmem:[%s1 + $0x13c0] sm:$0xff]
  %v649 = vld [vmem:[%s1 + $0x13c8] sm:$0xff]
  %v650 = vld [vmem:[%s1 + $0x13d0] sm:$0xff]
  %v651 = vld [vmem:[%s1 + $0x13d8] sm:$0xff]
  %v652 = vld [vmem:[%s1 + $0x13e0] sm:$0xff]
  %v653 = vld [vmem:[%s1 + $0x13e8] sm:$0xff]
  %v654 = vld [vmem:[%s1 + $0x13f0] sm:$0xff]
  %v655 = vld [vmem:[%s1 + $0x13f8] sm:$0xff]
  %v656 = vld [vmem:[%s2] sm:$0xff]
  %v658 = vlaneseq
  %v659 = vshrl.u32 %v658, 7
  %v660 = vsub.s32 0, %v659
  %v661 = vrot.slane %v656, %v660
  %v662 = vlaneseq
  %v663 = vshrl.u32 %v662, 7
  %v664 = vsub.s32 1, %v663
  %v665 = vrot.slane %v656, %v664
  %v666 = vlaneseq
  %v667 = vshrl.u32 %v666, 7
  %v668 = vsub.s32 2, %v667
  %v669 = vrot.slane %v656, %v668
  %v670 = vlaneseq
  %v671 = vshrl.u32 %v670, 7
  %v672 = vsub.s32 3, %v671
  %v673 = vrot.slane %v656, %v672
  %v674 = vlaneseq
  %v675 = vshrl.u32 %v674, 7
  %v676 = vsub.s32 4, %v675
  %v677 = vrot.slane %v656, %v676
  %v678 = vlaneseq
  %v679 = vshrl.u32 %v678, 7
  %v680 = vsub.s32 5, %v679
  %v681 = vrot.slane %v656, %v680
  %v682 = vlaneseq
  %v683 = vshrl.u32 %v682, 7
  %v684 = vsub.s32 6, %v683
  %v685 = vrot.slane %v656, %v684
  %v686 = vlaneseq
  %v687 = vshrl.u32 %v686, 7
  %v688 = vsub.s32 7, %v687
  %v689 = vrot.slane %v656, %v688
  %v700 = vcombine.high %v14, %v14
  %v702 = vunpack.c.l.s4 1983009808
  %v703 = vunpack.c.0.s8 %v702
  %v704 = vlaneseq
  %v705 = vshrl.u32 %v704, 7
  %v706 = vsub.s32 %v703, %v705
  %v707 = vrot.slane %v14, %v706
  %v709 = vunpack.c.l.s4 1983009808
  %v710 = vunpack.c.0.s8 %v709
  %v711 = vlaneseq
  %v712 = vshrl.u32 %v711, 7
  %v713 = vsub.s32 %v710, %v712
  %v714 = vrot.slane %v700, %v713
  %v715 = vcombine.high %v707, %v707
  %v716 = vcombine.high %v714, %v714
  %v718 = vunpack.c.l.s4 1983009808
  %v719 = vunpack.c.0.s8 %v718
  %v720 = vlaneseq
  %v721 = vshrl.u32 %v720, 7
  %v722 = vsub.s32 %v719, %v721
  %v723 = vrot.slane %v15, %v722
  %729 = vmatprep.subr.mxu0 %v137
  %730 = vmatpush1.msra.mxu0 %v136
  %731 = vmatprep.subr.mxu0 %v129
  %732 = vmatpush1.msra.mxu0 %v128
  %733 = vmatprep.subr.mxu0 %v121
  %734 = vmatpush1.msra.mxu0 %v120
  %735 = vmatprep.subr.mxu0 %v113
  %736 = vmatpush1.msra.mxu0 %v112
  %737 = vmatprep.subr.mxu0 %v105
  %738 = vmatpush1.msra.mxu0 %v104
  %739 = vmatprep.subr.mxu0 %v97
  %740 = vmatpush1.msra.mxu0 %v96
  %741 = vmatprep.subr.mxu0 %v89
  %742 = vmatpush1.msra.mxu0 %v88
  %743 = vmatprep.subr.mxu0 %v81
  %744 = vmatpush1.msra.mxu0 %v80
  %745 = vmatprep.subr.mxu0 %v73
  %746 = vmatpush1.msra.mxu0 %v72
  %747 = vmatprep.subr.mxu0 %v65
  %748 = vmatpush1.msra.mxu0 %v64
  %749 = vmatprep.subr.mxu0 %v57
  %750 = vmatpush1.msra.mxu0 %v56
  %751 = vmatprep.subr.mxu0 %v49
  %752 = vmatpush1.msra.mxu0 %v48
  %753 = vmatprep.subr.mxu0 %v41
  %754 = vmatpush1.msra.mxu0 %v40
  %755 = vmatprep.subr.mxu0 %v33
  %756 = vmatpush1.msra.mxu0 %v32
  %757 = vmatprep.subr.mxu0 %v25
  %758 = vmatpush1.msra.mxu0 %v24
  %759 = vmatprep.subr.mxu0 %v17
  %760 = vmatpush1.msra.mxu0 %v16
  %761 = vmatprep.subr.mxu0 %v265
  %762 = vmatpush2.msra.mxu0 %v264
  %763 = vmatprep.subr.mxu0 %v257
  %764 = vmatpush2.msra.mxu0 %v256
  %765 = vmatprep.subr.mxu0 %v249
  %766 = vmatpush2.msra.mxu0 %v248
  %767 = vmatprep.subr.mxu0 %v241
  %768 = vmatpush2.msra.mxu0 %v240
  %769 = vmatprep.subr.mxu0 %v233
  %770 = vmatpush2.msra.mxu0 %v232
  %771 = vmatprep.subr.mxu0 %v225
  %772 = vmatpush2.msra.mxu0 %v224
  %773 = vmatprep.subr.mxu0 %v217
  %774 = vmatpush2.msra.mxu0 %v216
  %775 = vmatprep.subr.mxu0 %v209
  %776 = vmatpush2.msra.mxu0 %v208
  %777 = vmatprep.subr.mxu0 %v201
  %778 = vmatpush2.msra.mxu0 %v200
  %779 = vmatprep.subr.mxu0 %v193
  %780 = vmatpush2.msra.mxu0 %v192
  %781 = vmatprep.subr.mxu0 %v185
  %782 = vmatpush2.msra.mxu0 %v184
  %783 = vmatprep.subr.mxu0 %v177
  %784 = vmatpush2.msra.mxu0 %v176
  %785 = vmatprep.subr.mxu0 %v169
  %786 = vmatpush2.msra.mxu0 %v168
  %787 = vmatprep.subr.mxu0 %v161
  %788 = vmatpush2.msra.mxu0 %v160
  %789 = vmatprep.subr.mxu0 %v153
  %790 = vmatpush2.msra.mxu0 %v152
  %791 = vmatprep.subr.mxu0 %v145
  %792 = vmatpush2.msra.mxu0 %v144
  %793 = vmatprep.mubr.f32.mxu0 %v715
  %794 = vmatmul.mubr.f32.gmra.mxu0 %v707
  %v795 = vpop.f32.mrf.mxu0
  %v796 = vadd.f32 %v661, %v795
  %v797 = vpop.f32.mrf.mxu0
  %v798 = vadd.f32 %v665, %v797
  %799 = vdwg.mxu0
  %800 = vmatprep.subr.mxu0 %v393
  %801 = vmatpush1.msra.mxu0 %v392
  %802 = vmatprep.subr.mxu0 %v385
  %803 = vmatpush1.msra.mxu0 %v384
  %804 = vmatprep.subr.mxu0 %v377
  %805 = vmatpush1.msra.mxu0 %v376
  %806 = vmatprep.subr.mxu0 %v369
  %807 = vmatpush1.msra.mxu0 %v368
  %808 = vmatprep.subr.mxu0 %v361
  %809 = vmatpush1.msra.mxu0 %v360
  %810 = vmatprep.subr.mxu0 %v353
  %811 = vmatpush1.msra.mxu0 %v352
  %812 = vmatprep.subr.mxu0 %v345
  %813 = vmatpush1.msra.mxu0 %v344
  %814 = vmatprep.subr.mxu0 %v337
  %815 = vmatpush1.msra.mxu0 %v336
  %816 = vmatprep.subr.mxu0 %v329
  %817 = vmatpush1.msra.mxu0 %v328
  %818 = vmatprep.subr.mxu0 %v321
  %819 = vmatpush1.msra.mxu0 %v320
  %820 = vmatprep.subr.mxu0 %v313
  %821 = vmatpush1.msra.mxu0 %v312
  %822 = vmatprep.subr.mxu0 %v305
  %823 = vmatpush1.msra.mxu0 %v304
  %824 = vmatprep.subr.mxu0 %v297
  %825 = vmatpush1.msra.mxu0 %v296
  %826 = vmatprep.subr.mxu0 %v289
  %827 = vmatpush1.msra.mxu0 %v288
  %828 = vmatprep.subr.mxu0 %v281
  %829 = vmatpush1.msra.mxu0 %v280
  %830 = vmatprep.subr.mxu0 %v273
  %831 = vmatpush1.msra.mxu0 %v272
  %832 = vmatprep.subr.mxu0 %v521
  %833 = vmatpush2.msra.mxu0 %v520
  %834 = vmatprep.subr.mxu0 %v513
  %835 = vmatpush2.msra.mxu0 %v512
  %836 = vmatprep.subr.mxu0 %v505
  %837 = vmatpush2.msra.mxu0 %v504
  %838 = vmatprep.subr.mxu0 %v497
  %839 = vmatpush2.msra.mxu0 %v496
  %840 = vmatprep.subr.mxu0 %v489
  %841 = vmatpush2.msra.mxu0 %v488
  %842 = vmatprep.subr.mxu0 %v481
  %843 = vmatpush2.msra.mxu0 %v480
  %844 = vmatprep.subr.mxu0 %v473
  %845 = vmatpush2.msra.mxu0 %v472
  %846 = vmatprep.subr.mxu0 %v465
  %847 = vmatpush2.msra.mxu0 %v464
  %848 = vmatprep.subr.mxu0 %v457
  %849 = vmatpush2.msra.mxu0 %v456
  %850 = vmatprep.subr.mxu0 %v449
  %851 = vmatpush2.msra.mxu0 %v448
  %852 = vmatprep.subr.mxu0 %v441
  %853 = vmatpush2.msra.mxu0 %v440
  %854 = vmatprep.subr.mxu0 %v433
  %855 = vmatpush2.msra.mxu0 %v432
  %856 = vmatprep.subr.mxu0 %v425
  %857 = vmatpush2.msra.mxu0 %v424
  %858 = vmatprep.subr.mxu0 %v417
  %859 = vmatpush2.msra.mxu0 %v416
  %860 = vmatprep.subr.mxu0 %v409
  %861 = vmatpush2.msra.mxu0 %v408
  %862 = vmatprep.subr.mxu0 %v401
  %863 = vmatpush2.msra.mxu0 %v400
  %864 = vmatprep.mubr.f32.mxu0 %v716
  %865 = vmatmul.mubr.f32.gmra.mxu0 %v714
  %v866 = vpop.f32.mrf.mxu0
  %v867 = vadd.f32 %v796, %v866
  %v868 = vpop.f32.mrf.mxu0
  %v869 = vadd.f32 %v798, %v868
  %870 = vdwg.mxu0
  %871 = vmatprep.subr.mxu0 %v649
  %872 = vmatpush1.msra.mxu0 %v648
  %873 = vmatprep.subr.mxu0 %v641
  %874 = vmatpush1.msra.mxu0 %v640
  %875 = vmatprep.subr.mxu0 %v633
  %876 = vmatpush1.msra.mxu0 %v632
  %877 = vmatprep.subr.mxu0 %v625
  %878 = vmatpush1.msra.mxu0 %v624
  %879 = vmatprep.subr.mxu0 %v617
  %880 = vmatpush1.msra.mxu0 %v616
  %881 = vmatprep.subr.mxu0 %v609
  %882 = vmatpush1.msra.mxu0 %v608
  %883 = vmatprep.subr.mxu0 %v601
  %884 = vmatpush1.msra.mxu0 %v600
  %885 = vmatprep.subr.mxu0 %v593
  %886 = vmatpush1.msra.mxu0 %v592
  %887 = vmatprep.subr.mxu0 %v585
  %888 = vmatpush1.msra.mxu0 %v584
  %889 = vmatprep.subr.mxu0 %v577
  %890 = vmatpush1.msra.mxu0 %v576
  %891 = vmatprep.subr.mxu0 %v569
  %892 = vmatpush1.msra.mxu0 %v568
  %893 = vmatprep.subr.mxu0 %v561
  %894 = vmatpush1.msra.mxu0 %v560
  %895 = vmatprep.subr.mxu0 %v553
  %896 = vmatpush1.msra.mxu0 %v552
  %897 = vmatprep.subr.mxu0 %v545
  %898 = vmatpush1.msra.mxu0 %v544
  %899 = vmatprep.subr.mxu0 %v537
  %900 = vmatpush1.msra.mxu0 %v536
  %901 = vmatprep.subr.mxu0 %v529
  %902 = vmatpush1.msra.mxu0 %v528
  %903 = vmatprep.subr.mxu0 0.0
  %904 = vmatpush2.msra.mxu0 0.0
  %905 = vmatprep.subr.mxu0 0.0
  %906 = vmatpush2.msra.mxu0 0.0
  %907 = vmatprep.subr.mxu0 0.0
  %908 = vmatpush2.msra.mxu0 0.0
  %909 = vmatprep.subr.mxu0 0.0
  %910 = vmatpush2.msra.mxu0 0.0
  %911 = vmatprep.subr.mxu0 0.0
  %912 = vmatpush2.msra.mxu0 0.0
  %913 = vmatprep.subr.mxu0 0.0
  %914 = vmatpush2.msra.mxu0 0.0
  %915 = vmatprep.subr.mxu0 0.0
  %916 = vmatpush2.msra.mxu0 0.0
  %917 = vmatprep.subr.mxu0 0.0
  %918 = vmatpush2.msra.mxu0 0.0
  %919 = vmatprep.subr.mxu0 0.0
  %920 = vmatpush2.msra.mxu0 0.0
  %921 = vmatprep.subr.mxu0 0.0
  %922 = vmatpush2.msra.mxu0 0.0
  %923 = vmatprep.subr.mxu0 0.0
  %924 = vmatpush2.msra.mxu0 0.0
  %925 = vmatprep.subr.mxu0 0.0
  %926 = vmatpush2.msra.mxu0 0.0
  %927 = vmatprep.subr.mxu0 0.0
  %928 = vmatpush2.msra.mxu0 0.0
  %929 = vmatprep.subr.mxu0 0.0
  %930 = vmatpush2.msra.mxu0 0.0
  %931 = vmatprep.subr.mxu0 0.0
  %932 = vmatpush2.msra.mxu0 0.0
  %933 = vmatprep.subr.mxu0 0.0
  %934 = vmatpush2.msra.mxu0 0.0
  %935 = vmatprep.mubr.f32.mxu0 0.0
  %936 = vmatmul.mubr.f32.gmra.mxu0 %v723
  %v937 = vpop.f32.mrf.mxu0
  %v938 = vadd.f32 %v867, %v937
  %v939 = vpop.f32.mrf.mxu0
  %v940 = vadd.f32 %v869, %v939
  %941 = vdwg.mxu0
  %942 = vmatprep.subr.mxu0 %v139
  %943 = vmatpush1.msra.mxu0 %v138
  %944 = vmatprep.subr.mxu0 %v131
  %945 = vmatpush1.msra.mxu0 %v130
  %946 = vmatprep.subr.mxu0 %v123
  %947 = vmatpush1.msra.mxu0 %v122
  %948 = vmatprep.subr.mxu0 %v115
  %949 = vmatpush1.msra.mxu0 %v114
  %950 = vmatprep.subr.mxu0 %v107
  %951 = vmatpush1.msra.mxu0 %v106
  %952 = vmatprep.subr.mxu0 %v99
  %953 = vmatpush1.msra.mxu0 %v98
  %954 = vmatprep.subr.mxu0 %v91
  %955 = vmatpush1.msra.mxu0 %v90
  %956 = vmatprep.subr.mxu0 %v83
  %957 = vmatpush1.msra.mxu0 %v82
  %958 = vmatprep.subr.mxu0 %v75
  %959 = vmatpush1.msra.mxu0 %v74
  %960 = vmatprep.subr.mxu0 %v67
  %961 = vmatpush1.msra.mxu0 %v66
  %962 = vmatprep.subr.mxu0 %v59
  %963 = vmatpush1.msra.mxu0 %v58
  %964 = vmatprep.subr.mxu0 %v51
  %965 = vmatpush1.msra.mxu0 %v50
  %966 = vmatprep.subr.mxu0 %v43
  %967 = vmatpush1.msra.mxu0 %v42
  %968 = vmatprep.subr.mxu0 %v35
  %969 = vmatpush1.msra.mxu0 %v34
  %970 = vmatprep.subr.mxu0 %v27
  %971 = vmatpush1.msra.mxu0 %v26
  %972 = vmatprep.subr.mxu0 %v19
  %973 = vmatpush1.msra.mxu0 %v18
  %974 = vmatprep.subr.mxu0 %v267
  %975 = vmatpush2.msra.mxu0 %v266
  %976 = vmatprep.subr.mxu0 %v259
  %977 = vmatpush2.msra.mxu0 %v258
  %978 = vmatprep.subr.mxu0 %v251
  %979 = vmatpush2.msra.mxu0 %v250
  %980 = vmatprep.subr.mxu0 %v243
  %981 = vmatpush2.msra.mxu0 %v242
  %982 = vmatprep.subr.mxu0 %v235
  %983 = vmatpush2.msra.mxu0 %v234
  %984 = vmatprep.subr.mxu0 %v227
  %985 = vmatpush2.msra.mxu0 %v226
  %986 = vmatprep.subr.mxu0 %v219
  %987 = vmatpush2.msra.mxu0 %v218
  %988 = vmatprep.subr.mxu0 %v211
  %989 = vmatpush2.msra.mxu0 %v210
  %990 = vmatprep.subr.mxu0 %v203
  %991 = vmatpush2.msra.mxu0 %v202
  %992 = vmatprep.subr.mxu0 %v195
  %993 = vmatpush2.msra.mxu0 %v194
  %994 = vmatprep.subr.mxu0 %v187
  %995 = vmatpush2.msra.mxu0 %v186
  %996 = vmatprep.subr.mxu0 %v179
  %997 = vmatpush2.msra.mxu0 %v178
  %998 = vmatprep.subr.mxu0 %v171
  %999 = vmatpush2.msra.mxu0 %v170
  %1000 = vmatprep.subr.mxu0 %v163
  %1001 = vmatpush2.msra.mxu0 %v162
  %1002 = vmatprep.subr.mxu0 %v155
  %1003 = vmatpush2.msra.mxu0 %v154
  %1004 = vmatprep.subr.mxu0 %v147
  %1005 = vmatpush2.msra.mxu0 %v146
  %1006 = vmatprep.mubr.f32.mxu0 %v715
  %1007 = vmatmul.mubr.f32.gmra.mxu0 %v707
  %v1008 = vpop.f32.mrf.mxu0
  %v1009 = vadd.f32 %v669, %v1008
  %v1010 = vpop.f32.mrf.mxu0
  %v1011 = vadd.f32 %v673, %v1010
  %1012 = vdwg.mxu0
  %1013 = vmatprep.subr.mxu0 %v395
  %1014 = vmatpush1.msra.mxu0 %v394
  %1015 = vmatprep.subr.mxu0 %v387
  %1016 = vmatpush1.msra.mxu0 %v386
  %1017 = vmatprep.subr.mxu0 %v379
  %1018 = vmatpush1.msra.mxu0 %v378
  %1019 = vmatprep.subr.mxu0 %v371
  %1020 = vmatpush1.msra.mxu0 %v370
  %1021 = vmatprep.subr.mxu0 %v363
  %1022 = vmatpush1.msra.mxu0 %v362
  %1023 = vmatprep.subr.mxu0 %v355
  %1024 = vmatpush1.msra.mxu0 %v354
  %1025 = vmatprep.subr.mxu0 %v347
  %1026 = vmatpush1.msra.mxu0 %v346
  %1027 = vmatprep.subr.mxu0 %v339
  %1028 = vmatpush1.msra.mxu0 %v338
  %1029 = vmatprep.subr.mxu0 %v331
  %1030 = vmatpush1.msra.mxu0 %v330
  %1031 = vmatprep.subr.mxu0 %v323
  %1032 = vmatpush1.msra.mxu0 %v322
  %1033 = vmatprep.subr.mxu0 %v315
  %1034 = vmatpush1.msra.mxu0 %v314
  %1035 = vmatprep.subr.mxu0 %v307
  %1036 = vmatpush1.msra.mxu0 %v306
  %1037 = vmatprep.subr.mxu0 %v299
  %1038 = vmatpush1.msra.mxu0 %v298
  %1039 = vmatprep.subr.mxu0 %v291
  %1040 = vmatpush1.msra.mxu0 %v290
  %1041 = vmatprep.subr.mxu0 %v283
  %1042 = vmatpush1.msra.mxu0 %v282
  %1043 = vmatprep.subr.mxu0 %v275
  %1044 = vmatpush1.msra.mxu0 %v274
  %1045 = vmatprep.subr.mxu0 %v523
  %1046 = vmatpush2.msra.mxu0 %v522
  %1047 = vmatprep.subr.mxu0 %v515
  %1048 = vmatpush2.msra.mxu0 %v514
  %1049 = vmatprep.subr.mxu0 %v507
  %1050 = vmatpush2.msra.mxu0 %v506
  %1051 = vmatprep.subr.mxu0 %v499
  %1052 = vmatpush2.msra.mxu0 %v498
  %1053 = vmatprep.subr.mxu0 %v491
  %1054 = vmatpush2.msra.mxu0 %v490
  %1055 = vmatprep.subr.mxu0 %v483
  %1056 = vmatpush2.msra.mxu0 %v482
  %1057 = vmatprep.subr.mxu0 %v475
  %1058 = vmatpush2.msra.mxu0 %v474
  %1059 = vmatprep.subr.mxu0 %v467
  %1060 = vmatpush2.msra.mxu0 %v466
  %1061 = vmatprep.subr.mxu0 %v459
  %1062 = vmatpush2.msra.mxu0 %v458
  %1063 = vmatprep.subr.mxu0 %v451
  %1064 = vmatpush2.msra.mxu0 %v450
  %1065 = vmatprep.subr.mxu0 %v443
  %1066 = vmatpush2.msra.mxu0 %v442
  %1067 = vmatprep.subr.mxu0 %v435
  %1068 = vmatpush2.msra.mxu0 %v434
  %1069 = vmatprep.subr.mxu0 %v427
  %1070 = vmatpush2.msra.mxu0 %v426
  %1071 = vmatprep.subr.mxu0 %v419
  %1072 = vmatpush2.msra.mxu0 %v418
  %1073 = vmatprep.subr.mxu0 %v411
  %1074 = vmatpush2.msra.mxu0 %v410
  %1075 = vmatprep.subr.mxu0 %v403
  %1076 = vmatpush2.msra.mxu0 %v402
  %1077 = vmatprep.mubr.f32.mxu0 %v716
  %1078 = vmatmul.mubr.f32.gmra.mxu0 %v714
  %v1079 = vpop.f32.mrf.mxu0
  %v1080 = vadd.f32 %v1009, %v1079
  %v1081 = vpop.f32.mrf.mxu0
  %v1082 = vadd.f32 %v1011, %v1081
  %1083 = vdwg.mxu0
  %1084 = vmatprep.subr.mxu0 %v651
  %1085 = vmatpush1.msra.mxu0 %v650
  %1086 = vmatprep.subr.mxu0 %v643
  %1087 = vmatpush1.msra.mxu0 %v642
  %1088 = vmatprep.subr.mxu0 %v635
  %1089 = vmatpush1.msra.mxu0 %v634
  %1090 = vmatprep.subr.mxu0 %v627
  %1091 = vmatpush1.msra.mxu0 %v626
  %1092 = vmatprep.subr.mxu0 %v619
  %1093 = vmatpush1.msra.mxu0 %v618
  %1094 = vmatprep.subr.mxu0 %v611
  %1095 = vmatpush1.msra.mxu0 %v610
  %1096 = vmatprep.subr.mxu0 %v603
  %1097 = vmatpush1.msra.mxu0 %v602
  %1098 = vmatprep.subr.mxu0 %v595
  %1099 = vmatpush1.msra.mxu0 %v594
  %1100 = vmatprep.subr.mxu0 %v587
  %1101 = vmatpush1.msra.mxu0 %v586
  %1102 = vmatprep.subr.mxu0 %v579
  %1103 = vmatpush1.msra.mxu0 %v578
  %1104 = vmatprep.subr.mxu0 %v571
  %1105 = vmatpush1.msra.mxu0 %v570
  %1106 = vmatprep.subr.mxu0 %v563
  %1107 = vmatpush1.msra.mxu0 %v562
  %1108 = vmatprep.subr.mxu0 %v555
  %1109 = vmatpush1.msra.mxu0 %v554
  %1110 = vmatprep.subr.mxu0 %v547
  %1111 = vmatpush1.msra.mxu0 %v546
  %1112 = vmatprep.subr.mxu0 %v539
  %1113 = vmatpush1.msra.mxu0 %v538
  %1114 = vmatprep.subr.mxu0 %v531
  %1115 = vmatpush1.msra.mxu0 %v530
  %1116 = vmatprep.subr.mxu0 0.0
  %1117 = vmatpush2.msra.mxu0 0.0
  %1118 = vmatprep.subr.mxu0 0.0
  %1119 = vmatpush2.msra.mxu0 0.0
  %1120 = vmatprep.subr.mxu0 0.0
  %1121 = vmatpush2.msra.mxu0 0.0
  %1122 = vmatprep.subr.mxu0 0.0
  %1123 = vmatpush2.msra.mxu0 0.0
  %1124 = vmatprep.subr.mxu0 0.0
  %1125 = vmatpush2.msra.mxu0 0.0
  %1126 = vmatprep.subr.mxu0 0.0
  %1127 = vmatpush2.msra.mxu0 0.0
  %1128 = vmatprep.subr.mxu0 0.0
  %1129 = vmatpush2.msra.mxu0 0.0
  %1130 = vmatprep.subr.mxu0 0.0
  %1131 = vmatpush2.msra.mxu0 0.0
  %1132 = vmatprep.subr.mxu0 0.0
  %1133 = vmatpush2.msra.mxu0 0.0
  %1134 = vmatprep.subr.mxu0 0.0
  %1135 = vmatpush2.msra.mxu0 0.0
  %1136 = vmatprep.subr.mxu0 0.0
  %1137 = vmatpush2.msra.mxu0 0.0
  %1138 = vmatprep.subr.mxu0 0.0
  %1139 = vmatpush2.msra.mxu0 0.0
  %1140 = vmatprep.subr.mxu0 0.0
  %1141 = vmatpush2.msra.mxu0 0.0
  %1142 = vmatprep.subr.mxu0 0.0
  %1143 = vmatpush2.msra.mxu0 0.0
  %1144 = vmatprep.subr.mxu0 0.0
  %1145 = vmatpush2.msra.mxu0 0.0
  %1146 = vmatprep.subr.mxu0 0.0
  %1147 = vmatpush2.msra.mxu0 0.0
  %1148 = vmatprep.mubr.f32.mxu0 0.0
  %1149 = vmatmul.mubr.f32.gmra.mxu0 %v723
  %v1150 = vpop.f32.mrf.mxu0
  %v1151 = vadd.f32 %v1080, %v1150
  %v1152 = vpop.f32.mrf.mxu0
  %v1153 = vadd.f32 %v1082, %v1152
  %1154 = vdwg.mxu0
  %1155 = vmatprep.subr.mxu0 %v141
  %1156 = vmatpush1.msra.mxu0 %v140
  %1157 = vmatprep.subr.mxu0 %v133
  %1158 = vmatpush1.msra.mxu0 %v132
  %1159 = vmatprep.subr.mxu0 %v125
  %1160 = vmatpush1.msra.mxu0 %v124
  %1161 = vmatprep.subr.mxu0 %v117
  %1162 = vmatpush1.msra.mxu0 %v116
  %1163 = vmatprep.subr.mxu0 %v109
  %1164 = vmatpush1.msra.mxu0 %v108
  %1165 = vmatprep.subr.mxu0 %v101
  %1166 = vmatpush1.msra.mxu0 %v100
  %1167 = vmatprep.subr.mxu0 %v93
  %1168 = vmatpush1.msra.mxu0 %v92
  %1169 = vmatprep.subr.mxu0 %v85
  %1170 = vmatpush1.msra.mxu0 %v84
  %1171 = vmatprep.subr.mxu0 %v77
  %1172 = vmatpush1.msra.mxu0 %v76
  %1173 = vmatprep.subr.mxu0 %v69
  %1174 = vmatpush1.msra.mxu0 %v68
  %1175 = vmatprep.subr.mxu0 %v61
  %1176 = vmatpush1.msra.mxu0 %v60
  %1177 = vmatprep.subr.mxu0 %v53
  %1178 = vmatpush1.msra.mxu0 %v52
  %1179 = vmatprep.subr.mxu0 %v45
  %1180 = vmatpush1.msra.mxu0 %v44
  %1181 = vmatprep.subr.mxu0 %v37
  %1182 = vmatpush1.msra.mxu0 %v36
  %1183 = vmatprep.subr.mxu0 %v29
  %1184 = vmatpush1.msra.mxu0 %v28
  %1185 = vmatprep.subr.mxu0 %v21
  %1186 = vmatpush1.msra.mxu0 %v20
  %1187 = vmatprep.subr.mxu0 %v269
  %1188 = vmatpush2.msra.mxu0 %v268
  %1189 = vmatprep.subr.mxu0 %v261
  %1190 = vmatpush2.msra.mxu0 %v260
  %1191 = vmatprep.subr.mxu0 %v253
  %1192 = vmatpush2.msra.mxu0 %v252
  %1193 = vmatprep.subr.mxu0 %v245
  %1194 = vmatpush2.msra.mxu0 %v244
  %1195 = vmatprep.subr.mxu0 %v237
  %1196 = vmatpush2.msra.mxu0 %v236
  %1197 = vmatprep.subr.mxu0 %v229
  %1198 = vmatpush2.msra.mxu0 %v228
  %1199 = vmatprep.subr.mxu0 %v221
  %1200 = vmatpush2.msra.mxu0 %v220
  %1201 = vmatprep.subr.mxu0 %v213
  %1202 = vmatpush2.msra.mxu0 %v212
  %1203 = vmatprep.subr.mxu0 %v205
  %1204 = vmatpush2.msra.mxu0 %v204
  %1205 = vmatprep.subr.mxu0 %v197
  %1206 = vmatpush2.msra.mxu0 %v196
  %1207 = vmatprep.subr.mxu0 %v189
  %1208 = vmatpush2.msra.mxu0 %v188
  %1209 = vmatprep.subr.mxu0 %v181
  %1210 = vmatpush2.msra.mxu0 %v180
  %1211 = vmatprep.subr.mxu0 %v173
  %1212 = vmatpush2.msra.mxu0 %v172
  %1213 = vmatprep.subr.mxu0 %v165
  %1214 = vmatpush2.msra.mxu0 %v164
  %1215 = vmatprep.subr.mxu0 %v157
  %1216 = vmatpush2.msra.mxu0 %v156
  %1217 = vmatprep.subr.mxu0 %v149
  %1218 = vmatpush2.msra.mxu0 %v148
  %1219 = vmatprep.mubr.f32.mxu0 %v715
  %1220 = vmatmul.mubr.f32.gmra.mxu0 %v707
  %v1221 = vpop.f32.mrf.mxu0
  %v1222 = vadd.f32 %v677, %v1221
  %v1223 = vpop.f32.mrf.mxu0
  %v1224 = vadd.f32 %v681, %v1223
  %1225 = vdwg.mxu0
  %1226 = vmatprep.subr.mxu0 %v397
  %1227 = vmatpush1.msra.mxu0 %v396
  %1228 = vmatprep.subr.mxu0 %v389
  %1229 = vmatpush1.msra.mxu0 %v388
  %1230 = vmatprep.subr.mxu0 %v381
  %1231 = vmatpush1.msra.mxu0 %v380
  %1232 = vmatprep.subr.mxu0 %v373
  %1233 = vmatpush1.msra.mxu0 %v372
  %1234 = vmatprep.subr.mxu0 %v365
  %1235 = vmatpush1.msra.mxu0 %v364
  %1236 = vmatprep.subr.mxu0 %v357
  %1237 = vmatpush1.msra.mxu0 %v356
  %1238 = vmatprep.subr.mxu0 %v349
  %1239 = vmatpush1.msra.mxu0 %v348
  %1240 = vmatprep.subr.mxu0 %v341
  %1241 = vmatpush1.msra.mxu0 %v340
  %1242 = vmatprep.subr.mxu0 %v333
  %1243 = vmatpush1.msra.mxu0 %v332
  %1244 = vmatprep.subr.mxu0 %v325
  %1245 = vmatpush1.msra.mxu0 %v324
  %1246 = vmatprep.subr.mxu0 %v317
  %1247 = vmatpush1.msra.mxu0 %v316
  %1248 = vmatprep.subr.mxu0 %v309
  %1249 = vmatpush1.msra.mxu0 %v308
  %1250 = vmatprep.subr.mxu0 %v301
  %1251 = vmatpush1.msra.mxu0 %v300
  %1252 = vmatprep.subr.mxu0 %v293
  %1253 = vmatpush1.msra.mxu0 %v292
  %1254 = vmatprep.subr.mxu0 %v285
  %1255 = vmatpush1.msra.mxu0 %v284
  %1256 = vmatprep.subr.mxu0 %v277
  %1257 = vmatpush1.msra.mxu0 %v276
  %1258 = vmatprep.subr.mxu0 %v525
  %1259 = vmatpush2.msra.mxu0 %v524
  %1260 = vmatprep.subr.mxu0 %v517
  %1261 = vmatpush2.msra.mxu0 %v516
  %1262 = vmatprep.subr.mxu0 %v509
  %1263 = vmatpush2.msra.mxu0 %v508
  %1264 = vmatprep.subr.mxu0 %v501
  %1265 = vmatpush2.msra.mxu0 %v500
  %1266 = vmatprep.subr.mxu0 %v493
  %1267 = vmatpush2.msra.mxu0 %v492
  %1268 = vmatprep.subr.mxu0 %v485
  %1269 = vmatpush2.msra.mxu0 %v484
  %1270 = vmatprep.subr.mxu0 %v477
  %1271 = vmatpush2.msra.mxu0 %v476
  %1272 = vmatprep.subr.mxu0 %v469
  %1273 = vmatpush2.msra.mxu0 %v468
  %1274 = vmatprep.subr.mxu0 %v461
  %1275 = vmatpush2.msra.mxu0 %v460
  %1276 = vmatprep.subr.mxu0 %v453
  %1277 = vmatpush2.msra.mxu0 %v452
  %1278 = vmatprep.subr.mxu0 %v445
  %1279 = vmatpush2.msra.mxu0 %v444
  %1280 = vmatprep.subr.mxu0 %v437
  %1281 = vmatpush2.msra.mxu0 %v436
  %1282 = vmatprep.subr.mxu0 %v429
  %1283 = vmatpush2.msra.mxu0 %v428
  %1284 = vmatprep.subr.mxu0 %v421
  %1285 = vmatpush2.msra.mxu0 %v420
  %1286 = vmatprep.subr.mxu0 %v413
  %1287 = vmatpush2.msra.mxu0 %v412
  %1288 = vmatprep.subr.mxu0 %v405
  %1289 = vmatpush2.msra.mxu0 %v404
  %1290 = vmatprep.mubr.f32.mxu0 %v716
  %1291 = vmatmul.mubr.f32.gmra.mxu0 %v714
  %v1292 = vpop.f32.mrf.mxu0
  %v1293 = vadd.f32 %v1222, %v1292
  %v1294 = vpop.f32.mrf.mxu0
  %v1295 = vadd.f32 %v1224, %v1294
  %1296 = vdwg.mxu0
  %1297 = vmatprep.subr.mxu0 %v653
  %1298 = vmatpush1.msra.mxu0 %v652
  %1299 = vmatprep.subr.mxu0 %v645
  %1300 = vmatpush1.msra.mxu0 %v644
  %1301 = vmatprep.subr.mxu0 %v637
  %1302 = vmatpush1.msra.mxu0 %v636
  %1303 = vmatprep.subr.mxu0 %v629
  %1304 = vmatpush1.msra.mxu0 %v628
  %1305 = vmatprep.subr.mxu0 %v621
  %1306 = vmatpush1.msra.mxu0 %v620
  %1307 = vmatprep.subr.mxu0 %v613
  %1308 = vmatpush1.msra.mxu0 %v612
  %1309 = vmatprep.subr.mxu0 %v605
  %1310 = vmatpush1.msra.mxu0 %v604
  %1311 = vmatprep.subr.mxu0 %v597
  %1312 = vmatpush1.msra.mxu0 %v596
  %1313 = vmatprep.subr.mxu0 %v589
  %1314 = vmatpush1.msra.mxu0 %v588
  %1315 = vmatprep.subr.mxu0 %v581
  %1316 = vmatpush1.msra.mxu0 %v580
  %1317 = vmatprep.subr.mxu0 %v573
  %1318 = vmatpush1.msra.mxu0 %v572
  %1319 = vmatprep.subr.mxu0 %v565
  %1320 = vmatpush1.msra.mxu0 %v564
  %1321 = vmatprep.subr.mxu0 %v557
  %1322 = vmatpush1.msra.mxu0 %v556
  %1323 = vmatprep.subr.mxu0 %v549
  %1324 = vmatpush1.msra.mxu0 %v548
  %1325 = vmatprep.subr.mxu0 %v541
  %1326 = vmatpush1.msra.mxu0 %v540
  %1327 = vmatprep.subr.mxu0 %v533
  %1328 = vmatpush1.msra.mxu0 %v532
  %1329 = vmatprep.subr.mxu0 0.0
  %1330 = vmatpush2.msra.mxu0 0.0
  %1331 = vmatprep.subr.mxu0 0.0
  %1332 = vmatpush2.msra.mxu0 0.0
  %1333 = vmatprep.subr.mxu0 0.0
  %1334 = vmatpush2.msra.mxu0 0.0
  %1335 = vmatprep.subr.mxu0 0.0
  %1336 = vmatpush2.msra.mxu0 0.0
  %1337 = vmatprep.subr.mxu0 0.0
  %1338 = vmatpush2.msra.mxu0 0.0
  %1339 = vmatprep.subr.mxu0 0.0
  %1340 = vmatpush2.msra.mxu0 0.0
  %1341 = vmatprep.subr.mxu0 0.0
  %1342 = vmatpush2.msra.mxu0 0.0
  %1343 = vmatprep.subr.mxu0 0.0
  %1344 = vmatpush2.msra.mxu0 0.0
  %1345 = vmatprep.subr.mxu0 0.0
  %1346 = vmatpush2.msra.mxu0 0.0
  %1347 = vmatprep.subr.mxu0 0.0
  %1348 = vmatpush2.msra.mxu0 0.0
  %1349 = vmatprep.subr.mxu0 0.0
  %1350 = vmatpush2.msra.mxu0 0.0
  %1351 = vmatprep.subr.mxu0 0.0
  %1352 = vmatpush2.msra.mxu0 0.0
  %1353 = vmatprep.subr.mxu0 0.0
  %1354 = vmatpush2.msra.mxu0 0.0
  %1355 = vmatprep.subr.mxu0 0.0
  %1356 = vmatpush2.msra.mxu0 0.0
  %1357 = vmatprep.subr.mxu0 0.0
  %1358 = vmatpush2.msra.mxu0 0.0
  %1359 = vmatprep.subr.mxu0 0.0
  %1360 = vmatpush2.msra.mxu0 0.0
  %1361 = vmatprep.mubr.f32.mxu0 0.0
  %1362 = vmatmul.mubr.f32.gmra.mxu0 %v723
  %v1363 = vpop.f32.mrf.mxu0
  %v1364 = vadd.f32 %v1293, %v1363
  %v1365 = vpop.f32.mrf.mxu0
  %v1366 = vadd.f32 %v1295, %v1365
  %1367 = vdwg.mxu0
  %1368 = vmatprep.subr.mxu0 %v143
  %1369 = vmatpush1.msra.mxu0 %v142
  %1370 = vmatprep.subr.mxu0 %v135
  %1371 = vmatpush1.msra.mxu0 %v134
  %1372 = vmatprep.subr.mxu0 %v127
  %1373 = vmatpush1.msra.mxu0 %v126
  %1374 = vmatprep.subr.mxu0 %v119
  %1375 = vmatpush1.msra.mxu0 %v118
  %1376 = vmatprep.subr.mxu0 %v111
  %1377 = vmatpush1.msra.mxu0 %v110
  %1378 = vmatprep.subr.mxu0 %v103
  %1379 = vmatpush1.msra.mxu0 %v102
  %1380 = vmatprep.subr.mxu0 %v95
  %1381 = vmatpush1.msra.mxu0 %v94
  %1382 = vmatprep.subr.mxu0 %v87
  %1383 = vmatpush1.msra.mxu0 %v86
  %1384 = vmatprep.subr.mxu0 %v79
  %1385 = vmatpush1.msra.mxu0 %v78
  %1386 = vmatprep.subr.mxu0 %v71
  %1387 = vmatpush1.msra.mxu0 %v70
  %1388 = vmatprep.subr.mxu0 %v63
  %1389 = vmatpush1.msra.mxu0 %v62
  %1390 = vmatprep.subr.mxu0 %v55
  %1391 = vmatpush1.msra.mxu0 %v54
  %1392 = vmatprep.subr.mxu0 %v47
  %1393 = vmatpush1.msra.mxu0 %v46
  %1394 = vmatprep.subr.mxu0 %v39
  %1395 = vmatpush1.msra.mxu0 %v38
  %1396 = vmatprep.subr.mxu0 %v31
  %1397 = vmatpush1.msra.mxu0 %v30
  %1398 = vmatprep.subr.mxu0 %v23
  %1399 = vmatpush1.msra.mxu0 %v22
  %1400 = vmatprep.subr.mxu0 %v271
  %1401 = vmatpush2.msra.mxu0 %v270
  %1402 = vmatprep.subr.mxu0 %v263
  %1403 = vmatpush2.msra.mxu0 %v262
  %1404 = vmatprep.subr.mxu0 %v255
  %1405 = vmatpush2.msra.mxu0 %v254
  %1406 = vmatprep.subr.mxu0 %v247
  %1407 = vmatpush2.msra.mxu0 %v246
  %1408 = vmatprep.subr.mxu0 %v239
  %1409 = vmatpush2.msra.mxu0 %v238
  %1410 = vmatprep.subr.mxu0 %v231
  %1411 = vmatpush2.msra.mxu0 %v230
  %1412 = vmatprep.subr.mxu0 %v223
  %1413 = vmatpush2.msra.mxu0 %v222
  %1414 = vmatprep.subr.mxu0 %v215
  %1415 = vmatpush2.msra.mxu0 %v214
  %1416 = vmatprep.subr.mxu0 %v207
  %1417 = vmatpush2.msra.mxu0 %v206
  %1418 = vmatprep.subr.mxu0 %v199
  %1419 = vmatpush2.msra.mxu0 %v198
  %1420 = vmatprep.subr.mxu0 %v191
  %1421 = vmatpush2.msra.mxu0 %v190
  %1422 = vmatprep.subr.mxu0 %v183
  %1423 = vmatpush2.msra.mxu0 %v182
  %1424 = vmatprep.subr.mxu0 %v175
  %1425 = vmatpush2.msra.mxu0 %v174
  %1426 = vmatprep.subr.mxu0 %v167
  %1427 = vmatpush2.msra.mxu0 %v166
  %1428 = vmatprep.subr.mxu0 %v159
  %1429 = vmatpush2.msra.mxu0 %v158
  %1430 = vmatprep.subr.mxu0 %v151
  %1431 = vmatpush2.msra.mxu0 %v150
  %1432 = vmatprep.mubr.f32.mxu0 %v715
  %1433 = vmatmul.mubr.f32.gmra.mxu0 %v707
  %v1434 = vpop.f32.mrf.mxu0
  %v1435 = vadd.f32 %v685, %v1434
  %v1436 = vpop.f32.mrf.mxu0
  %v1437 = vadd.f32 %v689, %v1436
  %1438 = vdwg.mxu0
  %1439 = vmatprep.subr.mxu0 %v399
  %1440 = vmatpush1.msra.mxu0 %v398
  %1441 = vmatprep.subr.mxu0 %v391
  %1442 = vmatpush1.msra.mxu0 %v390
  %1443 = vmatprep.subr.mxu0 %v383
  %1444 = vmatpush1.msra.mxu0 %v382
  %1445 = vmatprep.subr.mxu0 %v375
  %1446 = vmatpush1.msra.mxu0 %v374
  %1447 = vmatprep.subr.mxu0 %v367
  %1448 = vmatpush1.msra.mxu0 %v366
  %1449 = vmatprep.subr.mxu0 %v359
  %1450 = vmatpush1.msra.mxu0 %v358
  %1451 = vmatprep.subr.mxu0 %v351
  %1452 = vmatpush1.msra.mxu0 %v350
  %1453 = vmatprep.subr.mxu0 %v343
  %1454 = vmatpush1.msra.mxu0 %v342
  %1455 = vmatprep.subr.mxu0 %v335
  %1456 = vmatpush1.msra.mxu0 %v334
  %1457 = vmatprep.subr.mxu0 %v327
  %1458 = vmatpush1.msra.mxu0 %v326
  %1459 = vmatprep.subr.mxu0 %v319
  %1460 = vmatpush1.msra.mxu0 %v318
  %1461 = vmatprep.subr.mxu0 %v311
  %1462 = vmatpush1.msra.mxu0 %v310
  %1463 = vmatprep.subr.mxu0 %v303
  %1464 = vmatpush1.msra.mxu0 %v302
  %1465 = vmatprep.subr.mxu0 %v295
  %1466 = vmatpush1.msra.mxu0 %v294
  %1467 = vmatprep.subr.mxu0 %v287
  %1468 = vmatpush1.msra.mxu0 %v286
  %1469 = vmatprep.subr.mxu0 %v279
  %1470 = vmatpush1.msra.mxu0 %v278
  %1471 = vmatprep.subr.mxu0 %v527
  %1472 = vmatpush2.msra.mxu0 %v526
  %1473 = vmatprep.subr.mxu0 %v519
  %1474 = vmatpush2.msra.mxu0 %v518
  %1475 = vmatprep.subr.mxu0 %v511
  %1476 = vmatpush2.msra.mxu0 %v510
  %1477 = vmatprep.subr.mxu0 %v503
  %1478 = vmatpush2.msra.mxu0 %v502
  %1479 = vmatprep.subr.mxu0 %v495
  %1480 = vmatpush2.msra.mxu0 %v494
  %1481 = vmatprep.subr.mxu0 %v487
  %1482 = vmatpush2.msra.mxu0 %v486
  %1483 = vmatprep.subr.mxu0 %v479
  %1484 = vmatpush2.msra.mxu0 %v478
  %1485 = vmatprep.subr.mxu0 %v471
  %1486 = vmatpush2.msra.mxu0 %v470
  %1487 = vmatprep.subr.mxu0 %v463
  %1488 = vmatpush2.msra.mxu0 %v462
  %1489 = vmatprep.subr.mxu0 %v455
  %1490 = vmatpush2.msra.mxu0 %v454
  %1491 = vmatprep.subr.mxu0 %v447
  %1492 = vmatpush2.msra.mxu0 %v446
  %1493 = vmatprep.subr.mxu0 %v439
  %1494 = vmatpush2.msra.mxu0 %v438
  %1495 = vmatprep.subr.mxu0 %v431
  %1496 = vmatpush2.msra.mxu0 %v430
  %1497 = vmatprep.subr.mxu0 %v423
  %1498 = vmatpush2.msra.mxu0 %v422
  %1499 = vmatprep.subr.mxu0 %v415
  %1500 = vmatpush2.msra.mxu0 %v414
  %1501 = vmatprep.subr.mxu0 %v407
  %1502 = vmatpush2.msra.mxu0 %v406
  %1503 = vmatprep.mubr.f32.mxu0 %v716
  %1504 = vmatmul.mubr.f32.gmra.mxu0 %v714
  %v1505 = vpop.f32.mrf.mxu0
  %v1506 = vadd.f32 %v1435, %v1505
  %v1507 = vpop.f32.mrf.mxu0
  %v1508 = vadd.f32 %v1437, %v1507
  %1509 = vdwg.mxu0
  %1510 = vmatprep.subr.mxu0 %v655
  %1511 = vmatpush1.msra.mxu0 %v654
  %1512 = vmatprep.subr.mxu0 %v647
  %1513 = vmatpush1.msra.mxu0 %v646
  %1514 = vmatprep.subr.mxu0 %v639
  %1515 = vmatpush1.msra.mxu0 %v638
  %1516 = vmatprep.subr.mxu0 %v631
  %1517 = vmatpush1.msra.mxu0 %v630
  %1518 = vmatprep.subr.mxu0 %v623
  %1519 = vmatpush1.msra.mxu0 %v622
  %1520 = vmatprep.subr.mxu0 %v615
  %1521 = vmatpush1.msra.mxu0 %v614
  %1522 = vmatprep.subr.mxu0 %v607
  %1523 = vmatpush1.msra.mxu0 %v606
  %1524 = vmatprep.subr.mxu0 %v599
  %1525 = vmatpush1.msra.mxu0 %v598
  %1526 = vmatprep.subr.mxu0 %v591
  %1527 = vmatpush1.msra.mxu0 %v590
  %1528 = vmatprep.subr.mxu0 %v583
  %1529 = vmatpush1.msra.mxu0 %v582
  %1530 = vmatprep.subr.mxu0 %v575
  %1531 = vmatpush1.msra.mxu0 %v574
  %1532 = vmatprep.subr.mxu0 %v567
  %1533 = vmatpush1.msra.mxu0 %v566
  %1534 = vmatprep.subr.mxu0 %v559
  %1535 = vmatpush1.msra.mxu0 %v558
  %1536 = vmatprep.subr.mxu0 %v551
  %1537 = vmatpush1.msra.mxu0 %v550
  %1538 = vmatprep.subr.mxu0 %v543
  %1539 = vmatpush1.msra.mxu0 %v542
  %1540 = vmatprep.subr.mxu0 %v535
  %1541 = vmatpush1.msra.mxu0 %v534
  %1542 = vmatprep.subr.mxu0 0.0
  %1543 = vmatpush2.msra.mxu0 0.0
  %1544 = vmatprep.subr.mxu0 0.0
  %1545 = vmatpush2.msra.mxu0 0.0
  %1546 = vmatprep.subr.mxu0 0.0
  %1547 = vmatpush2.msra.mxu0 0.0
  %1548 = vmatprep.subr.mxu0 0.0
  %1549 = vmatpush2.msra.mxu0 0.0
  %1550 = vmatprep.subr.mxu0 0.0
  %1551 = vmatpush2.msra.mxu0 0.0
  %1552 = vmatprep.subr.mxu0 0.0
  %1553 = vmatpush2.msra.mxu0 0.0
  %1554 = vmatprep.subr.mxu0 0.0
  %1555 = vmatpush2.msra.mxu0 0.0
  %1556 = vmatprep.subr.mxu0 0.0
  %1557 = vmatpush2.msra.mxu0 0.0
  %1558 = vmatprep.subr.mxu0 0.0
  %1559 = vmatpush2.msra.mxu0 0.0
  %1560 = vmatprep.subr.mxu0 0.0
  %1561 = vmatpush2.msra.mxu0 0.0
  %1562 = vmatprep.subr.mxu0 0.0
  %1563 = vmatpush2.msra.mxu0 0.0
  %1564 = vmatprep.subr.mxu0 0.0
  %1565 = vmatpush2.msra.mxu0 0.0
  %1566 = vmatprep.subr.mxu0 0.0
  %1567 = vmatpush2.msra.mxu0 0.0
  %1568 = vmatprep.subr.mxu0 0.0
  %1569 = vmatpush2.msra.mxu0 0.0
  %1570 = vmatprep.subr.mxu0 0.0
  %1571 = vmatpush2.msra.mxu0 0.0
  %1572 = vmatprep.subr.mxu0 0.0
  %1573 = vmatpush2.msra.mxu0 0.0
  %1574 = vmatprep.mubr.f32.mxu0 0.0
  %1575 = vmatmul.mubr.f32.gmra.mxu0 %v723
  %v1576 = vpop.f32.mrf.mxu0
  %v1577 = vadd.f32 %v1506, %v1576
  %v1578 = vpop.f32.mrf.mxu0
  %v1579 = vadd.f32 %v1508, %v1578
  %1580 = vdwg.mxu0
  %v1581 = vmax.f32 %v938, 0.0
  %v1582 = vmax.f32 %v940, 0.0
  %v1583 = vmax.f32 %v1151, 0.0
  %v1584 = vmax.f32 %v1153, 0.0
  %v1585 = vmax.f32 %v1364, 0.0
  %v1586 = vmax.f32 %v1366, 0.0
  %v1587 = vmax.f32 %v1577, 0.0
  %v1588 = vmax.f32 %v1579, 0.0
  %v1597 = vcombine.low %v1581, %v1582
  %v1598 = vcombine.low %v1583, %v1584
  %v1600 = vunpack.c.l.s4 1983009808
  %v1601 = vunpack.c.0.s8 %v1600
  %v1602 = vlaneseq
  %v1603 = vshrl.u32 %v1602, 7
  %v1604 = vsub.s32 %v1601, %v1603
  %v1605 = vrot.slane %v1597, %v1604
  %v1607 = vunpack.c.l.s4 1983009808
  %v1608 = vunpack.c.0.s8 %v1607
  %v1609 = vlaneseq
  %v1610 = vshrl.u32 %v1609, 7
  %v1611 = vsub.s32 %v1608, %v1610
  %v1612 = vrot.slane %v1598, %v1611
  %v1613 = vcombine.low %v1605, %v1612
  %v1614 = vcombine.low %v1585, %v1586
  %v1615 = vcombine.low %v1587, %v1588
  %v1617 = vunpack.c.l.s4 1983009808
  %v1618 = vunpack.c.0.s8 %v1617
  %v1619 = vlaneseq
  %v1620 = vshrl.u32 %v1619, 7
  %v1621 = vsub.s32 %v1618, %v1620
  %v1622 = vrot.slane %v1614, %v1621
  %v1624 = vunpack.c.l.s4 1983009808
  %v1625 = vunpack.c.0.s8 %v1624
  %v1626 = vlaneseq
  %v1627 = vshrl.u32 %v1626, 7
  %v1628 = vsub.s32 %v1625, %v1627
  %v1629 = vrot.slane %v1615, %v1628
  %v1630 = vcombine.low %v1622, %v1629
  %1633 = vst [vmem:[%s3] sm:$0xff] %v1613
  %1634 = vst [vmem:[%s3 + $0x8] sm:$0xff] %v1630
  // Predicated region
  $region14: #{polarnet_forward.10} parent=0 // pred_check
    _
  $region15: #{polarnet_forward.10} parent=0 // pred_check_branch
    %1636 = sbr.rel (0) target = $region17
  $region16: #{polarnet_forward.10} parent=0 // pred_region
    _
  $region17: #{polarnet_forward.10} parent=0 // pred_fallthru
    _
  // Predicated region
  $region18: #{polarnet_forward.10} parent=0 // pred_check
    _
  $region19: #{polarnet_forward.10} parent=0 // pred_check_branch
    %1638 = sbr.rel (0) target = $region21
  $region20: #{polarnet_forward.10} parent=0 // pred_region
    _
  $region21: #{polarnet_forward.10} parent=0 // pred_fallthru
    _

// kernel: polarnet_forward.11
$region0: #{polarnet_forward.11}
  #allocation0 [shape = 'u32[]', space=smem, size = 0x4, offset = 0x4, fixed_abs, tag = 'smem constant byte address 0x4 - core index']
  #allocation1 [shape = 'u32[144,128]{1,0:T(1,128)}', space=vmem, size = 0x12000, scoped, tag = 'internal scratch']
  %s0 = inlined_call_operand.vmem [shape: f32[2,1000], index: 0, kind: input, shape index: {}]
  %s1 = inlined_call_operand.vmem [shape: f32[1000,256], index: 1, kind: input, shape index: {}]
  %s2 = inlined_call_operand.vmem [shape: f32[1,256], index: 2, kind: input, shape index: {}]
  %s3 = inlined_call_operand.hbm [shape: f32[2,128], index: 3, kind: output, shape index: {}]
  %s4 = sld [smem:[#allocation0]]
  $region22: #{polarnet_forward.11} parent=0
    _
  %s6 = ssub.s32 1, %s4
  %s7 = scalar_select 0, %s6, %s4
  $region1: #{polarnet_forward.11} parent=0
    #allocation2 [shape = 'u8[1024]{0}', space=vmem, size = 0x400, scoped, tag = 'output window, operand 0, single buffered']
    #allocation3 [shape = 's32[1]{0}', space=sflag, size = 0x4, scoped, tag = 'scoped memory for polarnet_forward.11']
    %8 = vsyncpa [#allocation3], 0
    // Predicated region
    $region2: #{polarnet_forward.11} parent=1 // pred_check
      _
    $region3: #{polarnet_forward.11} parent=1 // pred_check_branch
      %10 = sbr.rel (0) target = $region5
    $region4: #{polarnet_forward.11} parent=1 // pred_region
      _
    $region5: #{polarnet_forward.11} parent=1 // pred_fallthru
      _
    // Predicated region
    $region6: #{polarnet_forward.11} parent=1 // pred_check
      _
    $region7: #{polarnet_forward.11} parent=1 // pred_check_branch
      %12 = sbr.rel (0) target = $region9
    $region8: #{polarnet_forward.11} parent=1 // pred_region
      _
    $region9: #{polarnet_forward.11} parent=1 // pred_fallthru
      _
    // Predicated region
    $region10: #{polarnet_forward.11} parent=1 // pred_check
      _
    $region11: #{polarnet_forward.11} parent=1 // pred_check_branch
      %14 = sbr.rel (0) target = $region13
    $region12: #{polarnet_forward.11} parent=1 // pred_region
      _
    $region13: #{polarnet_forward.11} parent=1 // pred_fallthru
      _
    %v15 = vld [vmem:[%s0] sm:$0xff]
    %v16 = vld [vmem:[%s0 + $0x8] sm:$0xff]
    %v17 = vld [vmem:[%s1] sm:$0xff]
    %v18 = vld [vmem:[%s1 + $0x8] sm:$0xff]
    %v19 = vld [vmem:[%s1 + $0x10] sm:$0xff]
    %v20 = vld [vmem:[%s1 + $0x18] sm:$0xff]
    %v21 = vld [vmem:[%s1 + $0x20] sm:$0xff]
    %v22 = vld [vmem:[%s1 + $0x28] sm:$0xff]
    %v23 = vld [vmem:[%s1 + $0x30] sm:$0xff]
    %v24 = vld [vmem:[%s1 + $0x38] sm:$0xff]
    %v25 = vld [vmem:[%s1 + $0x40] sm:$0xff]
    %v26 = vld [vmem:[%s1 + $0x48] sm:$0xff]
    %v27 = vld [vmem:[%s1 + $0x50] sm:$0xff]
    %v28 = vld [vmem:[%s1 + $0x58] sm:$0xff]
    %v29 = vld [vmem:[%s1 + $0x60] sm:$0xff]
    %v30 = vld [vmem:[%s1 + $0x68] sm:$0xff]
    %v31 = vld [vmem:[%s1 + $0x70] sm:$0xff]
    %v32 = vld [vmem:[%s1 + $0x78] sm:$0xff]
    %v33 = vld [vmem:[%s1 + $0x80] sm:$0xff]
    %v34 = vld [vmem:[%s1 + $0x88] sm:$0xff]
    %v35 = vld [vmem:[%s1 + $0x90] sm:$0xff]
    %v36 = vld [vmem:[%s1 + $0x98] sm:$0xff]
    %v37 = vld [vmem:[%s1 + $0xa0] sm:$0xff]
    %v38 = vld [vmem:[%s1 + $0xa8] sm:$0xff]
    %v39 = vld [vmem:[%s1 + $0xb0] sm:$0xff]
    %v40 = vld [vmem:[%s1 + $0xb8] sm:$0xff]
    %v41 = vld [vmem:[%s1 + $0xc0] sm:$0xff]
    %v42 = vld [vmem:[%s1 + $0xc8] sm:$0xff]
    %v43 = vld [vmem:[%s1 + $0xd0] sm:$0xff]
    %v44 = vld [vmem:[%s1 + $0xd8] sm:$0xff]
    %v45 = vld [vmem:[%s1 + $0xe0] sm:$0xff]
    %v46 = vld [vmem:[%s1 + $0xe8] sm:$0xff]
    %v47 = vld [vmem:[%s1 + $0xf0] sm:$0xff]
    %v48 = vld [vmem:[%s1 + $0xf8] sm:$0xff]
    %v49 = vld [vmem:[%s1 + $0x100] sm:$0xff]
    %v50 = vld [vmem:[%s1 + $0x108] sm:$0xff]
    %v51 = vld [vmem:[%s1 + $0x110] sm:$0xff]
    %v52 = vld [vmem:[%s1 + $0x118] sm:$0xff]
    %v53 = vld [vmem:[%s1 + $0x120] sm:$0xff]
    %v54 = vld [vmem:[%s1 + $0x128] sm:$0xff]
    %v55 = vld [vmem:[%s1 + $0x130] sm:$0xff]
    %v56 = vld [vmem:[%s1 + $0x138] sm:$0xff]
    %v57 = vld [vmem:[%s1 + $0x140] sm:$0xff]
    %v58 = vld [vmem:[%s1 + $0x148] sm:$0xff]
    %v59 = vld [vmem:[%s1 + $0x150] sm:$0xff]
    %v60 = vld [vmem:[%s1 + $0x158] sm:$0xff]
    %v61 = vld [vmem:[%s1 + $0x160] sm:$0xff]
    %v62 = vld [vmem:[%s1 + $0x168] sm:$0xff]
    %v63 = vld [vmem:[%s1 + $0x170] sm:$0xff]
    %v64 = vld [vmem:[%s1 + $0x178] sm:$0xff]
    %v65 = vld [vmem:[%s1 + $0x180] sm:$0xff]
    %v66 = vld [vmem:[%s1 + $0x188] sm:$0xff]
    %v67 = vld [vmem:[%s1 + $0x190] sm:$0xff]
    %v68 = vld [vmem:[%s1 + $0x198] sm:$0xff]
    %v69 = vld [vmem:[%s1 + $0x1a0] sm:$0xff]
    %v70 = vld [vmem:[%s1 + $0x1a8] sm:$0xff]
    %v71 = vld [vmem:[%s1 + $0x1b0] sm:$0xff]
    %v72 = vld [vmem:[%s1 + $0x1b8] sm:$0xff]
    %v73 = vld [vmem:[%s1 + $0x1c0] sm:$0xff]
    %v74 = vld [vmem:[%s1 + $0x1c8] sm:$0xff]
    %v75 = vld [vmem:[%s1 + $0x1d0] sm:$0xff]
    %v76 = vld [vmem:[%s1 + $0x1d8] sm:$0xff]
    %v77 = vld [vmem:[%s1 + $0x1e0] sm:$0xff]
    %v78 = vld [vmem:[%s1 + $0x1e8] sm:$0xff]
    %v79 = vld [vmem:[%s1 + $0x1f0] sm:$0xff]
    %v80 = vld [vmem:[%s1 + $0x1f8] sm:$0xff]
    %v81 = vld [vmem:[%s1 + $0x200] sm:$0xff]
    %v82 = vld [vmem:[%s1 + $0x208] sm:$0xff]
    %v83 = vld [vmem:[%s1 + $0x210] sm:$0xff]
    %v84 = vld [vmem:[%s1 + $0x218] sm:$0xff]
    %v85 = vld [vmem:[%s1 + $0x220] sm:$0xff]
    %v86 = vld [vmem:[%s1 + $0x228] sm:$0xff]
    %v87 = vld [vmem:[%s1 + $0x230] sm:$0xff]
    %v88 = vld [vmem:[%s1 + $0x238] sm:$0xff]
    %v89 = vld [vmem:[%s1 + $0x240] sm:$0xff]
    %v90 = vld [vmem:[%s1 + $0x248] sm:$0xff]
    %v91 = vld [vmem:[%s1 + $0x250] sm:$0xff]
    %v92 = vld [vmem:[%s1 + $0x258] sm:$0xff]
    %v93 = vld [vmem:[%s1 + $0x260] sm:$0xff]
    %v94 = vld [vmem:[%s1 + $0x268] sm:$0xff]
    %v95 = vld [vmem:[%s1 + $0x270] sm:$0xff]
    %v96 = vld [vmem:[%s1 + $0x278] sm:$0xff]
    %v97 = vld [vmem:[%s1 + $0x280] sm:$0xff]
    %v98 = vld [vmem:[%s1 + $0x288] sm:$0xff]
    %v99 = vld [vmem:[%s1 + $0x290] sm:$0xff]
    %v100 = vld [vmem:[%s1 + $0x298] sm:$0xff]
    %v101 = vld [vmem:[%s1 + $0x2a0] sm:$0xff]
    %v102 = vld [vmem:[%s1 + $0x2a8] sm:$0xff]
    %v103 = vld [vmem:[%s1 + $0x2b0] sm:$0xff]
    %v104 = vld [vmem:[%s1 + $0x2b8] sm:$0xff]
    %v105 = vld [vmem:[%s1 + $0x2c0] sm:$0xff]
    %v106 = vld [vmem:[%s1 + $0x2c8] sm:$0xff]
    %v107 = vld [vmem:[%s1 + $0x2d0] sm:$0xff]
    %v108 = vld [vmem:[%s1 + $0x2d8] sm:$0xff]
    %v109 = vld [vmem:[%s1 + $0x2e0] sm:$0xff]
    %v110 = vld [vmem:[%s1 + $0x2e8] sm:$0xff]
    %v111 = vld [vmem:[%s1 + $0x2f0] sm:$0xff]
    %v112 = vld [vmem:[%s1 + $0x2f8] sm:$0xff]
    %v113 = vld [vmem:[%s1 + $0x300] sm:$0xff]
    %v114 = vld [vmem:[%s1 + $0x308] sm:$0xff]
    %v115 = vld [vmem:[%s1 + $0x310] sm:$0xff]
    %v116 = vld [vmem:[%s1 + $0x318] sm:$0xff]
    %v117 = vld [vmem:[%s1 + $0x320] sm:$0xff]
    %v118 = vld [vmem:[%s1 + $0x328] sm:$0xff]
    %v119 = vld [vmem:[%s1 + $0x330] sm:$0xff]
    %v120 = vld [vmem:[%s1 + $0x338] sm:$0xff]
    %v121 = vld [vmem:[%s1 + $0x340] sm:$0xff]
    %v122 = vld [vmem:[%s1 + $0x348] sm:$0xff]
    %v123 = vld [vmem:[%s1 + $0x350] sm:$0xff]
    %v124 = vld [vmem:[%s1 + $0x358] sm:$0xff]
    %v125 = vld [vmem:[%s1 + $0x360] sm:$0xff]
    %v126 = vld [vmem:[%s1 + $0x368] sm:$0xff]
    %v127 = vld [vmem:[%s1 + $0x370] sm:$0xff]
    %v128 = vld [vmem:[%s1 + $0x378] sm:$0xff]
    %v129 = vld [vmem:[%s1 + $0x380] sm:$0xff]
    %v130 = vld [vmem:[%s1 + $0x388] sm:$0xff]
    %v131 = vld [vmem:[%s1 + $0x390] sm:$0xff]
    %v132 = vld [vmem:[%s1 + $0x398] sm:$0xff]
    %v133 = vld [vmem:[%s1 + $0x3a0] sm:$0xff]
    %v134 = vld [vmem:[%s1 + $0x3a8] sm:$0xff]
    %v135 = vld [vmem:[%s1 + $0x3b0] sm:$0xff]
    %v136 = vld [vmem:[%s1 + $0x3b8] sm:$0xff]
    %v137 = vld [vmem:[%s1 + $0x3c0] sm:$0xff]
    %v138 = vld [vmem:[%s1 + $0x3c8] sm:$0xff]
    %v139 = vld [vmem:[%s1 + $0x3d0] sm:$0xff]
    %v140 = vld [vmem:[%s1 + $0x3d8] sm:$0xff]
    %v141 = vld [vmem:[%s1 + $0x3e0] sm:$0xff]
    %v142 = vld [vmem:[%s1 + $0x3e8] sm:$0xff]
    %v143 = vld [vmem:[%s1 + $0x3f0] sm:$0xff]
    %v144 = vld [vmem:[%s1 + $0x3f8] sm:$0xff]
    %v145 = vld [vmem:[%s1 + $0x400] sm:$0xff]
    %v146 = vld [vmem:[%s1 + $0x408] sm:$0xff]
    %v147 = vld [vmem:[%s1 + $0x410] sm:$0xff]
    %v148 = vld [vmem:[%s1 + $0x418] sm:$0xff]
    %v149 = vld [vmem:[%s1 + $0x420] sm:$0xff]
    %v150 = vld [vmem:[%s1 + $0x428] sm:$0xff]
    %v151 = vld [vmem:[%s1 + $0x430] sm:$0xff]
    %v152 = vld [vmem:[%s1 + $0x438] sm:$0xff]
    %v153 = vld [vmem:[%s1 + $0x440] sm:$0xff]
    %v154 = vld [vmem:[%s1 + $0x448] sm:$0xff]
    %v155 = vld [vmem:[%s1 + $0x450] sm:$0xff]
    %v156 = vld [vmem:[%s1 + $0x458] sm:$0xff]
    %v157 = vld [vmem:[%s1 + $0x460] sm:$0xff]
    %v158 = vld [vmem:[%s1 + $0x468] sm:$0xff]
    %v159 = vld [vmem:[%s1 + $0x470] sm:$0xff]
    %v160 = vld [vmem:[%s1 + $0x478] sm:$0xff]
    %v161 = vld [vmem:[%s1 + $0x480] sm:$0xff]
    %v162 = vld [vmem:[%s1 + $0x488] sm:$0xff]
    %v163 = vld [vmem:[%s1 + $0x490] sm:$0xff]
    %v164 = vld [vmem:[%s1 + $0x498] sm:$0xff]
    %v165 = vld [vmem:[%s1 + $0x4a0] sm:$0xff]
    %v166 = vld [vmem:[%s1 + $0x4a8] sm:$0xff]
    %v167 = vld [vmem:[%s1 + $0x4b0] sm:$0xff]
    %v168 = vld [vmem:[%s1 + $0x4b8] sm:$0xff]
    %v169 = vld [vmem:[%s1 + $0x4c0] sm:$0xff]
    %v170 = vld [vmem:[%s1 + $0x4c8] sm:$0xff]
    %v171 = vld [vmem:[%s1 + $0x4d0] sm:$0xff]
    %v172 = vld [vmem:[%s1 + $0x4d8] sm:$0xff]
    %v173 = vld [vmem:[%s1 + $0x4e0] sm:$0xff]
    %v174 = vld [vmem:[%s1 + $0x4e8] sm:$0xff]
    %v175 = vld [vmem:[%s1 + $0x4f0] sm:$0xff]
    %v176 = vld [vmem:[%s1 + $0x4f8] sm:$0xff]
    %v177 = vld [vmem:[%s1 + $0x500] sm:$0xff]
    %v178 = vld [vmem:[%s1 + $0x508] sm:$0xff]
    %v179 = vld [vmem:[%s1 + $0x510] sm:$0xff]
    %v180 = vld [vmem:[%s1 + $0x518] sm:$0xff]
    %v181 = vld [vmem:[%s1 + $0x520] sm:$0xff]
    %v182 = vld [vmem:[%s1 + $0x528] sm:$0xff]
    %v183 = vld [vmem:[%s1 + $0x530] sm:$0xff]
    %v184 = vld [vmem:[%s1 + $0x538] sm:$0xff]
    %v185 = vld [vmem:[%s1 + $0x540] sm:$0xff]
    %v186 = vld [vmem:[%s1 + $0x548] sm:$0xff]
    %v187 = vld [vmem:[%s1 + $0x550] sm:$0xff]
    %v188 = vld [vmem:[%s1 + $0x558] sm:$0xff]
    %v189 = vld [vmem:[%s1 + $0x560] sm:$0xff]
    %v190 = vld [vmem:[%s1 + $0x568] sm:$0xff]
    %v191 = vld [vmem:[%s1 + $0x570] sm:$0xff]
    %v192 = vld [vmem:[%s1 + $0x578] sm:$0xff]
    %v193 = vld [vmem:[%s1 + $0x580] sm:$0xff]
    %v194 = vld [vmem:[%s1 + $0x588] sm:$0xff]
    %v195 = vld [vmem:[%s1 + $0x590] sm:$0xff]
    %v196 = vld [vmem:[%s1 + $0x598] sm:$0xff]
    %v197 = vld [vmem:[%s1 + $0x5a0] sm:$0xff]
    %v198 = vld [vmem:[%s1 + $0x5a8] sm:$0xff]
    %v199 = vld [vmem:[%s1 + $0x5b0] sm:$0xff]
    %v200 = vld [vmem:[%s1 + $0x5b8] sm:$0xff]
    %v201 = vld [vmem:[%s1 + $0x5c0] sm:$0xff]
    %v202 = vld [vmem:[%s1 + $0x5c8] sm:$0xff]
    %v203 = vld [vmem:[%s1 + $0x5d0] sm:$0xff]
    %v204 = vld [vmem:[%s1 + $0x5d8] sm:$0xff]
    %v205 = vld [vmem:[%s1 + $0x5e0] sm:$0xff]
    %v206 = vld [vmem:[%s1 + $0x5e8] sm:$0xff]
    %v207 = vld [vmem:[%s1 + $0x5f0] sm:$0xff]
    %v208 = vld [vmem:[%s1 + $0x5f8] sm:$0xff]
    %v209 = vld [vmem:[%s1 + $0x600] sm:$0xff]
    %v210 = vld [vmem:[%s1 + $0x608] sm:$0xff]
    %v211 = vld [vmem:[%s1 + $0x610] sm:$0xff]
    %v212 = vld [vmem:[%s1 + $0x618] sm:$0xff]
    %v213 = vld [vmem:[%s1 + $0x620] sm:$0xff]
    %v214 = vld [vmem:[%s1 + $0x628] sm:$0xff]
    %v215 = vld [vmem:[%s1 + $0x630] sm:$0xff]
    %v216 = vld [vmem:[%s1 + $0x638] sm:$0xff]
    %v217 = vld [vmem:[%s1 + $0x640] sm:$0xff]
    %v218 = vld [vmem:[%s1 + $0x648] sm:$0xff]
    %v219 = vld [vmem:[%s1 + $0x650] sm:$0xff]
    %v220 = vld [vmem:[%s1 + $0x658] sm:$0xff]
    %v221 = vld [vmem:[%s1 + $0x660] sm:$0xff]
    %v222 = vld [vmem:[%s1 + $0x668] sm:$0xff]
    %v223 = vld [vmem:[%s1 + $0x670] sm:$0xff]
    %v224 = vld [vmem:[%s1 + $0x678] sm:$0xff]
    %v225 = vld [vmem:[%s1 + $0x680] sm:$0xff]
    %v226 = vld [vmem:[%s1 + $0x688] sm:$0xff]
    %v227 = vld [vmem:[%s1 + $0x690] sm:$0xff]
    %v228 = vld [vmem:[%s1 + $0x698] sm:$0xff]
    %v229 = vld [vmem:[%s1 + $0x6a0] sm:$0xff]
    %v230 = vld [vmem:[%s1 + $0x6a8] sm:$0xff]
    %v231 = vld [vmem:[%s1 + $0x6b0] sm:$0xff]
    %v232 = vld [vmem:[%s1 + $0x6b8] sm:$0xff]
    %v233 = vld [vmem:[%s1 + $0x6c0] sm:$0xff]
    %v234 = vld [vmem:[%s1 + $0x6c8] sm:$0xff]
    %v235 = vld [vmem:[%s1 + $0x6d0] sm:$0xff]
    %v236 = vld [vmem:[%s1 + $0x6d8] sm:$0xff]
    %v237 = vld [vmem:[%s1 + $0x6e0] sm:$0xff]
    %v238 = vld [vmem:[%s1 + $0x6e8] sm:$0xff]
    %v239 = vld [vmem:[%s1 + $0x6f0] sm:$0xff]
    %v240 = vld [vmem:[%s1 + $0x6f8] sm:$0xff]
    %v241 = vld [vmem:[%s1 + $0x700] sm:$0xff]
    %v242 = vld [vmem:[%s1 + $0x708] sm:$0xff]
    %v243 = vld [vmem:[%s1 + $0x710] sm:$0xff]
    %v244 = vld [vmem:[%s1 + $0x718] sm:$0xff]
    %v245 = vld [vmem:[%s1 + $0x720] sm:$0xff]
    %v246 = vld [vmem:[%s1 + $0x728] sm:$0xff]
    %v247 = vld [vmem:[%s1 + $0x730] sm:$0xff]
    %v248 = vld [vmem:[%s1 + $0x738] sm:$0xff]
    %v249 = vld [vmem:[%s1 + $0x740] sm:$0xff]
    %v250 = vld [vmem:[%s1 + $0x748] sm:$0xff]
    %v251 = vld [vmem:[%s1 + $0x750] sm:$0xff]
    %v252 = vld [vmem:[%s1 + $0x758] sm:$0xff]
    %v253 = vld [vmem:[%s1 + $0x760] sm:$0xff]
    %v254 = vld [vmem:[%s1 + $0x768] sm:$0xff]
    %v255 = vld [vmem:[%s1 + $0x770] sm:$0xff]
    %v256 = vld [vmem:[%s1 + $0x778] sm:$0xff]
    %v257 = vld [vmem:[%s1 + $0x780] sm:$0xff]
    %v258 = vld [vmem:[%s1 + $0x788] sm:$0xff]
    %v259 = vld [vmem:[%s1 + $0x790] sm:$0xff]
    %v260 = vld [vmem:[%s1 + $0x798] sm:$0xff]
    %v261 = vld [vmem:[%s1 + $0x7a0] sm:$0xff]
    %v262 = vld [vmem:[%s1 + $0x7a8] sm:$0xff]
    %v263 = vld [vmem:[%s1 + $0x7b0] sm:$0xff]
    %v264 = vld [vmem:[%s1 + $0x7b8] sm:$0xff]
    %v265 = vld [vmem:[%s1 + $0x7c0] sm:$0xff]
    %v266 = vld [vmem:[%s1 + $0x7c8] sm:$0xff]
    %v267 = vld [vmem:[%s2] sm:$0x3]
    %v269 = vlaneseq
    %v270 = vshrl.u32 %v269, 7
    %v271 = vsub.s32 0, %v270
    %v272 = vrot.slane %v267, %v271
    %v273 = vlaneseq
    %v274 = vshrl.u32 %v273, 7
    %v275 = vsub.s32 1, %v274
    %v276 = vrot.slane %v267, %v275
    %v281 = vcombine.high %v15, %v15
    %v283 = vunpack.c.l.s4 1983009808
    %v284 = vunpack.c.0.s8 %v283
    %v285 = vlaneseq
    %v286 = vshrl.u32 %v285, 7
    %v287 = vsub.s32 %v284, %v286
    %v288 = vrot.slane %v15, %v287
    %v290 = vunpack.c.l.s4 1983009808
    %v291 = vunpack.c.0.s8 %v290
    %v292 = vlaneseq
    %v293 = vshrl.u32 %v292, 7
    %v294 = vsub.s32 %v291, %v293
    %v295 = vrot.slane %v281, %v294
    %v296 = vcombine.high %v288, %v288
    %v297 = vcombine.high %v295, %v295
    %v298 = vcombine.high %v16, %v16
    %v300 = vunpack.c.l.s4 1983009808
    %v301 = vunpack.c.0.s8 %v300
    %v302 = vlaneseq
    %v303 = vshrl.u32 %v302, 7
    %v304 = vsub.s32 %v301, %v303
    %v305 = vrot.slane %v16, %v304
    %v307 = vunpack.c.l.s4 1983009808
    %v308 = vunpack.c.0.s8 %v307
    %v309 = vlaneseq
    %v310 = vshrl.u32 %v309, 7
    %v311 = vsub.s32 %v308, %v310
    %v312 = vrot.slane %v298, %v311
    %v313 = vcombine.high %v305, %v305
    %v314 = vcombine.high %v312, %v312
    %vm322 = vcmask 850944
    %v323 = vsel %vm322, %v314, 0
    %325 = vmatprep.subr.mxu0 %v48
    %326 = vmatpush1.msra.mxu0 %v47
    %327 = vmatprep.subr.mxu0 %v46
    %328 = vmatpush1.msra.mxu0 %v45
    %329 = vmatprep.subr.mxu0 %v44
    %330 = vmatpush1.msra.mxu0 %v43
    %331 = vmatprep.subr.mxu0 %v42
    %332 = vmatpush1.msra.mxu0 %v41
    %333 = vmatprep.subr.mxu0 %v40
    %334 = vmatpush1.msra.mxu0 %v39
    %335 = vmatprep.subr.mxu0 %v38
    %336 = vmatpush1.msra.mxu0 %v37
    %337 = vmatprep.subr.mxu0 %v36
    %338 = vmatpush1.msra.mxu0 %v35
    %339 = vmatprep.subr.mxu0 %v34
    %340 = vmatpush1.msra.mxu0 %v33
    %341 = vmatprep.subr.mxu0 %v32
    %342 = vmatpush1.msra.mxu0 %v31
    %343 = vmatprep.subr.mxu0 %v30
    %344 = vmatpush1.msra.mxu0 %v29
    %345 = vmatprep.subr.mxu0 %v28
    %346 = vmatpush1.msra.mxu0 %v27
    %347 = vmatprep.subr.mxu0 %v26
    %348 = vmatpush1.msra.mxu0 %v25
    %349 = vmatprep.subr.mxu0 %v24
    %350 = vmatpush1.msra.mxu0 %v23
    %351 = vmatprep.subr.mxu0 %v22
    %352 = vmatpush1.msra.mxu0 %v21
    %353 = vmatprep.subr.mxu0 %v20
    %354 = vmatpush1.msra.mxu0 %v19
    %355 = vmatprep.subr.mxu0 %v18
    %356 = vmatpush1.msra.mxu0 %v17
    %357 = vmatprep.subr.mxu0 %v80
    %358 = vmatpush2.msra.mxu0 %v79
    %359 = vmatprep.subr.mxu0 %v78
    %360 = vmatpush2.msra.mxu0 %v77
    %361 = vmatprep.subr.mxu0 %v76
    %362 = vmatpush2.msra.mxu0 %v75
    %363 = vmatprep.subr.mxu0 %v74
    %364 = vmatpush2.msra.mxu0 %v73
    %365 = vmatprep.subr.mxu0 %v72
    %366 = vmatpush2.msra.mxu0 %v71
    %367 = vmatprep.subr.mxu0 %v70
    %368 = vmatpush2.msra.mxu0 %v69
    %369 = vmatprep.subr.mxu0 %v68
    %370 = vmatpush2.msra.mxu0 %v67
    %371 = vmatprep.subr.mxu0 %v66
    %372 = vmatpush2.msra.mxu0 %v65
    %373 = vmatprep.subr.mxu0 %v64
    %374 = vmatpush2.msra.mxu0 %v63
    %375 = vmatprep.subr.mxu0 %v62
    %376 = vmatpush2.msra.mxu0 %v61
    %377 = vmatprep.subr.mxu0 %v60
    %378 = vmatpush2.msra.mxu0 %v59
    %379 = vmatprep.subr.mxu0 %v58
    %380 = vmatpush2.msra.mxu0 %v57
    %381 = vmatprep.subr.mxu0 %v56
    %382 = vmatpush2.msra.mxu0 %v55
    %383 = vmatprep.subr.mxu0 %v54
    %384 = vmatpush2.msra.mxu0 %v53
    %385 = vmatprep.subr.mxu0 %v52
    %386 = vmatpush2.msra.mxu0 %v51
    %387 = vmatprep.subr.mxu0 %v50
    %388 = vmatpush2.msra.mxu0 %v49
    %389 = vmatprep.mubr.f32.mxu0 %v296
    %390 = vmatmul.mubr.f32.gmra.mxu0 %v288
    %v391 = vpop.f32.mrf.mxu0
    %v392 = vadd.f32 %v272, %v391
    %v393 = vpop.f32.mrf.mxu0
    %v394 = vadd.f32 %v276, %v393
    %395 = vdwg.mxu0
    %396 = vmatprep.subr.mxu0 %v112
    %397 = vmatpush1.msra.mxu0 %v111
    %398 = vmatprep.subr.mxu0 %v110
    %399 = vmatpush1.msra.mxu0 %v109
    %400 = vmatprep.subr.mxu0 %v108
    %401 = vmatpush1.msra.mxu0 %v107
    %402 = vmatprep.subr.mxu0 %v106
    %403 = vmatpush1.msra.mxu0 %v105
    %404 = vmatprep.subr.mxu0 %v104
    %405 = vmatpush1.msra.mxu0 %v103
    %406 = vmatprep.subr.mxu0 %v102
    %407 = vmatpush1.msra.mxu0 %v101
    %408 = vmatprep.subr.mxu0 %v100
    %409 = vmatpush1.msra.mxu0 %v99
    %410 = vmatprep.subr.mxu0 %v98
    %411 = vmatpush1.msra.mxu0 %v97
    %412 = vmatprep.subr.mxu0 %v96
    %413 = vmatpush1.msra.mxu0 %v95
    %414 = vmatprep.subr.mxu0 %v94
    %415 = vmatpush1.msra.mxu0 %v93
    %416 = vmatprep.subr.mxu0 %v92
    %417 = vmatpush1.msra.mxu0 %v91
    %418 = vmatprep.subr.mxu0 %v90
    %419 = vmatpush1.msra.mxu0 %v89
    %420 = vmatprep.subr.mxu0 %v88
    %421 = vmatpush1.msra.mxu0 %v87
    %422 = vmatprep.subr.mxu0 %v86
    %423 = vmatpush1.msra.mxu0 %v85
    %424 = vmatprep.subr.mxu0 %v84
    %425 = vmatpush1.msra.mxu0 %v83
    %426 = vmatprep.subr.mxu0 %v82
    %427 = vmatpush1.msra.mxu0 %v81
    %428 = vmatprep.subr.mxu0 %v144
    %429 = vmatpush2.msra.mxu0 %v143
    %430 = vmatprep.subr.mxu0 %v142
    %431 = vmatpush2.msra.mxu0 %v141
    %432 = vmatprep.subr.mxu0 %v140
    %433 = vmatpush2.msra.mxu0 %v139
    %434 = vmatprep.subr.mxu0 %v138
    %435 = vmatpush2.msra.mxu0 %v137
    %436 = vmatprep.subr.mxu0 %v136
    %437 = vmatpush2.msra.mxu0 %v135
    %438 = vmatprep.subr.mxu0 %v134
    %439 = vmatpush2.msra.mxu0 %v133
    %440 = vmatprep.subr.mxu0 %v132
    %441 = vmatpush2.msra.mxu0 %v131
    %442 = vmatprep.subr.mxu0 %v130
    %443 = vmatpush2.msra.mxu0 %v129
    %444 = vmatprep.subr.mxu0 %v128
    %445 = vmatpush2.msra.mxu0 %v127
    %446 = vmatprep.subr.mxu0 %v126
    %447 = vmatpush2.msra.mxu0 %v125
    %448 = vmatprep.subr.mxu0 %v124
    %449 = vmatpush2.msra.mxu0 %v123
    %450 = vmatprep.subr.mxu0 %v122
    %451 = vmatpush2.msra.mxu0 %v121
    %452 = vmatprep.subr.mxu0 %v120
    %453 = vmatpush2.msra.mxu0 %v119
    %454 = vmatprep.subr.mxu0 %v118
    %455 = vmatpush2.msra.mxu0 %v117
    %456 = vmatprep.subr.mxu0 %v116
    %457 = vmatpush2.msra.mxu0 %v115
    %458 = vmatprep.subr.mxu0 %v114
    %459 = vmatpush2.msra.mxu0 %v113
    %460 = vmatprep.mubr.f32.mxu0 %v297
    %461 = vmatmul.mubr.f32.gmra.mxu0 %v295
    %v462 = vpop.f32.mrf.mxu0
    %v463 = vadd.f32 %v392, %v462
    %v464 = vpop.f32.mrf.mxu0
    %v465 = vadd.f32 %v394, %v464
    %466 = vdwg.mxu0
    %467 = vmatprep.subr.mxu0 %v176
    %468 = vmatpush1.msra.mxu0 %v175
    %469 = vmatprep.subr.mxu0 %v174
    %470 = vmatpush1.msra.mxu0 %v173
    %471 = vmatprep.subr.mxu0 %v172
    %472 = vmatpush1.msra.mxu0 %v171
    %473 = vmatprep.subr.mxu0 %v170
    %474 = vmatpush1.msra.mxu0 %v169
    %475 = vmatprep.subr.mxu0 %v168
    %476 = vmatpush1.msra.mxu0 %v167
    %477 = vmatprep.subr.mxu0 %v166
    %478 = vmatpush1.msra.mxu0 %v165
    %479 = vmatprep.subr.mxu0 %v164
    %480 = vmatpush1.msra.mxu0 %v163
    %481 = vmatprep.subr.mxu0 %v162
    %482 = vmatpush1.msra.mxu0 %v161
    %483 = vmatprep.subr.mxu0 %v160
    %484 = vmatpush1.msra.mxu0 %v159
    %485 = vmatprep.subr.mxu0 %v158
    %486 = vmatpush1.msra.mxu0 %v157
    %487 = vmatprep.subr.mxu0 %v156
    %488 = vmatpush1.msra.mxu0 %v155
    %489 = vmatprep.subr.mxu0 %v154
    %490 = vmatpush1.msra.mxu0 %v153
    %491 = vmatprep.subr.mxu0 %v152
    %492 = vmatpush1.msra.mxu0 %v151
    %493 = vmatprep.subr.mxu0 %v150
    %494 = vmatpush1.msra.mxu0 %v149
    %495 = vmatprep.subr.mxu0 %v148
    %496 = vmatpush1.msra.mxu0 %v147
    %497 = vmatprep.subr.mxu0 %v146
    %498 = vmatpush1.msra.mxu0 %v145
    %499 = vmatprep.subr.mxu0 %v208
    %500 = vmatpush2.msra.mxu0 %v207
    %501 = vmatprep.subr.mxu0 %v206
    %502 = vmatpush2.msra.mxu0 %v205
    %503 = vmatprep.subr.mxu0 %v204
    %504 = vmatpush2.msra.mxu0 %v203
    %505 = vmatprep.subr.mxu0 %v202
    %506 = vmatpush2.msra.mxu0 %v201
    %507 = vmatprep.subr.mxu0 %v200
    %508 = vmatpush2.msra.mxu0 %v199
    %509 = vmatprep.subr.mxu0 %v198
    %510 = vmatpush2.msra.mxu0 %v197
    %511 = vmatprep.subr.mxu0 %v196
    %512 = vmatpush2.msra.mxu0 %v195
    %513 = vmatprep.subr.mxu0 %v194
    %514 = vmatpush2.msra.mxu0 %v193
    %515 = vmatprep.subr.mxu0 %v192
    %516 = vmatpush2.msra.mxu0 %v191
    %517 = vmatprep.subr.mxu0 %v190
    %518 = vmatpush2.msra.mxu0 %v189
    %519 = vmatprep.subr.mxu0 %v188
    %520 = vmatpush2.msra.mxu0 %v187
    %521 = vmatprep.subr.mxu0 %v186
    %522 = vmatpush2.msra.mxu0 %v185
    %523 = vmatprep.subr.mxu0 %v184
    %524 = vmatpush2.msra.mxu0 %v183
    %525 = vmatprep.subr.mxu0 %v182
    %526 = vmatpush2.msra.mxu0 %v181
    %527 = vmatprep.subr.mxu0 %v180
    %528 = vmatpush2.msra.mxu0 %v179
    %529 = vmatprep.subr.mxu0 %v178
    %530 = vmatpush2.msra.mxu0 %v177
    %531 = vmatprep.mubr.f32.mxu0 %v313
    %532 = vmatmul.mubr.f32.gmra.mxu0 %v305
    %v533 = vpop.f32.mrf.mxu0
    %v534 = vadd.f32 %v463, %v533
    %v535 = vpop.f32.mrf.mxu0
    %v536 = vadd.f32 %v465, %v535
    %537 = vdwg.mxu0
    %538 = vmatprep.subr.mxu0 %v240
    %539 = vmatpush1.msra.mxu0 %v239
    %540 = vmatprep.subr.mxu0 %v238
    %541 = vmatpush1.msra.mxu0 %v237
    %542 = vmatprep.subr.mxu0 %v236
    %543 = vmatpush1.msra.mxu0 %v235
    %544 = vmatprep.subr.mxu0 %v234
    %545 = vmatpush1.msra.mxu0 %v233
    %546 = vmatprep.subr.mxu0 %v232
    %547 = vmatpush1.msra.mxu0 %v231
    %548 = vmatprep.subr.mxu0 %v230
    %549 = vmatpush1.msra.mxu0 %v229
    %550 = vmatprep.subr.mxu0 %v228
    %551 = vmatpush1.msra.mxu0 %v227
    %552 = vmatprep.subr.mxu0 %v226
    %553 = vmatpush1.msra.mxu0 %v225
    %554 = vmatprep.subr.mxu0 %v224
    %555 = vmatpush1.msra.mxu0 %v223
    %556 = vmatprep.subr.mxu0 %v222
    %557 = vmatpush1.msra.mxu0 %v221
    %558 = vmatprep.subr.mxu0 %v220
    %559 = vmatpush1.msra.mxu0 %v219
    %560 = vmatprep.subr.mxu0 %v218
    %561 = vmatpush1.msra.mxu0 %v217
    %562 = vmatprep.subr.mxu0 %v216
    %563 = vmatpush1.msra.mxu0 %v215
    %564 = vmatprep.subr.mxu0 %v214
    %565 = vmatpush1.msra.mxu0 %v213
    %566 = vmatprep.subr.mxu0 %v212
    %567 = vmatpush1.msra.mxu0 %v211
    %568 = vmatprep.subr.mxu0 %v210
    %569 = vmatpush1.msra.mxu0 %v209
    %570 = vmatprep.subr.mxu0 0.0
    %571 = vmatpush2.msra.mxu0 0.0
    %572 = vmatprep.subr.mxu0 0.0
    %573 = vmatpush2.msra.mxu0 0.0
    %574 = vmatprep.subr.mxu0 0.0
    %575 = vmatpush2.msra.mxu0 0.0
    %576 = vmatprep.subr.mxu0 %v266
    %577 = vmatpush2.msra.mxu0 %v265
    %578 = vmatprep.subr.mxu0 %v264
    %579 = vmatpush2.msra.mxu0 %v263
    %580 = vmatprep.subr.mxu0 %v262
    %581 = vmatpush2.msra.mxu0 %v261
    %582 = vmatprep.subr.mxu0 %v260
    %583 = vmatpush2.msra.mxu0 %v259
    %584 = vmatprep.subr.mxu0 %v258
    %585 = vmatpush2.msra.mxu0 %v257
    %586 = vmatprep.subr.mxu0 %v256
    %587 = vmatpush2.msra.mxu0 %v255
    %588 = vmatprep.subr.mxu0 %v254
    %589 = vmatpush2.msra.mxu0 %v253
    %590 = vmatprep.subr.mxu0 %v252
    %591 = vmatpush2.msra.mxu0 %v251
    %592 = vmatprep.subr.mxu0 %v250
    %593 = vmatpush2.msra.mxu0 %v249
    %594 = vmatprep.subr.mxu0 %v248
    %595 = vmatpush2.msra.mxu0 %v247
    %596 = vmatprep.subr.mxu0 %v246
    %597 = vmatpush2.msra.mxu0 %v245
    %598 = vmatprep.subr.mxu0 %v244
    %599 = vmatpush2.msra.mxu0 %v243
    %600 = vmatprep.subr.mxu0 %v242
    %601 = vmatpush2.msra.mxu0 %v241
    %602 = vmatprep.mubr.f32.mxu0 %v323
    %603 = vmatmul.mubr.f32.gmra.mxu0 %v312
    %v604 = vpop.f32.mrf.mxu0
    %v605 = vadd.f32 %v534, %v604
    %v606 = vpop.f32.mrf.mxu0
    %v607 = vadd.f32 %v536, %v606
    %608 = vdwg.mxu0
    %v609 = vmul.f32 %v605, %v605
    %v610 = vmul.f32 %v607, %v607
    %v611 = vadd.f32 %v609, %v610
    %v612 = vrsqrt.pop %v611
    %v613 = vmul.f32 %v611, %v612
    %vm614 = vcmp.eq.f32.partialorder %v611, inf
    %v615 = vsel %vm614, %v611, %v613
    %vm616 = vcmp.eq.f32.partialorder %v611, 0.0
    %v617 = vand.u32 %v611, 2147483648
    %v618 = vsel %vm616, %v617, %v615
    %v619 = vlaneseq
    %v620 = vand.u32 %v619, 127
    %vm621 = vcmp.lt.s32.totalorder %v620, 10
    %v622 = vsel %vm621, %v618, -inf
    %vm623 = vcmask 1041408
    %v624 = vsel %vm623, %v622, -inf
    %625 = vmax.xlane.f32.xlu0 %v624
    %v626 = vpop.xlane.xlu0 %625
    %v627 = vsub.f32 %v618, %v626
    %v628 = vmul.f32 %v627, 1.442695
    %v629 = vpow.pop %v628
    %v630 = vsel %vm621, %v629, 0.0
    %v631 = vsel %vm623, %v630, 0.0
    %632 = vadd.xlane.f32.xlu0 %v631
    %v633 = vpop.xlane.xlu0 %632
    %v634 = vlog2.pop %v633
    %v635 = vmul.f32 %v634, 0.6931472
    %v636 = vsub.f32 %v627, %v635
    %637 = vst [vmem:[#allocation2] sm:$0x3] %v636
    // Predicated region
    $region14: #{polarnet_forward.11} parent=1 // pred_check
      _
    $region15: #{polarnet_forward.11} parent=1 // pred_check_branch
      %639 = sbr.rel (0) target = $region17
    $region16: #{polarnet_forward.11} parent=1 // pred_region
      %s641 = ssub.s32 32, 32
      %642 = vsyncadd [#allocation3], %s641
      %s644 = sshll.u32 [#allocation2], 4
      %s645 = int_to_ptr.vmem [resolvable:$true] %s644
      %647 = dma.vmem_to_hbm [thread:$0]  %s645, 32, %s3, [#allocation3]
    $region17: #{polarnet_forward.11} parent=1 // pred_fallthru
      _
    // Predicated region
    $region18: #{polarnet_forward.11} parent=1 // pred_check
      _
    $region19: #{polarnet_forward.11} parent=1 // pred_check_branch
      %649 = sbr.rel (0) target = $region21
    $region20: #{polarnet_forward.11} parent=1 // pred_region
      %650 = dma.done [#allocation3], 32
    $region21: #{polarnet_forward.11} parent=1 // pred_fallthru
      _
    %651 = vsyncpa [#allocation3], 1

</llo_original>
